<compile_context>
chip_gen: v7x
topology: tpu7x:2x2x1
jax: 0.10.0
libtpu: 0.0.40
codegen_flags: <defaults>
</compile_context>

<pallas_src>
import functools

import numpy as np
import jax
import jax.numpy as jnp
from jax import lax
from jax.experimental import pallas as pl
from jax.experimental.pallas import tpu as pltpu


POOL_PAD = 128  # common (zero-padded) pooled-pixel count for all pyramid stages


# ----------------------------- Pallas kernels -----------------------------

def _bn_relu_conv1x1_kernel(x_ref, s_ref, b_ref, wt_ref, o_ref):
    # x: (1, Cin, M) f32   s/b: (Cin, 1) f32   wt: (Cout, Cin) bf16   o: (1, Cout, M) f32
    y = jnp.maximum(x_ref[0] * s_ref[...] + b_ref[...], 0.0)          # BN (folded) + ReLU, f32
    o_ref[0] = jnp.dot(wt_ref[...], y.astype(jnp.bfloat16),
                       preferred_element_type=jnp.float32)            # lane-dense (Cout, M)


def _fused_scale_process_kernel(W, x_ref, poolT_ref, ss_ref, bs_ref, ws_ref,
                                upT_ref, prev_ref, sp_ref, bp_ref, wp_ref, m_ref,
                                o_ref, pad_ref, col_ref):
    # x:      (1, Cin, HW) f32      poolT: (HW, P) f32   (P = POOL_PAD, zero-padded cols)
    # ss/bs:  (Cin, 1) f32          ws:    (Ci, Cin) bf16
    # upT:    (P, HW) f32 (zero-padded rows)              prev: (1, Ci, HW) f32
    # sp/bp:  (Ci, 1) f32           wp:    (Ci, 9*Ci) bf16   m: (9, 1, HW) bf16
    # o:      (1, Ci, HW) f32
    # scratch: pad (Ci, HW + 2*(W+1)) bf16, col (9*Ci, HW) bf16
    C, HW = prev_ref.shape[1], prev_ref.shape[2]
    PC = pad_ref.shape[1]

    # --- pooled branch: avg-pool -> BN -> ReLU -> 1x1 conv -> bilinear upsample ---
    pooled = jnp.dot(x_ref[0], poolT_ref[...],
                     preferred_element_type=jnp.float32)              # (Cin, P), f32
    yp = jnp.maximum(pooled * ss_ref[...] + bs_ref[...], 0.0)
    z = jnp.dot(ws_ref[...], yp.astype(jnp.bfloat16),
                preferred_element_type=jnp.float32)                   # (Ci, P)
    up = jnp.dot(z, upT_ref[...], preferred_element_type=jnp.float32)  # (Ci, HW); padded
    # columns of `pooled`/`z` are garbage but hit zero rows of upT, so they contribute 0.

    # --- add skip + BN + ReLU ---
    y = jnp.maximum((up + prev_ref[0]) * sp_ref[...] + bp_ref[...], 0.0)

    # --- halo-padded im2col; zero only the two (W+1)-wide halo strips ---
    pad_ref[:, :W + 1] = jnp.zeros((C, W + 1), jnp.bfloat16)
    pad_ref[:, W + 1 + HW:PC] = jnp.zeros((C, W + 1), jnp.bfloat16)
    pad_ref[:, W + 1:W + 1 + HW] = y.astype(jnp.bfloat16)

    # tap t=(ky,kx) is a contiguous lane slice of the halo-padded row-major image; the 0/1
    # masks zero out positions whose source pixel is outside the image (row wrap / border).
    for t in range(9):
        ky, kx = divmod(t, 3)
        s0 = ky * W + kx
        col_ref[t * C:(t + 1) * C, :] = pad_ref[:, s0:s0 + HW] * m_ref[t]

    # One big MXU matmul per image: (Ci, 9*Ci) @ (9*Ci, HW), f32 accumulate.
    o_ref[0] = jnp.dot(wp_ref[...], col_ref[...], preferred_element_type=jnp.float32)


def _compression_shortcut_kernel(s0_ref, y1_ref, y2_ref, y3_ref, y4_ref, x_ref,
                                 sc_ref, bc_ref, ss_ref, bs_ref, w_ref,
                                 o_ref, cat_ref):
    # compression(cat([s0,y1..y4])) + shortcut(x) as ONE matmul over a VMEM-resident concat.
    # w: (Cout, 5*Ci + Cin) bf16 (compression || shortcut weights).
    Ci = s0_ref.shape[1]
    Cin = x_ref.shape[1]
    parts = (s0_ref, y1_ref, y2_ref, y3_ref, y4_ref)
    for k, p in enumerate(parts):
        yk = jnp.maximum(p[0] * sc_ref[k * Ci:(k + 1) * Ci, :]
                         + bc_ref[k * Ci:(k + 1) * Ci, :], 0.0)
        cat_ref[k * Ci:(k + 1) * Ci, :] = yk.astype(jnp.bfloat16)
    ysc = jnp.maximum(x_ref[0] * ss_ref[...] + bs_ref[...], 0.0)
    cat_ref[5 * Ci:5 * Ci + Cin, :] = ysc.astype(jnp.bfloat16)
    o_ref[0] = jnp.dot(w_ref[...], cat_ref[...], preferred_element_type=jnp.float32)


# ----------------------------- Static matrices -----------------------------

def _interp_matrix(out_size, in_size):
    # PyTorch bilinear, align_corners=False (half-pixel centers, src clamped at 0).
    i = np.arange(out_size)
    src = (i + 0.5) * (in_size / out_size) - 0.5
    src = np.clip(src, 0.0, None)
    i0 = np.minimum(np.floor(src).astype(np.int64), in_size - 1)
    i1 = np.minimum(i0 + 1, in_size - 1)
    w1 = src - i0
    w0 = 1.0 - w1
    A = np.zeros((out_size, in_size), dtype=np.float32)
    A[np.arange(out_size), i0] += w0
    A[np.arange(out_size), i1] += w1
    return A


def _pool_matrix_1d(L, k, s, p):
    # PyTorch AvgPool2d (count_include_pad=True) is separable; divisor is always k per axis.
    out = (L + 2 * p - k) // s + 1
    A = np.zeros((out, L), dtype=np.float32)
    for o in range(out):
        start = o * s - p
        for i in range(start, start + k):
            if 0 <= i < L:
                A[o, i] = 1.0 / k
    return A


def _pool_up_matrices(H, W, cfg, pad):
    # cfg = (k, s, p) for AvgPool2d, or None for global average pooling (1x1).
    if cfg is None:
        Ph = np.full((1, H), 1.0 / H, np.float32)
        Pw = np.full((1, W), 1.0 / W, np.float32)
    else:
        k, s, p = cfg
        Ph = _pool_matrix_1d(H, k, s, p)
        Pw = _pool_matrix_1d(W, k, s, p)
    h_out, w_out = Ph.shape[0], Pw.shape[0]
    hw = h_out * w_out
    HW = H * W
    Mpool = np.kron(Ph, Pw)                                   # (hw, HW): pooled = x @ Mpool.T
    Ah = _interp_matrix(H, h_out)
    Aw = _interp_matrix(W, w_out)
    Mup = np.kron(Ah, Aw)                                     # (HW, hw): up = z @ Mup.T
    poolT = np.zeros((HW, pad), np.float32)
    poolT[:, :hw] = Mpool.T
    upT = np.zeros((pad, HW), np.float32)                     # zero rows kill padded columns
    upT[:hw, :] = Mup.T
    return poolT, upT


def _tap_masks(H, W):
    # mask[t, 0, h*W+w] == 1 iff source pixel (h+ky-1, w+kx-1) is inside the image.
    hw = H * W
    hh, ww = np.meshgrid(np.arange(H), np.arange(W), indexing='ij')
    hh = hh.reshape(-1)
    ww = ww.reshape(-1)
    m = np.zeros((9, 1, hw), np.float32)
    for ky in range(3):
        for kx in range(3):
            valid = ((hh + ky - 1 >= 0) & (hh + ky - 1 < H) &
                     (ww + kx - 1 >= 0) & (ww + kx - 1 < W))
            m[ky * 3 + kx, 0, :] = valid.astype(np.float32)
    return m


# ----------------------------- Pallas wrappers -----------------------------

def bn_relu_conv1x1(x_f, scale, shift, wt_bf16):
    # x_f: (N, Cin, M) -> (N, Cout, M)
    N, Cin, M = x_f.shape
    Cout = wt_bf16.shape[0]
    return pl.pallas_call(
        _bn_relu_conv1x1_kernel,
        out_shape=jax.ShapeDtypeStruct((N, Cout, M), jnp.float32),
        grid_spec=pltpu.PrefetchScalarGridSpec(
            num_scalar_prefetch=0,
            grid=(N,),
            in_specs=[pl.BlockSpec((1, Cin, M), lambda n: (n, 0, 0)),
                      pl.BlockSpec((Cin, 1), lambda n: (0, 0)),
                      pl.BlockSpec((Cin, 1), lambda n: (0, 0)),
                      pl.BlockSpec((Cout, Cin), lambda n: (0, 0))],
            out_specs=pl.BlockSpec((1, Cout, M), lambda n: (n, 0, 0))),
        compiler_params=pltpu.CompilerParams(dimension_semantics=("parallel",)),
    )(x_f, scale.reshape(Cin, 1), shift.reshape(Cin, 1), wt_bf16)


def fused_scale_process(x_f, prev_f, poolT, upT, ss, bs, ws_bf16, sp, bp, wp_bf16, W):
    # x_f: (N, Cin, H*W), prev_f: (N, Ci, H*W) -> (N, Ci, H*W)
    N, Cin, HW = x_f.shape
    Ci = prev_f.shape[1]
    H = HW // W
    P = poolT.shape[1]
    Cout = wp_bf16.shape[0]
    masks = jnp.asarray(_tap_masks(H, W), dtype=jnp.bfloat16)
    pad_cols = HW + 2 * (W + 1)
    kernel = functools.partial(_fused_scale_process_kernel, W)
    return pl.pallas_call(
        kernel,
        out_shape=jax.ShapeDtypeStruct((N, Cout, HW), jnp.float32),
        grid_spec=pltpu.PrefetchScalarGridSpec(
            num_scalar_prefetch=0,
            grid=(N,),
            in_specs=[pl.BlockSpec((1, Cin, HW), lambda n: (n, 0, 0)),
                      pl.BlockSpec((HW, P), lambda n: (0, 0)),
                      pl.BlockSpec((Cin, 1), lambda n: (0, 0)),
                      pl.BlockSpec((Cin, 1), lambda n: (0, 0)),
                      pl.BlockSpec((Ci, Cin), lambda n: (0, 0)),
                      pl.BlockSpec((P, HW), lambda n: (0, 0)),
                      pl.BlockSpec((1, Ci, HW), lambda n: (n, 0, 0)),
                      pl.BlockSpec((Ci, 1), lambda n: (0, 0)),
                      pl.BlockSpec((Ci, 1), lambda n: (0, 0)),
                      pl.BlockSpec((Cout, 9 * Ci), lambda n: (0, 0)),
                      pl.BlockSpec((9, 1, HW), lambda n: (0, 0, 0))],
            out_specs=pl.BlockSpec((1, Cout, HW), lambda n: (n, 0, 0)),
            scratch_shapes=[pltpu.VMEM((Ci, pad_cols), jnp.bfloat16),
                            pltpu.VMEM((9 * Ci, HW), jnp.bfloat16)]),
        compiler_params=pltpu.CompilerParams(dimension_semantics=("parallel",)),
    )(x_f, poolT, ss.reshape(Cin, 1), bs.reshape(Cin, 1), ws_bf16,
      upT, prev_f, sp.reshape(Ci, 1), bp.reshape(Ci, 1), wp_bf16, masks)


def compression_shortcut(s0, y1, y2, y3, y4, x_f, sc, bc, ss, bs, w_cat_bf16):
    N, Ci, M = s0.shape
    Cin = x_f.shape[1]
    Cout, Ccat = w_cat_bf16.shape
    feat_spec = pl.BlockSpec((1, Ci, M), lambda n: (n, 0, 0))
    return pl.pallas_call(
        _compression_shortcut_kernel,
        out_shape=jax.ShapeDtypeStruct((N, Cout, M), jnp.float32),
        grid_spec=pltpu.PrefetchScalarGridSpec(
            num_scalar_prefetch=0,
            grid=(N,),
            in_specs=[feat_spec, feat_spec, feat_spec, feat_spec, feat_spec,
                      pl.BlockSpec((1, Cin, M), lambda n: (n, 0, 0)),
                      pl.BlockSpec((5 * Ci, 1), lambda n: (0, 0)),
                      pl.BlockSpec((5 * Ci, 1), lambda n: (0, 0)),
                      pl.BlockSpec((Cin, 1), lambda n: (0, 0)),
                      pl.BlockSpec((Cin, 1), lambda n: (0, 0)),
                      pl.BlockSpec((Cout, Ccat), lambda n: (0, 0))],
            out_specs=pl.BlockSpec((1, Cout, M), lambda n: (n, 0, 0)),
            scratch_shapes=[pltpu.VMEM((Ccat, M), jnp.bfloat16)]),
        compiler_params=pltpu.CompilerParams(dimension_semantics=("parallel",)),
    )(s0, y1, y2, y3, y4, x_f,
      sc.reshape(-1, 1), bc.reshape(-1, 1), ss.reshape(-1, 1), bs.reshape(-1, 1),
      w_cat_bf16)


# ----------------------------- Parameters -----------------------------

def _make_bn(key, c):
    k1, k2, k3, k4 = jax.random.split(key, 4)
    gamma = jax.random.uniform(k1, (c,), minval=0.5, maxval=1.5)
    beta = 0.1 * jax.random.normal(k2, (c,))
    mean = 0.1 * jax.random.normal(k3, (c,))
    var = jax.random.uniform(k4, (c,), minval=0.5, maxval=1.5)
    scale = gamma / jnp.sqrt(var + 1e-5)
    shift = beta - mean * scale
    return scale.astype(jnp.float32), shift.astype(jnp.float32)


def init_params(key, cin, cinter, cout):
    # 1x1 weights stored transposed: (Cout, Cin).  3x3 weights stored as (Cout, 9*Cin) with
    # column order (tap ky*3+kx)-major then input channel (im2col layout).
    specs = [('scale0', cin, (cinter, cin)),
             ('scale1', cin, (cinter, cin)),
             ('scale2', cin, (cinter, cin)),
             ('scale3', cin, (cinter, cin)),
             ('scale4', cin, (cinter, cin)),
             ('process1', cinter, (cinter, 9 * cinter)),
             ('process2', cinter, (cinter, 9 * cinter)),
             ('process3', cinter, (cinter, 9 * cinter)),
             ('process4', cinter, (cinter, 9 * cinter)),
             ('compression', 5 * cinter, (cout, 5 * cinter)),
             ('shortcut', cin, (cout, cin))]
    keys = iter(jax.random.split(key, 2 * len(specs)))
    params = {}
    for name, c_bn, w_shape in specs:
        s, b = _make_bn(next(keys), c_bn)
        fan_in = w_shape[1]
        wt = (jax.random.normal(next(keys), w_shape) / np.sqrt(fan_in)).astype(jnp.float32)
        params['s_' + name] = s
        params['b_' + name] = b
        params['wt_' + name] = wt
    return params


# ----------------------------- Forward (Pallas) -----------------------------

def dappm_forward(x, params):
    # x: (N, Cin, H, W)
    N, Cin, H, W = x.shape
    HW = H * W
    x_f = x.reshape(N, Cin, HW)
    Cout = params['wt_compression'].shape[0]

    def wbf(name):
        return params['wt_' + name].astype(jnp.bfloat16)

    # --- scale0 (full-resolution 1x1 branch) ---
    s0 = bn_relu_conv1x1(x_f, params['s_scale0'], params['b_scale0'], wbf('scale0'))

    # --- pyramid stages: one fused kernel each (pool+BN+ReLU+1x1+upsample+add+BN+ReLU+3x3) ---
    pool_cfg = [(5, 2, 2), (9, 4, 4), (17, 8, 8), None]   # None = global average pool
    prev = s0
    feats = [s0]
    for idx, cfg in enumerate(pool_cfg, start=1):
        poolT, upT = _pool_up_matrices(H, W, cfg, POOL_PAD)
        prev = fused_scale_process(
            x_f, prev, jnp.asarray(poolT), jnp.asarray(upT),
            params['s_scale%d' % idx], params['b_scale%d' % idx], wbf('scale%d' % idx),
            params['s_process%d' % idx], params['b_process%d' % idx], wbf('process%d' % idx),
            W)
        feats.append(prev)

    s0, y1, y2, y3, y4 = feats

    # --- compression(cat) + shortcut fused into one matmul ---
    w_final = jnp.concatenate([wbf('compression'), wbf('shortcut')], axis=1)
    out = compression_shortcut(
        s0, y1, y2, y3, y4, x_f,
        params['s_compression'], params['b_compression'],
        params['s_shortcut'], params['b_shortcut'], w_final)
    return out.reshape(N, Cout, H, W)


# ----------------------------- Pure-JAX reference -----------------------------

def avg_pool(x, k, s, p):
    # PyTorch AvgPool2d(count_include_pad=True): divisor is always k*k.
    summed = lax.reduce_window(x, 0.0, lax.add,
                               (1, 1, k, k), (1, 1, s, s),
                               [(0, 0), (0, 0), (p, p), (p, p)])
    return summed / float(k * k)


def upsample_bilinear(x, H_out, W_out):
    # x: (N, C, h, w) -> (N, C, H_out, W_out)
    n, c, h, w = x.shape
    Ah = jnp.asarray(_interp_matrix(H_out, h))
    Aw = jnp.asarray(_interp_matrix(W_out, w))
    t = jnp.einsum('oh,nchw->ncow', Ah, x, precision=lax.Precision.HIGHEST)
    return jnp.einsum('pw,ncow->ncop', Aw, t, precision=lax.Precision.HIGHEST)


def dappm_reference(x, params):
    N, Cin, H, W = x.shape

    def c1(z, name):
        s = params['s_' + name][None, :, None, None]
        b = params['b_' + name][None, :, None, None]
        y = jnp.maximum(z * s + b, 0.0)
        return jnp.einsum('oc,nchw->nohw', params['wt_' + name], y,
                          precision=lax.Precision.HIGHEST)

    def proc(up, prev, name):
        s = params['s_' + name][None, :, None, None]
        b = params['b_' + name][None, :, None, None]
        y = jnp.maximum((up + prev) * s + b, 0.0)
        c = y.shape[1]
        w = params['wt_' + name].reshape(-1, 3, 3, c).transpose(0, 3, 1, 2)  # OIHW
        return lax.conv_general_dilated(y, w, (1, 1), ((1, 1), (1, 1)),
                                        dimension_numbers=('NCHW', 'OIHW', 'NCHW'),
                                        precision=lax.Precision.HIGHEST)

    s0 = c1(x, 'scale0')
    y1 = proc(upsample_bilinear(c1(avg_pool(x, 5, 2, 2), 'scale1'), H, W), s0, 'process1')
    y2 = proc(upsample_bilinear(c1(avg_pool(x, 9, 4, 4), 'scale2'), H, W), y1, 'process2')
    y3 = proc(upsample_bilinear(c1(avg_pool(x, 17, 8, 8), 'scale3'), H, W), y2, 'process3')
    y4 = proc(upsample_bilinear(c1(jnp.mean(x, axis=(2, 3), keepdims=True), 'scale4'), H, W),
              y3, 'process4')
    cat = jnp.concatenate([s0, y1, y2, y3, y4], axis=1)
    return c1(cat, 'compression') + c1(x, 'shortcut')


# ----------------------------- Main -----------------------------

if __name__ == "__main__":
    N, H, W = 2, 16, 16
    in_channels, inter_channels, out_channels = 16, 32, 32

    key = jax.random.PRNGKey(0)
    k_in, k_par = jax.random.split(key)
    x = jax.random.normal(k_in, (N, in_channels, H, W), dtype=jnp.float32)
    params = init_params(k_par, in_channels, inter_channels, out_channels)

    out = jax.block_until_ready(jax.jit(dappm_forward)(x, params))
    ref = jax.block_until_ready(jax.jit(dappm_reference)(x, params))

    assert out.shape == (N, out_channels, H, W), out.shape
    # Tolerance accounts for intentional bf16 MXU operands (f32 accumulate) in the kernels.
    np.testing.assert_allclose(np.asarray(out), np.asarray(ref), rtol=3e-2, atol=3e-2)
    print("KERNEL_OK")
</pallas_src>

<mosaic_0001>
module attributes {stable_mosaic.version = 11 : i64} {
  func.func @_compression_shortcut_kernel(%arg0: i32, %arg1: memref<1x32x256xf32, #tpu.memory_space<vmem>>, %arg2: memref<1x32x256xf32, #tpu.memory_space<vmem>>, %arg3: memref<1x32x256xf32, #tpu.memory_space<vmem>>, %arg4: memref<1x32x256xf32, #tpu.memory_space<vmem>>, %arg5: memref<1x32x256xf32, #tpu.memory_space<vmem>>, %arg6: memref<1x16x256xf32, #tpu.memory_space<vmem>>, %arg7: memref<160x1xf32, #tpu.memory_space<vmem>>, %arg8: memref<160x1xf32, #tpu.memory_space<vmem>>, %arg9: memref<16x1xf32, #tpu.memory_space<vmem>>, %arg10: memref<16x1xf32, #tpu.memory_space<vmem>>, %arg11: memref<32x176xbf16, #tpu.memory_space<vmem>>, %arg12: memref<1x32x256xf32, #tpu.memory_space<vmem>>, %arg13: memref<176x256xbf16, #tpu.memory_space<vmem>>) attributes {dimension_semantics = [#tpu.dimension_semantics<parallel>], iteration_bounds = array<i64: 2>, scalar_prefetch = 0 : i64, scratch_operands = 1 : i64, tpu.core_type = #tpu.core_type<tc>, window_params = [{transform_indices = @transform_0, window_bounds = array<i64: 1, 32, 256>}, {transform_indices = @transform_1, window_bounds = array<i64: 1, 32, 256>}, {transform_indices = @transform_2, window_bounds = array<i64: 1, 32, 256>}, {transform_indices = @transform_3, window_bounds = array<i64: 1, 32, 256>}, {transform_indices = @transform_4, window_bounds = array<i64: 1, 32, 256>}, {transform_indices = @transform_5, window_bounds = array<i64: 1, 16, 256>}, {pipeline_mode = #tpu.pipeline_mode<synchronous>, transform_indices = @transform_6, window_bounds = array<i64: 160, 1>}, {pipeline_mode = #tpu.pipeline_mode<synchronous>, transform_indices = @transform_7, window_bounds = array<i64: 160, 1>}, {pipeline_mode = #tpu.pipeline_mode<synchronous>, transform_indices = @transform_8, window_bounds = array<i64: 16, 1>}, {pipeline_mode = #tpu.pipeline_mode<synchronous>, transform_indices = @transform_9, window_bounds = array<i64: 16, 1>}, {pipeline_mode = #tpu.pipeline_mode<synchronous>, transform_indices = @transform_10, window_bounds = array<i64: 32, 176>}, {transform_indices = @transform_11, window_bounds = array<i64: 1, 32, 256>}]} {
    %c0 = arith.constant 0 : index
    %c0_0 = arith.constant 0 : index
    %c0_1 = arith.constant 0 : index
    %0 = vector.load %arg1[%c0, %c0_0, %c0_1] : memref<1x32x256xf32, #tpu.memory_space<vmem>>, vector<1x32x256xf32>
    %1 = vector.shape_cast %0 : vector<1x32x256xf32> to vector<32x256xf32>
    %c0_2 = arith.constant 0 : index
    %c0_3 = arith.constant 0 : index
    %2 = vector.load %arg7[%c0_2, %c0_3] : memref<160x1xf32, #tpu.memory_space<vmem>>, vector<32x1xf32>
    %3 = vector.broadcast %2 : vector<32x1xf32> to vector<32x256xf32>
    %4 = arith.mulf %1, %3 : vector<32x256xf32>
    %c0_4 = arith.constant 0 : index
    %c0_5 = arith.constant 0 : index
    %5 = vector.load %arg8[%c0_4, %c0_5] : memref<160x1xf32, #tpu.memory_space<vmem>>, vector<32x1xf32>
    %6 = vector.broadcast %5 : vector<32x1xf32> to vector<32x256xf32>
    %7 = arith.addf %4, %6 : vector<32x256xf32>
    %cst = arith.constant 0.000000e+00 : f32
    %8 = vector.broadcast %cst : f32 to vector<32x256xf32>
    %9 = arith.maximumf %7, %8 : vector<32x256xf32>
    %10 = arith.truncf %9 : vector<32x256xf32> to vector<32x256xbf16>
    %c0_6 = arith.constant 0 : index
    %c0_7 = arith.constant 0 : index
    %11 = vector.load %arg13[%c0_6, %c0_7] : memref<176x256xbf16, #tpu.memory_space<vmem>>, vector<32x256xbf16>
    tpu.vector_store %arg13[%c0_6, %c0_7], %10 {strides = array<i32>} : memref<176x256xbf16, #tpu.memory_space<vmem>>, vector<32x256xbf16>,
    %c0_8 = arith.constant 0 : index
    %c0_9 = arith.constant 0 : index
    %c0_10 = arith.constant 0 : index
    %12 = vector.load %arg2[%c0_8, %c0_9, %c0_10] : memref<1x32x256xf32, #tpu.memory_space<vmem>>, vector<1x32x256xf32>
    %13 = vector.shape_cast %12 : vector<1x32x256xf32> to vector<32x256xf32>
    %c32 = arith.constant 32 : index
    %c0_11 = arith.constant 0 : index
    %14 = vector.load %arg7[%c32, %c0_11] : memref<160x1xf32, #tpu.memory_space<vmem>>, vector<32x1xf32>
    %15 = vector.broadcast %14 : vector<32x1xf32> to vector<32x256xf32>
    %16 = arith.mulf %13, %15 : vector<32x256xf32>
    %c32_12 = arith.constant 32 : index
    %c0_13 = arith.constant 0 : index
    %17 = vector.load %arg8[%c32_12, %c0_13] : memref<160x1xf32, #tpu.memory_space<vmem>>, vector<32x1xf32>
    %18 = vector.broadcast %17 : vector<32x1xf32> to vector<32x256xf32>
    %19 = arith.addf %16, %18 : vector<32x256xf32>
    %cst_14 = arith.constant 0.000000e+00 : f32
    %20 = vector.broadcast %cst_14 : f32 to vector<32x256xf32>
    %21 = arith.maximumf %19, %20 : vector<32x256xf32>
    %22 = arith.truncf %21 : vector<32x256xf32> to vector<32x256xbf16>
    %c32_15 = arith.constant 32 : index
    %c0_16 = arith.constant 0 : index
    %23 = vector.load %arg13[%c32_15, %c0_16] : memref<176x256xbf16, #tpu.memory_space<vmem>>, vector<32x256xbf16>
    tpu.vector_store %arg13[%c32_15, %c0_16], %22 {strides = array<i32>} : memref<176x256xbf16, #tpu.memory_space<vmem>>, vector<32x256xbf16>,
    %c0_17 = arith.constant 0 : index
    %c0_18 = arith.constant 0 : index
    %c0_19 = arith.constant 0 : index
    %24 = vector.load %arg3[%c0_17, %c0_18, %c0_19] : memref<1x32x256xf32, #tpu.memory_space<vmem>>, vector<1x32x256xf32>
    %25 = vector.shape_cast %24 : vector<1x32x256xf32> to vector<32x256xf32>
    %c64 = arith.constant 64 : index
    %c0_20 = arith.constant 0 : index
    %26 = vector.load %arg7[%c64, %c0_20] : memref<160x1xf32, #tpu.memory_space<vmem>>, vector<32x1xf32>
    %27 = vector.broadcast %26 : vector<32x1xf32> to vector<32x256xf32>
    %28 = arith.mulf %25, %27 : vector<32x256xf32>
    %c64_21 = arith.constant 64 : index
    %c0_22 = arith.constant 0 : index
    %29 = vector.load %arg8[%c64_21, %c0_22] : memref<160x1xf32, #tpu.memory_space<vmem>>, vector<32x1xf32>
    %30 = vector.broadcast %29 : vector<32x1xf32> to vector<32x256xf32>
    %31 = arith.addf %28, %30 : vector<32x256xf32>
    %cst_23 = arith.constant 0.000000e+00 : f32
    %32 = vector.broadcast %cst_23 : f32 to vector<32x256xf32>
    %33 = arith.maximumf %31, %32 : vector<32x256xf32>
    %34 = arith.truncf %33 : vector<32x256xf32> to vector<32x256xbf16>
    %c64_24 = arith.constant 64 : index
    %c0_25 = arith.constant 0 : index
    %35 = vector.load %arg13[%c64_24, %c0_25] : memref<176x256xbf16, #tpu.memory_space<vmem>>, vector<32x256xbf16>
    tpu.vector_store %arg13[%c64_24, %c0_25], %34 {strides = array<i32>} : memref<176x256xbf16, #tpu.memory_space<vmem>>, vector<32x256xbf16>,
    %c0_26 = arith.constant 0 : index
    %c0_27 = arith.constant 0 : index
    %c0_28 = arith.constant 0 : index
    %36 = vector.load %arg4[%c0_26, %c0_27, %c0_28] : memref<1x32x256xf32, #tpu.memory_space<vmem>>, vector<1x32x256xf32>
    %37 = vector.shape_cast %36 : vector<1x32x256xf32> to vector<32x256xf32>
    %c96 = arith.constant 96 : index
    %c0_29 = arith.constant 0 : index
    %38 = vector.load %arg7[%c96, %c0_29] : memref<160x1xf32, #tpu.memory_space<vmem>>, vector<32x1xf32>
    %39 = vector.broadcast %38 : vector<32x1xf32> to vector<32x256xf32>
    %40 = arith.mulf %37, %39 : vector<32x256xf32>
    %c96_30 = arith.constant 96 : index
    %c0_31 = arith.constant 0 : index
    %41 = vector.load %arg8[%c96_30, %c0_31] : memref<160x1xf32, #tpu.memory_space<vmem>>, vector<32x1xf32>
    %42 = vector.broadcast %41 : vector<32x1xf32> to vector<32x256xf32>
    %43 = arith.addf %40, %42 : vector<32x256xf32>
    %cst_32 = arith.constant 0.000000e+00 : f32
    %44 = vector.broadcast %cst_32 : f32 to vector<32x256xf32>
    %45 = arith.maximumf %43, %44 : vector<32x256xf32>
    %46 = arith.truncf %45 : vector<32x256xf32> to vector<32x256xbf16>
    %c96_33 = arith.constant 96 : index
    %c0_34 = arith.constant 0 : index
    %47 = vector.load %arg13[%c96_33, %c0_34] : memref<176x256xbf16, #tpu.memory_space<vmem>>, vector<32x256xbf16>
    tpu.vector_store %arg13[%c96_33, %c0_34], %46 {strides = array<i32>} : memref<176x256xbf16, #tpu.memory_space<vmem>>, vector<32x256xbf16>,
    %c0_35 = arith.constant 0 : index
    %c0_36 = arith.constant 0 : index
    %c0_37 = arith.constant 0 : index
    %48 = vector.load %arg5[%c0_35, %c0_36, %c0_37] : memref<1x32x256xf32, #tpu.memory_space<vmem>>, vector<1x32x256xf32>
    %49 = vector.shape_cast %48 : vector<1x32x256xf32> to vector<32x256xf32>
    %c128 = arith.constant 128 : index
    %c0_38 = arith.constant 0 : index
    %50 = vector.load %arg7[%c128, %c0_38] : memref<160x1xf32, #tpu.memory_space<vmem>>, vector<32x1xf32>
    %51 = vector.broadcast %50 : vector<32x1xf32> to vector<32x256xf32>
    %52 = arith.mulf %49, %51 : vector<32x256xf32>
    %c128_39 = arith.constant 128 : index
    %c0_40 = arith.constant 0 : index
    %53 = vector.load %arg8[%c128_39, %c0_40] : memref<160x1xf32, #tpu.memory_space<vmem>>, vector<32x1xf32>
    %54 = vector.broadcast %53 : vector<32x1xf32> to vector<32x256xf32>
    %55 = arith.addf %52, %54 : vector<32x256xf32>
    %cst_41 = arith.constant 0.000000e+00 : f32
    %56 = vector.broadcast %cst_41 : f32 to vector<32x256xf32>
    %57 = arith.maximumf %55, %56 : vector<32x256xf32>
    %58 = arith.truncf %57 : vector<32x256xf32> to vector<32x256xbf16>
    %c128_42 = arith.constant 128 : index
    %c0_43 = arith.constant 0 : index
    %59 = vector.load %arg13[%c128_42, %c0_43] : memref<176x256xbf16, #tpu.memory_space<vmem>>, vector<32x256xbf16>
    tpu.vector_store %arg13[%c128_42, %c0_43], %58 {strides = array<i32>} : memref<176x256xbf16, #tpu.memory_space<vmem>>, vector<32x256xbf16>,
    %c0_44 = arith.constant 0 : index
    %c0_45 = arith.constant 0 : index
    %c0_46 = arith.constant 0 : index
    %60 = vector.load %arg6[%c0_44, %c0_45, %c0_46] : memref<1x16x256xf32, #tpu.memory_space<vmem>>, vector<1x16x256xf32>
    %61 = vector.shape_cast %60 : vector<1x16x256xf32> to vector<16x256xf32>
    %c0_47 = arith.constant 0 : index
    %c0_48 = arith.constant 0 : index
    %62 = vector.load %arg9[%c0_47, %c0_48] : memref<16x1xf32, #tpu.memory_space<vmem>>, vector<16x1xf32>
    %63 = vector.broadcast %62 : vector<16x1xf32> to vector<16x256xf32>
    %64 = arith.mulf %61, %63 : vector<16x256xf32>
    %c0_49 = arith.constant 0 : index
    %c0_50 = arith.constant 0 : index
    %65 = vector.load %arg10[%c0_49, %c0_50] : memref<16x1xf32, #tpu.memory_space<vmem>>, vector<16x1xf32>
    %66 = vector.broadcast %65 : vector<16x1xf32> to vector<16x256xf32>
    %67 = arith.addf %64, %66 : vector<16x256xf32>
    %cst_51 = arith.constant 0.000000e+00 : f32
    %68 = vector.broadcast %cst_51 : f32 to vector<16x256xf32>
    %69 = arith.maximumf %67, %68 : vector<16x256xf32>
    %70 = arith.truncf %69 : vector<16x256xf32> to vector<16x256xbf16>
    %c160 = arith.constant 160 : index
    %c0_52 = arith.constant 0 : index
    %71 = vector.load %arg13[%c160, %c0_52] : memref<176x256xbf16, #tpu.memory_space<vmem>>, vector<16x256xbf16>
    tpu.vector_store %arg13[%c160, %c0_52], %70 {strides = array<i32>} : memref<176x256xbf16, #tpu.memory_space<vmem>>, vector<16x256xbf16>,
    %c0_53 = arith.constant 0 : index
    %c0_54 = arith.constant 0 : index
    %72 = vector.load %arg11[%c0_53, %c0_54] : memref<32x176xbf16, #tpu.memory_space<vmem>>, vector<32x176xbf16>
    %c0_55 = arith.constant 0 : index
    %c0_56 = arith.constant 0 : index
    %73 = vector.load %arg13[%c0_55, %c0_56] : memref<176x256xbf16, #tpu.memory_space<vmem>>, vector<176x256xbf16>
    %cst_57 = arith.constant dense<0.000000e+00> : vector<32x256xf32>
    %74 = tpu.matmul %72, %73, %cst_57 {dimension_numbers = #tpu.dot_dimension_numbers<[1], [0], [0], [1], [0, 0, 1, 1], [], []>} : vector<32x176xbf16>, vector<176x256xbf16>, vector<32x256xf32> -> vector<32x256xf32>
    %c0_58 = arith.constant 0 : index
    %c0_59 = arith.constant 0 : index
    %c0_60 = arith.constant 0 : index
    %75 = vector.load %arg12[%c0_58, %c0_59, %c0_60] : memref<1x32x256xf32, #tpu.memory_space<vmem>>, vector<1x32x256xf32>
    %76 = vector.shape_cast %75 : vector<1x32x256xf32> to vector<32x256xf32>
    %77 = vector.shape_cast %74 : vector<32x256xf32> to vector<1x32x256xf32>
    tpu.vector_store %arg12[%c0_58, %c0_59, %c0_60], %77 {strides = array<i32>} : memref<1x32x256xf32, #tpu.memory_space<vmem>>, vector<1x32x256xf32>,
    return
  }
  func.func @transform_0(%arg0: i32) -> (i32, i32, i32) {
    %c0_i32 = arith.constant 0 : i32
    %c0_i32_0 = arith.constant 0 : i32
    %c0_i32_1 = arith.constant 0 : i32
    return %arg0, %c0_i32, %c0_i32_0 : i32, i32, i32
  }
  func.func @transform_1(%arg0: i32) -> (i32, i32, i32) {
    %c0_i32 = arith.constant 0 : i32
    %c0_i32_0 = arith.constant 0 : i32
    %c0_i32_1 = arith.constant 0 : i32
    return %arg0, %c0_i32, %c0_i32_0 : i32, i32, i32
  }
  func.func @transform_2(%arg0: i32) -> (i32, i32, i32) {
    %c0_i32 = arith.constant 0 : i32
    %c0_i32_0 = arith.constant 0 : i32
    %c0_i32_1 = arith.constant 0 : i32
    return %arg0, %c0_i32, %c0_i32_0 : i32, i32, i32
  }
  func.func @transform_3(%arg0: i32) -> (i32, i32, i32) {
    %c0_i32 = arith.constant 0 : i32
    %c0_i32_0 = arith.constant 0 : i32
    %c0_i32_1 = arith.constant 0 : i32
    return %arg0, %c0_i32, %c0_i32_0 : i32, i32, i32
  }
  func.func @transform_4(%arg0: i32) -> (i32, i32, i32) {
    %c0_i32 = arith.constant 0 : i32
    %c0_i32_0 = arith.constant 0 : i32
    %c0_i32_1 = arith.constant 0 : i32
    return %arg0, %c0_i32, %c0_i32_0 : i32, i32, i32
  }
  func.func @transform_5(%arg0: i32) -> (i32, i32, i32) {
    %c0_i32 = arith.constant 0 : i32
    %c0_i32_0 = arith.constant 0 : i32
    %c0_i32_1 = arith.constant 0 : i32
    return %arg0, %c0_i32, %c0_i32_0 : i32, i32, i32
  }
  func.func @transform_6(%arg0: i32) -> (i32, i32) {
    %c0_i32 = arith.constant 0 : i32
    %c0_i32_0 = arith.constant 0 : i32
    %c0_i32_1 = arith.constant 0 : i32
    return %c0_i32, %c0_i32_0 : i32, i32
  }
  func.func @transform_7(%arg0: i32) -> (i32, i32) {
    %c0_i32 = arith.constant 0 : i32
    %c0_i32_0 = arith.constant 0 : i32
    %c0_i32_1 = arith.constant 0 : i32
    return %c0_i32, %c0_i32_0 : i32, i32
  }
  func.func @transform_8(%arg0: i32) -> (i32, i32) {
    %c0_i32 = arith.constant 0 : i32
    %c0_i32_0 = arith.constant 0 : i32
    %c0_i32_1 = arith.constant 0 : i32
    return %c0_i32, %c0_i32_0 : i32, i32
  }
  func.func @transform_9(%arg0: i32) -> (i32, i32) {
    %c0_i32 = arith.constant 0 : i32
    %c0_i32_0 = arith.constant 0 : i32
    %c0_i32_1 = arith.constant 0 : i32
    return %c0_i32, %c0_i32_0 : i32, i32
  }
  func.func @transform_10(%arg0: i32) -> (i32, i32) {
    %c0_i32 = arith.constant 0 : i32
    %c0_i32_0 = arith.constant 0 : i32
    %c0_i32_1 = arith.constant 0 : i32
    return %c0_i32, %c0_i32_0 : i32, i32
  }
  func.func @transform_11(%arg0: i32) -> (i32, i32, i32) {
    %c0_i32 = arith.constant 0 : i32
    %c0_i32_0 = arith.constant 0 : i32
    %c0_i32_1 = arith.constant 0 : i32
    return %arg0, %c0_i32, %c0_i32_0 : i32, i32, i32
  }
}

module attributes {stable_mosaic.version = 11 : i64} {
  func.func @_bn_relu_conv1x1_kernel(%arg0: i32, %arg1: memref<1x16x256xf32, #tpu.memory_space<vmem>>, %arg2: memref<16x1xf32, #tpu.memory_space<vmem>>, %arg3: memref<16x1xf32, #tpu.memory_space<vmem>>, %arg4: memref<32x16xbf16, #tpu.memory_space<vmem>>, %arg5: memref<1x32x256xf32, #tpu.memory_space<vmem>>) attributes {dimension_semantics = [#tpu.dimension_semantics<parallel>], iteration_bounds = array<i64: 2>, scalar_prefetch = 0 : i64, scratch_operands = 0 : i64, tpu.core_type = #tpu.core_type<tc>, window_params = [{transform_indices = @transform_0, window_bounds = array<i64: 1, 16, 256>}, {pipeline_mode = #tpu.pipeline_mode<synchronous>, transform_indices = @transform_1, window_bounds = array<i64: 16, 1>}, {pipeline_mode = #tpu.pipeline_mode<synchronous>, transform_indices = @transform_2, window_bounds = array<i64: 16, 1>}, {pipeline_mode = #tpu.pipeline_mode<synchronous>, transform_indices = @transform_3, window_bounds = array<i64: 32, 16>}, {transform_indices = @transform_4, window_bounds = array<i64: 1, 32, 256>}]} {
    %c0 = arith.constant 0 : index
    %c0_0 = arith.constant 0 : index
    %c0_1 = arith.constant 0 : index
    %0 = vector.load %arg1[%c0, %c0_0, %c0_1] : memref<1x16x256xf32, #tpu.memory_space<vmem>>, vector<1x16x256xf32>
    %1 = vector.shape_cast %0 : vector<1x16x256xf32> to vector<16x256xf32>
    %c0_2 = arith.constant 0 : index
    %c0_3 = arith.constant 0 : index
    %2 = vector.load %arg2[%c0_2, %c0_3] : memref<16x1xf32, #tpu.memory_space<vmem>>, vector<16x1xf32>
    %3 = vector.broadcast %2 : vector<16x1xf32> to vector<16x256xf32>
    %4 = arith.mulf %1, %3 : vector<16x256xf32>
    %c0_4 = arith.constant 0 : index
    %c0_5 = arith.constant 0 : index
    %5 = vector.load %arg3[%c0_4, %c0_5] : memref<16x1xf32, #tpu.memory_space<vmem>>, vector<16x1xf32>
    %6 = vector.broadcast %5 : vector<16x1xf32> to vector<16x256xf32>
    %7 = arith.addf %4, %6 : vector<16x256xf32>
    %cst = arith.constant 0.000000e+00 : f32
    %8 = vector.broadcast %cst : f32 to vector<16x256xf32>
    %9 = arith.maximumf %7, %8 : vector<16x256xf32>
    %c0_6 = arith.constant 0 : index
    %c0_7 = arith.constant 0 : index
    %10 = vector.load %arg4[%c0_6, %c0_7] : memref<32x16xbf16, #tpu.memory_space<vmem>>, vector<32x16xbf16>
    %11 = arith.truncf %9 : vector<16x256xf32> to vector<16x256xbf16>
    %cst_8 = arith.constant dense<0.000000e+00> : vector<32x256xf32>
    %12 = tpu.matmul %10, %11, %cst_8 {dimension_numbers = #tpu.dot_dimension_numbers<[1], [0], [0], [1], [0, 0, 1, 1], [], []>} : vector<32x16xbf16>, vector<16x256xbf16>, vector<32x256xf32> -> vector<32x256xf32>
    %c0_9 = arith.constant 0 : index
    %c0_10 = arith.constant 0 : index
    %c0_11 = arith.constant 0 : index
    %13 = vector.load %arg5[%c0_9, %c0_10, %c0_11] : memref<1x32x256xf32, #tpu.memory_space<vmem>>, vector<1x32x256xf32>
    %14 = vector.shape_cast %13 : vector<1x32x256xf32> to vector<32x256xf32>
    %15 = vector.shape_cast %12 : vector<32x256xf32> to vector<1x32x256xf32>
    tpu.vector_store %arg5[%c0_9, %c0_10, %c0_11], %15 {strides = array<i32>} : memref<1x32x256xf32, #tpu.memory_space<vmem>>, vector<1x32x256xf32>,
    return
  }
  func.func @transform_0(%arg0: i32) -> (i32, i32, i32) {
    %c0_i32 = arith.constant 0 : i32
    %c0_i32_0 = arith.constant 0 : i32
    %c0_i32_1 = arith.constant 0 : i32
    return %arg0, %c0_i32, %c0_i32_0 : i32, i32, i32
  }
  func.func @transform_1(%arg0: i32) -> (i32, i32) {
    %c0_i32 = arith.constant 0 : i32
    %c0_i32_0 = arith.constant 0 : i32
    %c0_i32_1 = arith.constant 0 : i32
    return %c0_i32, %c0_i32_0 : i32, i32
  }
  func.func @transform_2(%arg0: i32) -> (i32, i32) {
    %c0_i32 = arith.constant 0 : i32
    %c0_i32_0 = arith.constant 0 : i32
    %c0_i32_1 = arith.constant 0 : i32
    return %c0_i32, %c0_i32_0 : i32, i32
  }
  func.func @transform_3(%arg0: i32) -> (i32, i32) {
    %c0_i32 = arith.constant 0 : i32
    %c0_i32_0 = arith.constant 0 : i32
    %c0_i32_1 = arith.constant 0 : i32
    return %c0_i32, %c0_i32_0 : i32, i32
  }
  func.func @transform_4(%arg0: i32) -> (i32, i32, i32) {
    %c0_i32 = arith.constant 0 : i32
    %c0_i32_0 = arith.constant 0 : i32
    %c0_i32_1 = arith.constant 0 : i32
    return %arg0, %c0_i32, %c0_i32_0 : i32, i32, i32
  }
}

module attributes {stable_mosaic.version = 11 : i64} {
  func.func @_fused_scale_process_kernel(%arg0: i32, %arg1: memref<1x16x256xf32, #tpu.memory_space<vmem>>, %arg2: memref<256x128xf32, #tpu.memory_space<vmem>>, %arg3: memref<16x1xf32, #tpu.memory_space<vmem>>, %arg4: memref<16x1xf32, #tpu.memory_space<vmem>>, %arg5: memref<32x16xbf16, #tpu.memory_space<vmem>>, %arg6: memref<128x256xf32, #tpu.memory_space<vmem>>, %arg7: memref<1x32x256xf32, #tpu.memory_space<vmem>>, %arg8: memref<32x1xf32, #tpu.memory_space<vmem>>, %arg9: memref<32x1xf32, #tpu.memory_space<vmem>>, %arg10: memref<32x288xbf16, #tpu.memory_space<vmem>>, %arg11: memref<9x1x256xbf16, #tpu.memory_space<vmem>>, %arg12: memref<1x32x256xf32, #tpu.memory_space<vmem>>, %arg13: memref<32x290xbf16, #tpu.memory_space<vmem>>, %arg14: memref<288x256xbf16, #tpu.memory_space<vmem>>) attributes {dimension_semantics = [#tpu.dimension_semantics<parallel>], iteration_bounds = array<i64: 2>, scalar_prefetch = 0 : i64, scratch_operands = 2 : i64, tpu.core_type = #tpu.core_type<tc>, window_params = [{transform_indices = @transform_0, window_bounds = array<i64: 1, 16, 256>}, {pipeline_mode = #tpu.pipeline_mode<synchronous>, transform_indices = @transform_1, window_bounds = array<i64: 256, 128>}, {pipeline_mode = #tpu.pipeline_mode<synchronous>, transform_indices = @transform_2, window_bounds = array<i64: 16, 1>}, {pipeline_mode = #tpu.pipeline_mode<synchronous>, transform_indices = @transform_3, window_bounds = array<i64: 16, 1>}, {pipeline_mode = #tpu.pipeline_mode<synchronous>, transform_indices = @transform_4, window_bounds = array<i64: 32, 16>}, {pipeline_mode = #tpu.pipeline_mode<synchronous>, transform_indices = @transform_5, window_bounds = array<i64: 128, 256>}, {transform_indices = @transform_6, window_bounds = array<i64: 1, 32, 256>}, {pipeline_mode = #tpu.pipeline_mode<synchronous>, transform_indices = @transform_7, window_bounds = array<i64: 32, 1>}, {pipeline_mode = #tpu.pipeline_mode<synchronous>, transform_indices = @transform_8, window_bounds = array<i64: 32, 1>}, {pipeline_mode = #tpu.pipeline_mode<synchronous>, transform_indices = @transform_9, window_bounds = array<i64: 32, 288>}, {pipeline_mode = #tpu.pipeline_mode<synchronous>, transform_indices = @transform_10, window_bounds = array<i64: 9, 1, 256>}, {transform_indices = @transform_11, window_bounds = array<i64: 1, 32, 256>}]} {
    %c0 = arith.constant 0 : index
    %c0_0 = arith.constant 0 : index
    %c0_1 = arith.constant 0 : index
    %0 = vector.load %arg1[%c0, %c0_0, %c0_1] : memref<1x16x256xf32, #tpu.memory_space<vmem>>, vector<1x16x256xf32>
    %1 = vector.shape_cast %0 : vector<1x16x256xf32> to vector<16x256xf32>
    %c0_2 = arith.constant 0 : index
    %c0_3 = arith.constant 0 : index
    %2 = vector.load %arg2[%c0_2, %c0_3] : memref<256x128xf32, #tpu.memory_space<vmem>>, vector<256x128xf32>
    %cst = arith.constant dense<0.000000e+00> : vector<16x128xf32>
    %3 = tpu.matmul %1, %2, %cst {dimension_numbers = #tpu.dot_dimension_numbers<[1], [0], [0], [1], [0, 0, 1, 1], [], []>} : vector<16x256xf32>, vector<256x128xf32>, vector<16x128xf32> -> vector<16x128xf32>
    %c0_4 = arith.constant 0 : index
    %c0_5 = arith.constant 0 : index
    %4 = vector.load %arg3[%c0_4, %c0_5] : memref<16x1xf32, #tpu.memory_space<vmem>>, vector<16x1xf32>
    %5 = vector.broadcast %4 : vector<16x1xf32> to vector<16x128xf32>
    %6 = arith.mulf %3, %5 : vector<16x128xf32>
    %c0_6 = arith.constant 0 : index
    %c0_7 = arith.constant 0 : index
    %7 = vector.load %arg4[%c0_6, %c0_7] : memref<16x1xf32, #tpu.memory_space<vmem>>, vector<16x1xf32>
    %8 = vector.broadcast %7 : vector<16x1xf32> to vector<16x128xf32>
    %9 = arith.addf %6, %8 : vector<16x128xf32>
    %cst_8 = arith.constant 0.000000e+00 : f32
    %10 = vector.broadcast %cst_8 : f32 to vector<16x128xf32>
    %11 = arith.maximumf %9, %10 : vector<16x128xf32>
    %c0_9 = arith.constant 0 : index
    %c0_10 = arith.constant 0 : index
    %12 = vector.load %arg5[%c0_9, %c0_10] : memref<32x16xbf16, #tpu.memory_space<vmem>>, vector<32x16xbf16>
    %13 = arith.truncf %11 : vector<16x128xf32> to vector<16x128xbf16>
    %cst_11 = arith.constant dense<0.000000e+00> : vector<32x128xf32>
    %14 = tpu.matmul %12, %13, %cst_11 {dimension_numbers = #tpu.dot_dimension_numbers<[1], [0], [0], [1], [0, 0, 1, 1], [], []>} : vector<32x16xbf16>, vector<16x128xbf16>, vector<32x128xf32> -> vector<32x128xf32>
    %c0_12 = arith.constant 0 : index
    %c0_13 = arith.constant 0 : index
    %15 = vector.load %arg6[%c0_12, %c0_13] : memref<128x256xf32, #tpu.memory_space<vmem>>, vector<128x256xf32>
    %cst_14 = arith.constant dense<0.000000e+00> : vector<32x256xf32>
    %16 = tpu.matmul %14, %15, %cst_14 {dimension_numbers = #tpu.dot_dimension_numbers<[1], [0], [0], [1], [0, 0, 1, 1], [], []>} : vector<32x128xf32>, vector<128x256xf32>, vector<32x256xf32> -> vector<32x256xf32>
    %c0_15 = arith.constant 0 : index
    %c0_16 = arith.constant 0 : index
    %c0_17 = arith.constant 0 : index
    %17 = vector.load %arg7[%c0_15, %c0_16, %c0_17] : memref<1x32x256xf32, #tpu.memory_space<vmem>>, vector<1x32x256xf32>
    %18 = vector.shape_cast %17 : vector<1x32x256xf32> to vector<32x256xf32>
    %19 = arith.addf %16, %18 : vector<32x256xf32>
    %c0_18 = arith.constant 0 : index
    %c0_19 = arith.constant 0 : index
    %20 = vector.load %arg8[%c0_18, %c0_19] : memref<32x1xf32, #tpu.memory_space<vmem>>, vector<32x1xf32>
    %21 = vector.broadcast %20 : vector<32x1xf32> to vector<32x256xf32>
    %22 = arith.mulf %19, %21 : vector<32x256xf32>
    %c0_20 = arith.constant 0 : index
    %c0_21 = arith.constant 0 : index
    %23 = vector.load %arg9[%c0_20, %c0_21] : memref<32x1xf32, #tpu.memory_space<vmem>>, vector<32x1xf32>
    %24 = vector.broadcast %23 : vector<32x1xf32> to vector<32x256xf32>
    %25 = arith.addf %22, %24 : vector<32x256xf32>
    %cst_22 = arith.constant 0.000000e+00 : f32
    %26 = vector.broadcast %cst_22 : f32 to vector<32x256xf32>
    %27 = arith.maximumf %25, %26 : vector<32x256xf32>
    %cst_23 = arith.constant 0.000000e+00 : bf16
    %28 = vector.broadcast %cst_23 : bf16 to vector<32x17xbf16>
    %c0_24 = arith.constant 0 : index
    %c0_25 = arith.constant 0 : index
    %29 = vector.load %arg13[%c0_24, %c0_25] : memref<32x290xbf16, #tpu.memory_space<vmem>>, vector<32x17xbf16>
    tpu.vector_store %arg13[%c0_24, %c0_25], %28 {strides = array<i32>} : memref<32x290xbf16, #tpu.memory_space<vmem>>, vector<32x17xbf16>,
    %cst_26 = arith.constant 0.000000e+00 : bf16
    %30 = vector.broadcast %cst_26 : bf16 to vector<32x17xbf16>
    %c0_27 = arith.constant 0 : index
    %c273 = arith.constant 273 : index
    %31 = vector.load %arg13[%c0_27, %c273] : memref<32x290xbf16, #tpu.memory_space<vmem>>, vector<32x17xbf16>
    tpu.vector_store %arg13[%c0_27, %c273], %30 {strides = array<i32>} : memref<32x290xbf16, #tpu.memory_space<vmem>>, vector<32x17xbf16>,
    %32 = arith.truncf %27 : vector<32x256xf32> to vector<32x256xbf16>
    %c0_28 = arith.constant 0 : index
    %c17 = arith.constant 17 : index
    %33 = vector.load %arg13[%c0_28, %c17] : memref<32x290xbf16, #tpu.memory_space<vmem>>, vector<32x256xbf16>
    tpu.vector_store %arg13[%c0_28, %c17], %32 {strides = array<i32>} : memref<32x290xbf16, #tpu.memory_space<vmem>>, vector<32x256xbf16>,
    %c0_29 = arith.constant 0 : index
    %c0_30 = arith.constant 0 : index
    %34 = vector.load %arg13[%c0_29, %c0_30] : memref<32x290xbf16, #tpu.memory_space<vmem>>, vector<32x256xbf16>
    %c0_31 = arith.constant 0 : index
    %c0_32 = arith.constant 0 : index
    %c0_33 = arith.constant 0 : index
    %35 = vector.load %arg11[%c0_31, %c0_32, %c0_33] : memref<9x1x256xbf16, #tpu.memory_space<vmem>>, vector<1x1x256xbf16>
    %36 = vector.shape_cast %35 : vector<1x1x256xbf16> to vector<1x256xbf16>
    %37 = vector.broadcast %36 : vector<1x256xbf16> to vector<32x256xbf16>
    %38 = arith.mulf %34, %37 : vector<32x256xbf16>
    %c0_34 = arith.constant 0 : index
    %c0_35 = arith.constant 0 : index
    %39 = vector.load %arg14[%c0_34, %c0_35] : memref<288x256xbf16, #tpu.memory_space<vmem>>, vector<32x256xbf16>
    tpu.vector_store %arg14[%c0_34, %c0_35], %38 {strides = array<i32>} : memref<288x256xbf16, #tpu.memory_space<vmem>>, vector<32x256xbf16>,
    %c0_36 = arith.constant 0 : index
    %c1 = arith.constant 1 : index
    %40 = vector.load %arg13[%c0_36, %c1] : memref<32x290xbf16, #tpu.memory_space<vmem>>, vector<32x256xbf16>
    %c1_37 = arith.constant 1 : index
    %c0_38 = arith.constant 0 : index
    %c0_39 = arith.constant 0 : index
    %41 = vector.load %arg11[%c1_37, %c0_38, %c0_39] : memref<9x1x256xbf16, #tpu.memory_space<vmem>>, vector<1x1x256xbf16>
    %42 = vector.shape_cast %41 : vector<1x1x256xbf16> to vector<1x256xbf16>
    %43 = vector.broadcast %42 : vector<1x256xbf16> to vector<32x256xbf16>
    %44 = arith.mulf %40, %43 : vector<32x256xbf16>
    %c32 = arith.constant 32 : index
    %c0_40 = arith.constant 0 : index
    %45 = vector.load %arg14[%c32, %c0_40] : memref<288x256xbf16, #tpu.memory_space<vmem>>, vector<32x256xbf16>
    tpu.vector_store %arg14[%c32, %c0_40], %44 {strides = array<i32>} : memref<288x256xbf16, #tpu.memory_space<vmem>>, vector<32x256xbf16>,
    %c0_41 = arith.constant 0 : index
    %c2 = arith.constant 2 : index
    %46 = vector.load %arg13[%c0_41, %c2] : memref<32x290xbf16, #tpu.memory_space<vmem>>, vector<32x256xbf16>
    %c2_42 = arith.constant 2 : index
    %c0_43 = arith.constant 0 : index
    %c0_44 = arith.constant 0 : index
    %47 = vector.load %arg11[%c2_42, %c0_43, %c0_44] : memref<9x1x256xbf16, #tpu.memory_space<vmem>>, vector<1x1x256xbf16>
    %48 = vector.shape_cast %47 : vector<1x1x256xbf16> to vector<1x256xbf16>
    %49 = vector.broadcast %48 : vector<1x256xbf16> to vector<32x256xbf16>
    %50 = arith.mulf %46, %49 : vector<32x256xbf16>
    %c64 = arith.constant 64 : index
    %c0_45 = arith.constant 0 : index
    %51 = vector.load %arg14[%c64, %c0_45] : memref<288x256xbf16, #tpu.memory_space<vmem>>, vector<32x256xbf16>
    tpu.vector_store %arg14[%c64, %c0_45], %50 {strides = array<i32>} : memref<288x256xbf16, #tpu.memory_space<vmem>>, vector<32x256xbf16>,
    %c0_46 = arith.constant 0 : index
    %c16 = arith.constant 16 : index
    %52 = vector.load %arg13[%c0_46, %c16] : memref<32x290xbf16, #tpu.memory_space<vmem>>, vector<32x256xbf16>
    %c3 = arith.constant 3 : index
    %c0_47 = arith.constant 0 : index
    %c0_48 = arith.constant 0 : index
    %53 = vector.load %arg11[%c3, %c0_47, %c0_48] : memref<9x1x256xbf16, #tpu.memory_space<vmem>>, vector<1x1x256xbf16>
    %54 = vector.shape_cast %53 : vector<1x1x256xbf16> to vector<1x256xbf16>
    %55 = vector.broadcast %54 : vector<1x256xbf16> to vector<32x256xbf16>
    %56 = arith.mulf %52, %55 : vector<32x256xbf16>
    %c96 = arith.constant 96 : index
    %c0_49 = arith.constant 0 : index
    %57 = vector.load %arg14[%c96, %c0_49] : memref<288x256xbf16, #tpu.memory_space<vmem>>, vector<32x256xbf16>
    tpu.vector_store %arg14[%c96, %c0_49], %56 {strides = array<i32>} : memref<288x256xbf16, #tpu.memory_space<vmem>>, vector<32x256xbf16>,
    %c0_50 = arith.constant 0 : index
    %c17_51 = arith.constant 17 : index
    %58 = vector.load %arg13[%c0_50, %c17_51] : memref<32x290xbf16, #tpu.memory_space<vmem>>, vector<32x256xbf16>
    %c4 = arith.constant 4 : index
    %c0_52 = arith.constant 0 : index
    %c0_53 = arith.constant 0 : index
    %59 = vector.load %arg11[%c4, %c0_52, %c0_53] : memref<9x1x256xbf16, #tpu.memory_space<vmem>>, vector<1x1x256xbf16>
    %60 = vector.shape_cast %59 : vector<1x1x256xbf16> to vector<1x256xbf16>
    %61 = vector.broadcast %60 : vector<1x256xbf16> to vector<32x256xbf16>
    %62 = arith.mulf %58, %61 : vector<32x256xbf16>
    %c128 = arith.constant 128 : index
    %c0_54 = arith.constant 0 : index
    %63 = vector.load %arg14[%c128, %c0_54] : memref<288x256xbf16, #tpu.memory_space<vmem>>, vector<32x256xbf16>
    tpu.vector_store %arg14[%c128, %c0_54], %62 {strides = array<i32>} : memref<288x256xbf16, #tpu.memory_space<vmem>>, vector<32x256xbf16>,
    %c0_55 = arith.constant 0 : index
    %c18 = arith.constant 18 : index
    %64 = vector.load %arg13[%c0_55, %c18] : memref<32x290xbf16, #tpu.memory_space<vmem>>, vector<32x256xbf16>
    %c5 = arith.constant 5 : index
    %c0_56 = arith.constant 0 : index
    %c0_57 = arith.constant 0 : index
    %65 = vector.load %arg11[%c5, %c0_56, %c0_57] : memref<9x1x256xbf16, #tpu.memory_space<vmem>>, vector<1x1x256xbf16>
    %66 = vector.shape_cast %65 : vector<1x1x256xbf16> to vector<1x256xbf16>
    %67 = vector.broadcast %66 : vector<1x256xbf16> to vector<32x256xbf16>
    %68 = arith.mulf %64, %67 : vector<32x256xbf16>
    %c160 = arith.constant 160 : index
    %c0_58 = arith.constant 0 : index
    %69 = vector.load %arg14[%c160, %c0_58] : memref<288x256xbf16, #tpu.memory_space<vmem>>, vector<32x256xbf16>
    tpu.vector_store %arg14[%c160, %c0_58], %68 {strides = array<i32>} : memref<288x256xbf16, #tpu.memory_space<vmem>>, vector<32x256xbf16>,
    %c0_59 = arith.constant 0 : index
    %c32_60 = arith.constant 32 : index
    %70 = vector.load %arg13[%c0_59, %c32_60] : memref<32x290xbf16, #tpu.memory_space<vmem>>, vector<32x256xbf16>
    %c6 = arith.constant 6 : index
    %c0_61 = arith.constant 0 : index
    %c0_62 = arith.constant 0 : index
    %71 = vector.load %arg11[%c6, %c0_61, %c0_62] : memref<9x1x256xbf16, #tpu.memory_space<vmem>>, vector<1x1x256xbf16>
    %72 = vector.shape_cast %71 : vector<1x1x256xbf16> to vector<1x256xbf16>
    %73 = vector.broadcast %72 : vector<1x256xbf16> to vector<32x256xbf16>
    %74 = arith.mulf %70, %73 : vector<32x256xbf16>
    %c192 = arith.constant 192 : index
    %c0_63 = arith.constant 0 : index
    %75 = vector.load %arg14[%c192, %c0_63] : memref<288x256xbf16, #tpu.memory_space<vmem>>, vector<32x256xbf16>
    tpu.vector_store %arg14[%c192, %c0_63], %74 {strides = array<i32>} : memref<288x256xbf16, #tpu.memory_space<vmem>>, vector<32x256xbf16>,
    %c0_64 = arith.constant 0 : index
    %c33 = arith.constant 33 : index
    %76 = vector.load %arg13[%c0_64, %c33] : memref<32x290xbf16, #tpu.memory_space<vmem>>, vector<32x256xbf16>
    %c7 = arith.constant 7 : index
    %c0_65 = arith.constant 0 : index
    %c0_66 = arith.constant 0 : index
    %77 = vector.load %arg11[%c7, %c0_65, %c0_66] : memref<9x1x256xbf16, #tpu.memory_space<vmem>>, vector<1x1x256xbf16>
    %78 = vector.shape_cast %77 : vector<1x1x256xbf16> to vector<1x256xbf16>
    %79 = vector.broadcast %78 : vector<1x256xbf16> to vector<32x256xbf16>
    %80 = arith.mulf %76, %79 : vector<32x256xbf16>
    %c224 = arith.constant 224 : index
    %c0_67 = arith.constant 0 : index
    %81 = vector.load %arg14[%c224, %c0_67] : memref<288x256xbf16, #tpu.memory_space<vmem>>, vector<32x256xbf16>
    tpu.vector_store %arg14[%c224, %c0_67], %80 {strides = array<i32>} : memref<288x256xbf16, #tpu.memory_space<vmem>>, vector<32x256xbf16>,
    %c0_68 = arith.constant 0 : index
    %c34 = arith.constant 34 : index
    %82 = vector.load %arg13[%c0_68, %c34] : memref<32x290xbf16, #tpu.memory_space<vmem>>, vector<32x256xbf16>
    %c8 = arith.constant 8 : index
    %c0_69 = arith.constant 0 : index
    %c0_70 = arith.constant 0 : index
    %83 = vector.load %arg11[%c8, %c0_69, %c0_70] : memref<9x1x256xbf16, #tpu.memory_space<vmem>>, vector<1x1x256xbf16>
    %84 = vector.shape_cast %83 : vector<1x1x256xbf16> to vector<1x256xbf16>
    %85 = vector.broadcast %84 : vector<1x256xbf16> to vector<32x256xbf16>
    %86 = arith.mulf %82, %85 : vector<32x256xbf16>
    %c256 = arith.constant 256 : index
    %c0_71 = arith.constant 0 : index
    %87 = vector.load %arg14[%c256, %c0_71] : memref<288x256xbf16, #tpu.memory_space<vmem>>, vector<32x256xbf16>
    tpu.vector_store %arg14[%c256, %c0_71], %86 {strides = array<i32>} : memref<288x256xbf16, #tpu.memory_space<vmem>>, vector<32x256xbf16>,
    %c0_72 = arith.constant 0 : index
    %c0_73 = arith.constant 0 : index
    %88 = vector.load %arg10[%c0_72, %c0_73] : memref<32x288xbf16, #tpu.memory_space<vmem>>, vector<32x288xbf16>
    %c0_74 = arith.constant 0 : index
    %c0_75 = arith.constant 0 : index
    %89 = vector.load %arg14[%c0_74, %c0_75] : memref<288x256xbf16, #tpu.memory_space<vmem>>, vector<288x256xbf16>
    %cst_76 = arith.constant dense<0.000000e+00> : vector<32x256xf32>
    %90 = tpu.matmul %88, %89, %cst_76 {dimension_numbers = #tpu.dot_dimension_numbers<[1], [0], [0], [1], [0, 0, 1, 1], [], []>} : vector<32x288xbf16>, vector<288x256xbf16>, vector<32x256xf32> -> vector<32x256xf32>
    %c0_77 = arith.constant 0 : index
    %c0_78 = arith.constant 0 : index
    %c0_79 = arith.constant 0 : index
    %91 = vector.load %arg12[%c0_77, %c0_78, %c0_79] : memref<1x32x256xf32, #tpu.memory_space<vmem>>, vector<1x32x256xf32>
    %92 = vector.shape_cast %91 : vector<1x32x256xf32> to vector<32x256xf32>
    %93 = vector.shape_cast %90 : vector<32x256xf32> to vector<1x32x256xf32>
    tpu.vector_store %arg12[%c0_77, %c0_78, %c0_79], %93 {strides = array<i32>} : memref<1x32x256xf32, #tpu.memory_space<vmem>>, vector<1x32x256xf32>,
    return
  }
  func.func @transform_0(%arg0: i32) -> (i32, i32, i32) {
    %c0_i32 = arith.constant 0 : i32
    %c0_i32_0 = arith.constant 0 : i32
    %c0_i32_1 = arith.constant 0 : i32
    return %arg0, %c0_i32, %c0_i32_0 : i32, i32, i32
  }
  func.func @transform_1(%arg0: i32) -> (i32, i32) {
    %c0_i32 = arith.constant 0 : i32
    %c0_i32_0 = arith.constant 0 : i32
    %c0_i32_1 = arith.constant 0 : i32
    return %c0_i32, %c0_i32_0 : i32, i32
  }
  func.func @transform_2(%arg0: i32) -> (i32, i32) {
    %c0_i32 = arith.constant 0 : i32
    %c0_i32_0 = arith.constant 0 : i32
    %c0_i32_1 = arith.constant 0 : i32
    return %c0_i32, %c0_i32_0 : i32, i32
  }
  func.func @transform_3(%arg0: i32) -> (i32, i32) {
    %c0_i32 = arith.constant 0 : i32
    %c0_i32_0 = arith.constant 0 : i32
    %c0_i32_1 = arith.constant 0 : i32
    return %c0_i32, %c0_i32_0 : i32, i32
  }
  func.func @transform_4(%arg0: i32) -> (i32, i32) {
    %c0_i32 = arith.constant 0 : i32
    %c0_i32_0 = arith.constant 0 : i32
    %c0_i32_1 = arith.constant 0 : i32
    return %c0_i32, %c0_i32_0 : i32, i32
  }
  func.func @transform_5(%arg0: i32) -> (i32, i32) {
    %c0_i32 = arith.constant 0 : i32
    %c0_i32_0 = arith.constant 0 : i32
    %c0_i32_1 = arith.constant 0 : i32
    return %c0_i32, %c0_i32_0 : i32, i32
  }
  func.func @transform_6(%arg0: i32) -> (i32, i32, i32) {
    %c0_i32 = arith.constant 0 : i32
    %c0_i32_0 = arith.constant 0 : i32
    %c0_i32_1 = arith.constant 0 : i32
    return %arg0, %c0_i32, %c0_i32_0 : i32, i32, i32
  }
  func.func @transform_7(%arg0: i32) -> (i32, i32) {
    %c0_i32 = arith.constant 0 : i32
    %c0_i32_0 = arith.constant 0 : i32
    %c0_i32_1 = arith.constant 0 : i32
    return %c0_i32, %c0_i32_0 : i32, i32
  }
  func.func @transform_8(%arg0: i32) -> (i32, i32) {
    %c0_i32 = arith.constant 0 : i32
    %c0_i32_0 = arith.constant 0 : i32
    %c0_i32_1 = arith.constant 0 : i32
    return %c0_i32, %c0_i32_0 : i32, i32
  }
  func.func @transform_9(%arg0: i32) -> (i32, i32) {
    %c0_i32 = arith.constant 0 : i32
    %c0_i32_0 = arith.constant 0 : i32
    %c0_i32_1 = arith.constant 0 : i32
    return %c0_i32, %c0_i32_0 : i32, i32
  }
  func.func @transform_10(%arg0: i32) -> (i32, i32, i32) {
    %c0_i32 = arith.constant 0 : i32
    %c0_i32_0 = arith.constant 0 : i32
    %c0_i32_1 = arith.constant 0 : i32
    %c0_i32_2 = arith.constant 0 : i32
    return %c0_i32, %c0_i32_0, %c0_i32_1 : i32, i32, i32
  }
  func.func @transform_11(%arg0: i32) -> (i32, i32, i32) {
    %c0_i32 = arith.constant 0 : i32
    %c0_i32_0 = arith.constant 0 : i32
    %c0_i32_1 = arith.constant 0 : i32
    return %arg0, %c0_i32, %c0_i32_0 : i32, i32, i32
  }
}

</mosaic_0001>

<llo_original>
// kernel: dappm_forward.6
$region0: #{dappm_forward.6}
  #allocation0 [shape = 'u32[]', space=smem, size = 0x4, offset = 0x4, fixed_abs, tag = 'smem constant byte address 0x4 - core index']
  #allocation1 [shape = 'u32[144,128]{1,0:T(1,128)}', space=vmem, size = 0x12000, scoped, tag = 'internal scratch']
  %s0 = inlined_call_operand.vmem [shape: f32[2,16,256], index: 0, kind: input, shape index: {}]
  %s1 = inlined_call_operand.vmem [shape: f32[16,1], index: 1, kind: input, shape index: {}]
  %s2 = inlined_call_operand.vmem [shape: f32[16,1], index: 2, kind: input, shape index: {}]
  %s3 = inlined_call_operand.vmem [shape: bf16[32,16], index: 3, kind: input, shape index: {}]
  %s4 = inlined_call_operand.vmem [shape: f32[2,32,256], index: 4, kind: output, shape index: {}]
  %s5 = sld [smem:[#allocation0]]
  $region49: #{dappm_forward.6} parent=0
    _
  %s7 = ssub.s32 1, %s5
  %s8 = scalar_select 0, %s7, %s5
  loop: start=0, step=1, limit=4
  $region2: #{dappm_forward.6} parent=0 // loop_pre_header
    _
  $region3: #{dappm_forward.6} parent=0 // loop_header
    %s10 = sphi 0, %s14
    %p11 = scmp.ge.s32.totalorder %s10, 4
    %s20 = sphi 0, %s22
    %s23 = sphi 0, %s20
    %s24 = sphi 0, %s23
    %s40 = sphi 0, %s24
    %s44 = sphi 0, %s44
    %s46 = sphi 0, %s44
    %s47 = sphi 0, %s46
    %s61 = sphi 0, %s47
    %s65 = sphi 0, %s65
    %s67 = sphi 0, %s65
    %s68 = sphi 0, %s67
    %s82 = sphi 0, %s68
    %s86 = sphi 0, %s86
    %s88 = sphi 0, %s86
    %s89 = sphi 0, %s88
    %s103 = sphi 0, %s89
    %s109 = sphi 0, %s111
    %s112 = sphi 0, %s109
    %s113 = sphi 0, %s112
    %s129 = sphi 0, %s113
  $region4: #{dappm_forward.6} parent=0 // loop_header_branch
    %13 = sbr.rel (%p11) target = $region8
  $region5: #{dappm_forward.6} parent=0 // loop_body
    %s15 = ssub.s32 %s10, 1
    %s16 = ssub.s32 %s10, 2
    %s17 = sadd.s32 %s10, 1
    %s18 = ssub.s32 %s10, %s17
    %p19 = scmp.eq.s32.totalorder %s18, 0
    %s21 = sadd.s32 %s20, 1
    %s22 = scalar_select %p19, %s20, %s21
    %p25 = pneg %p19
    %p26 = scmp.eq.s32.totalorder %s10, 1
    %p27 = por %p25, %p26
    %p28 = scmp.ne.s32.totalorder %s20, %s23
    %p29 = scmp.eq.s32.totalorder %s10, 0
    %p30 = por %p28, %p29
    %p31 = scmp.ne.s32.totalorder %s20, %s23
    %p32 = scmp.eq.s32.totalorder %s15, 1
    %p33 = por %p31, %p32
    %p34 = scmp.ne.s32.totalorder %s23, %s24
    %p35 = scmp.eq.s32.totalorder %s15, 0
    %p36 = por %p34, %p35
    %p37 = scmp.ne.s32.totalorder %s23, %s24
    %p38 = scmp.eq.s32.totalorder %s16, 1
    %p39 = por %p37, %p38
    %p41 = scmp.ne.s32.totalorder %s24, %s40
    %p42 = scmp.eq.s32.totalorder %s16, 0
    %p43 = por %p41, %p42
    %s45 = sadd.s32 %s44, 1
    %p48 = scmp.eq.s32.totalorder %s10, 1
    %p49 = scmp.ne.s32.totalorder %s44, %s46
    %p50 = scmp.eq.s32.totalorder %s10, 0
    %p51 = por %p49, %p50
    %p52 = scmp.ne.s32.totalorder %s44, %s46
    %p53 = scmp.eq.s32.totalorder %s15, 1
    %p54 = por %p52, %p53
    %p55 = scmp.ne.s32.totalorder %s46, %s47
    %p56 = scmp.eq.s32.totalorder %s15, 0
    %p57 = por %p55, %p56
    %p58 = scmp.ne.s32.totalorder %s46, %s47
    %p59 = scmp.eq.s32.totalorder %s16, 1
    %p60 = por %p58, %p59
    %p62 = scmp.ne.s32.totalorder %s47, %s61
    %p63 = scmp.eq.s32.totalorder %s16, 0
    %p64 = por %p62, %p63
    %s66 = sadd.s32 %s65, 1
    %p69 = scmp.eq.s32.totalorder %s10, 1
    %p70 = scmp.ne.s32.totalorder %s65, %s67
    %p71 = scmp.eq.s32.totalorder %s10, 0
    %p72 = por %p70, %p71
    %p73 = scmp.ne.s32.totalorder %s65, %s67
    %p74 = scmp.eq.s32.totalorder %s15, 1
    %p75 = por %p73, %p74
    %p76 = scmp.ne.s32.totalorder %s67, %s68
    %p77 = scmp.eq.s32.totalorder %s15, 0
    %p78 = por %p76, %p77
    %p79 = scmp.ne.s32.totalorder %s67, %s68
    %p80 = scmp.eq.s32.totalorder %s16, 1
    %p81 = por %p79, %p80
    %p83 = scmp.ne.s32.totalorder %s68, %s82
    %p84 = scmp.eq.s32.totalorder %s16, 0
    %p85 = por %p83, %p84
    %s87 = sadd.s32 %s86, 1
    %p90 = scmp.eq.s32.totalorder %s10, 1
    %p91 = scmp.ne.s32.totalorder %s86, %s88
    %p92 = scmp.eq.s32.totalorder %s10, 0
    %p93 = por %p91, %p92
    %p94 = scmp.ne.s32.totalorder %s86, %s88
    %p95 = scmp.eq.s32.totalorder %s15, 1
    %p96 = por %p94, %p95
    %p97 = scmp.ne.s32.totalorder %s88, %s89
    %p98 = scmp.eq.s32.totalorder %s15, 0
    %p99 = por %p97, %p98
    %p100 = scmp.ne.s32.totalorder %s88, %s89
    %p101 = scmp.eq.s32.totalorder %s16, 1
    %p102 = por %p100, %p101
    %p104 = scmp.ne.s32.totalorder %s89, %s103
    %p105 = scmp.eq.s32.totalorder %s16, 0
    %p106 = por %p104, %p105
    %s107 = ssub.s32 %s10, %s17
    %p108 = scmp.eq.s32.totalorder %s107, 0
    %s110 = sadd.s32 %s109, 1
    %s111 = scalar_select %p108, %s109, %s110
    %p114 = pneg %p108
    %p115 = scmp.eq.s32.totalorder %s10, 1
    %p116 = por %p114, %p115
    %p117 = scmp.ne.s32.totalorder %s109, %s112
    %p118 = scmp.eq.s32.totalorder %s10, 0
    %p119 = por %p117, %p118
    %p120 = scmp.ne.s32.totalorder %s109, %s112
    %p121 = scmp.eq.s32.totalorder %s15, 1
    %p122 = por %p120, %p121
    %p123 = scmp.ne.s32.totalorder %s112, %s113
    %p124 = scmp.eq.s32.totalorder %s15, 0
    %p125 = por %p123, %p124
    %p126 = scmp.ne.s32.totalorder %s112, %s113
    %p127 = scmp.eq.s32.totalorder %s16, 1
    %p128 = por %p126, %p127
    %p130 = scmp.ne.s32.totalorder %s113, %s129
    %p131 = scmp.eq.s32.totalorder %s16, 0
    %p132 = por %p130, %p131
    %p133 = scmp.le.s32.totalorder 1, %s10
    %p134 = scmp.lt.s32.totalorder %s10, 3
    %p135 = pnand %p133, %p134
    %p136 = pneg %p135
    // Predicated region
    $region9: #{dappm_forward.6} parent=5 // pred_check
      _
    $region10: #{dappm_forward.6} parent=5 // pred_check_branch
      %138 = sbr.rel (%p135) target = $region12
    $region11: #{dappm_forward.6} parent=5 // pred_region
      %s139 = ssub.s32 %s10, 1
      // Predicated region
      $region13: #{dappm_forward.6} parent=11 // pred_check
        %p140 = pneg %p57
      $region14: #{dappm_forward.6} parent=11 // pred_check_branch
        %142 = sbr.rel (%p140) target = $region16
      $region15: #{dappm_forward.6} parent=11 // pred_region
        _
      $region16: #{dappm_forward.6} parent=11 // pred_fallthru
        _
      // Predicated region
      $region17: #{dappm_forward.6} parent=11 // pred_check
        %p143 = pneg %p78
      $region18: #{dappm_forward.6} parent=11 // pred_check_branch
        %145 = sbr.rel (%p143) target = $region20
      $region19: #{dappm_forward.6} parent=11 // pred_region
        _
      $region20: #{dappm_forward.6} parent=11 // pred_fallthru
        _
      // Predicated region
      $region21: #{dappm_forward.6} parent=11 // pred_check
        %p146 = pneg %p99
      $region22: #{dappm_forward.6} parent=11 // pred_check_branch
        %148 = sbr.rel (%p146) target = $region24
      $region23: #{dappm_forward.6} parent=11 // pred_region
        _
      $region24: #{dappm_forward.6} parent=11 // pred_fallthru
        _
    $region12: #{dappm_forward.6} parent=5 // pred_fallthru
      _
    %p149 = scmp.lt.s32.totalorder %s10, 2
    // Predicated region
    $region25: #{dappm_forward.6} parent=5 // pred_check
      %p150 = pneg %p149
    $region26: #{dappm_forward.6} parent=5 // pred_check_branch
      %152 = sbr.rel (%p150) target = $region28
    $region27: #{dappm_forward.6} parent=5 // pred_region
      // Predicated region
      $region29: #{dappm_forward.6} parent=27 // pred_check
        %p153 = pneg %p30
      $region30: #{dappm_forward.6} parent=27 // pred_check_branch
        %155 = sbr.rel (%p153) target = $region32
      $region31: #{dappm_forward.6} parent=27 // pred_region
        %p156 = scmp.lt.s32.totalorder %s10, 1
        %s157 = scalar_select %p156, %s10, 1
        %s158 = smul.addr %s157, 4
        %s159 = smul.addr %s158, 8
        %s160 = scalar_lea.vmem %s0, %s159
      $region32: #{dappm_forward.6} parent=27 // pred_fallthru
        _
    $region28: #{dappm_forward.6} parent=5 // pred_fallthru
      _
    %p161 = scmp.le.s32.totalorder 1, %s10
    %p162 = scmp.lt.s32.totalorder %s10, 3
    %p163 = pnand %p161, %p162
    %p164 = pneg %p163
    // Predicated region
    $region33: #{dappm_forward.6} parent=5 // pred_check
      _
    $region34: #{dappm_forward.6} parent=5 // pred_check_branch
      %166 = sbr.rel (%p163) target = $region36
    $region35: #{dappm_forward.6} parent=5 // pred_region
      %s167 = ssub.s32 %s10, 1
      %p168 = scmp.lt.s32.totalorder %s15, 1
      %s169 = scalar_select %p168, %s15, 1
      %s170 = smul.addr %s169, 4
      %s171 = smul.addr %s170, 8
      %s172 = scalar_lea.vmem %s0, %s171
      %p173 = pneg %p36
      %p174 = pneg %p33
      %p175 = pneg %p57
      %p176 = pneg %p54
      %p177 = pneg %p78
      %p178 = pneg %p75
      %p179 = pneg %p99
      %p180 = pneg %p96
      %p181 = pneg %p125
      %p182 = pneg %p122
      %p183 = scmp.lt.s32.totalorder %s15, 1
      %s184 = scalar_select %p183, %s15, 1
      %s185 = smul.addr %s184, 8
      %s186 = smul.addr %s185, 8
      %s187 = scalar_lea.vmem %s4, %s186
      %p188 = scmp.lt.s32.totalorder %s15, 1
      %s189 = scalar_select %p188, %s15, 1
      %s190 = smul.addr %s189, 4
      %s191 = smul.addr %s190, 8
      %s192 = scalar_lea.vmem %s0, %s191
      %p193 = scmp.lt.s32.totalorder %s15, 1
      %s194 = scalar_select %p193, %s15, 1
      %s195 = smul.addr %s194, 8
      %s196 = smul.addr %s195, 8
      %s197 = scalar_lea.vmem %s4, %s196
      %v199 = vld [vmem:[%s192] sm:$0xff]
      %v200 = vld [vmem:[%s192 + $0x8] sm:$0xff]
      %v201 = vld [vmem:[%s192 + $0x10] sm:$0xff]
      %v202 = vld [vmem:[%s192 + $0x18] sm:$0xff]
      %v203 = vld [vmem:[%s1] sm:$0xff]
      %v204 = vld [vmem:[%s1 + $0x8] sm:$0xff]
      %206 = vset.pattern.permute.xlu0 0
      %207 = vperm.xlu0 %206, %v203
      %v208 = vpop.permute.xlu0 %207
      %211 = vset.pattern.permute.xlu0 0
      %212 = vperm.xlu0 %211, %v204
      %v213 = vpop.permute.xlu0 %212
      %v215 = vmul.f32 %v199, %v208
      %v216 = vmul.f32 %v200, %v208
      %v217 = vmul.f32 %v201, %v213
      %v218 = vmul.f32 %v202, %v213
      %v219 = vld [vmem:[%s2] sm:$0xff]
      %v220 = vld [vmem:[%s2 + $0x8] sm:$0xff]
      %222 = vset.pattern.permute.xlu0 0
      %223 = vperm.xlu0 %222, %v219
      %v224 = vpop.permute.xlu0 %223
      %227 = vset.pattern.permute.xlu0 0
      %228 = vperm.xlu0 %227, %v220
      %v229 = vpop.permute.xlu0 %228
      %v231 = vadd.f32 %v215, %v224
      %v232 = vadd.f32 %v216, %v224
      %v233 = vadd.f32 %v217, %v229
      %v234 = vadd.f32 %v218, %v229
      %v235 = vmax.f32 %v231, 0.0
      %v236 = vmax.f32 %v232, 0.0
      %v237 = vmax.f32 %v233, 0.0
      %v238 = vmax.f32 %v234, 0.0
      %v239 = vld [vmem:[%s3] sm:$0xf]
      %v240 = vld [vmem:[%s3 + $0x4] sm:$0xf]
      %v241 = vld [vmem:[%s3 + $0x8] sm:$0xf]
      %v242 = vld [vmem:[%s3 + $0xc] sm:$0xf]
      %v243 = vpack.c.bf16 %v237, %v235
      %v244 = vpack.c.bf16 %v238, %v236
      %v249 = vunpack.c.l.b16 %v239
      %v250 = vunpack.c.l.b16 %v240
      %v251 = vunpack.c.l.b16 %v241
      %v252 = vunpack.c.l.b16 %v242
      %v253 = vpack.c.b16 %v250, %v249
      %v254 = vpack.c.b16 %v252, %v251
      %vm255 = vcmask 130048
      %v257 = vsel %vm255, %v253, 0
      %v260 = vsel %vm255, %v254, 0
      %262 = vmatprep.subr.bf16.mxu0 %v244
      %263 = vmatpush1.bf16.msra.mxu0 %v243
      %264 = vmatprep.subr.bf16.mxu0 0
      %265 = vmatpush1.bf16.msra.mxu0 0
      %266 = vmatprep.subr.bf16.mxu0 0
      %267 = vmatpush1.bf16.msra.mxu0 0
      %268 = vmatprep.subr.bf16.mxu0 0
      %269 = vmatpush1.bf16.msra.mxu0 0
      %270 = vmatprep.subr.bf16.mxu0 0
      %271 = vmatpush1.bf16.msra.mxu0 0
      %272 = vmatprep.subr.bf16.mxu0 0
      %273 = vmatpush1.bf16.msra.mxu0 0
      %274 = vmatprep.subr.bf16.mxu0 0
      %275 = vmatpush1.bf16.msra.mxu0 0
      %276 = vmatprep.subr.bf16.mxu0 0
      %277 = vmatpush1.bf16.msra.mxu0 0
      %278 = vmatprep.subr.bf16.mxu0 0
      %279 = vmatpush1.bf16.msra.mxu0 0
      %280 = vmatprep.subr.bf16.mxu0 0
      %281 = vmatpush1.bf16.msra.mxu0 0
      %282 = vmatprep.subr.bf16.mxu0 0
      %283 = vmatpush1.bf16.msra.mxu0 0
      %284 = vmatprep.subr.bf16.mxu0 0
      %285 = vmatpush1.bf16.msra.mxu0 0
      %286 = vmatprep.subr.bf16.mxu0 0
      %287 = vmatpush1.bf16.msra.mxu0 0
      %288 = vmatprep.subr.bf16.mxu0 0
      %289 = vmatpush1.bf16.msra.mxu0 0
      %290 = vmatprep.subr.bf16.mxu0 0
      %291 = vmatpush1.bf16.msra.mxu0 0
      %292 = vmatprep.subr.bf16.mxu0 0
      %293 = vmatpush1.bf16.msra.mxu0 0
      %294 = vmatprep.mubr.bf16.mxu0 0
      %295 = vmatmul.mubr.bf16.gmra.mrb[0].mxu0 %v257
      %v296 = vpop.f32.mrb[0].mxu0
      %v297 = vadd.f32 0.0, %v296
      %v298 = vpop.f32.mrb[0].mxu0
      %v299 = vadd.f32 0.0, %v298
      %v300 = vpop.f32.mrb[0].mxu0
      %v301 = vadd.f32 0.0, %v300
      %v302 = vpop.f32.mrb[0].mxu0
      %v303 = vadd.f32 0.0, %v302
      %304 = vmatprep.mubr.bf16.mxu0 0
      %305 = vmatmul.mubr.bf16.gmra.mrb[0].mxu0 %v260
      %v306 = vpop.f32.mrb[0].mxu0
      %v307 = vadd.f32 0.0, %v306
      %v308 = vpop.f32.mrb[0].mxu0
      %v309 = vadd.f32 0.0, %v308
      %v310 = vpop.f32.mrb[0].mxu0
      %v311 = vadd.f32 0.0, %v310
      %v312 = vpop.f32.mrb[0].mxu0
      %v313 = vadd.f32 0.0, %v312
      %314 = vdwg.mxu0
      %315 = vst [vmem:[%s197] sm:$0xff] %v297
      %316 = vst [vmem:[%s197 + $0x8] sm:$0xff] %v299
      %317 = vst [vmem:[%s197 + $0x10] sm:$0xff] %v301
      %318 = vst [vmem:[%s197 + $0x18] sm:$0xff] %v303
      %319 = vst [vmem:[%s197 + $0x20] sm:$0xff] %v307
      %320 = vst [vmem:[%s197 + $0x28] sm:$0xff] %v309
      %321 = vst [vmem:[%s197 + $0x30] sm:$0xff] %v311
      %322 = vst [vmem:[%s197 + $0x38] sm:$0xff] %v313
      %p323 = scmp.lt.s32.totalorder %s15, 1
      %s324 = scalar_select %p323, %s15, 1
      %s325 = smul.addr %s324, 8
      %s326 = smul.addr %s325, 8
      %s327 = scalar_lea.vmem %s4, %s326
      // Predicated region
      $region37: #{dappm_forward.6} parent=35 // pred_check
        %p328 = pneg %p122
      $region38: #{dappm_forward.6} parent=35 // pred_check_branch
        %330 = sbr.rel (%p328) target = $region40
      $region39: #{dappm_forward.6} parent=35 // pred_region
        _
      $region40: #{dappm_forward.6} parent=35 // pred_fallthru
        _
    $region36: #{dappm_forward.6} parent=5 // pred_fallthru
      _
    %p331 = scmp.le.s32.totalorder 2, %s10
    // Predicated region
    $region41: #{dappm_forward.6} parent=5 // pred_check
      %p332 = pneg %p331
    $region42: #{dappm_forward.6} parent=5 // pred_check_branch
      %334 = sbr.rel (%p332) target = $region44
    $region43: #{dappm_forward.6} parent=5 // pred_region
      %s335 = ssub.s32 %s10, 2
      // Predicated region
      $region45: #{dappm_forward.6} parent=43 // pred_check
        %p336 = pneg %p128
      $region46: #{dappm_forward.6} parent=43 // pred_check_branch
        %338 = sbr.rel (%p336) target = $region48
      $region47: #{dappm_forward.6} parent=43 // pred_region
        %p339 = scmp.lt.s32.totalorder %s16, 1
        %s340 = scalar_select %p339, %s16, 1
        %s341 = smul.addr %s340, 8
        %s342 = smul.addr %s341, 8
        %s343 = scalar_lea.vmem %s4, %s342
      $region48: #{dappm_forward.6} parent=43 // pred_fallthru
        _
    $region44: #{dappm_forward.6} parent=5 // pred_fallthru
      _
  $region6: #{dappm_forward.6} parent=0 // loop_footer
    %s14 = sadd.s32 1, %s10
  $region7: #{dappm_forward.6} parent=0 // loop_footer_branch
    %9 = sbr.rel target = $region3
  $region8: #{dappm_forward.6} parent=0 // loop_exit
    _

// kernel: dappm_forward.11
$region0: #{dappm_forward.11}
  #allocation0 [shape = 'u32[]', space=smem, size = 0x4, offset = 0x4, fixed_abs, tag = 'smem constant byte address 0x4 - core index']
  #allocation1 [shape = 'u32[144,128]{1,0:T(1,128)}', space=vmem, size = 0x12000, scoped, tag = 'internal scratch']
  #allocation2 [shape = 'bf16[176,256]{1,0:T(16,128)(2,1)}', space=vmem, size = 0x16000, scoped, tag = 'scratch operand']
  %s0 = inlined_call_operand.vmem [shape: f32[2,32,256], index: 0, kind: input, shape index: {}]
  %s1 = inlined_call_operand.vmem [shape: f32[2,32,256], index: 1, kind: input, shape index: {}]
  %s2 = inlined_call_operand.vmem [shape: f32[2,32,256], index: 2, kind: input, shape index: {}]
  %s3 = inlined_call_operand.vmem [shape: f32[2,32,256], index: 3, kind: input, shape index: {}]
  %s4 = inlined_call_operand.vmem [shape: f32[2,32,256], index: 4, kind: input, shape index: {}]
  %s5 = inlined_call_operand.vmem [shape: f32[2,16,256], index: 5, kind: input, shape index: {}]
  %s6 = inlined_call_operand.vmem [shape: f32[160,1], index: 6, kind: input, shape index: {}]
  %s7 = inlined_call_operand.vmem [shape: f32[160,1], index: 7, kind: input, shape index: {}]
  %s8 = inlined_call_operand.vmem [shape: f32[16,1], index: 8, kind: input, shape index: {}]
  %s9 = inlined_call_operand.vmem [shape: f32[16,1], index: 9, kind: input, shape index: {}]
  %s10 = inlined_call_operand.vmem [shape: bf16[32,176], index: 10, kind: input, shape index: {}]
  %s11 = inlined_call_operand.vmem [shape: f32[2,32,256], index: 11, kind: output, shape index: {}]
  %s12 = sld [smem:[#allocation0]]
  $region77: #{dappm_forward.11} parent=0
    _
  %s14 = ssub.s32 1, %s12
  %s15 = scalar_select 0, %s14, %s12
  loop: start=0, step=1, limit=4
  $region2: #{dappm_forward.11} parent=0 // loop_pre_header
    _
  $region3: #{dappm_forward.11} parent=0 // loop_header
    %s17 = sphi 0, %s21
    %p18 = scmp.ge.s32.totalorder %s17, 4
    %s27 = sphi 0, %s29
    %s30 = sphi 0, %s27
    %s31 = sphi 0, %s30
    %s47 = sphi 0, %s31
    %s53 = sphi 0, %s55
    %s56 = sphi 0, %s53
    %s57 = sphi 0, %s56
    %s73 = sphi 0, %s57
    %s79 = sphi 0, %s81
    %s82 = sphi 0, %s79
    %s83 = sphi 0, %s82
    %s99 = sphi 0, %s83
    %s105 = sphi 0, %s107
    %s108 = sphi 0, %s105
    %s109 = sphi 0, %s108
    %s125 = sphi 0, %s109
    %s131 = sphi 0, %s133
    %s134 = sphi 0, %s131
    %s135 = sphi 0, %s134
    %s151 = sphi 0, %s135
    %s157 = sphi 0, %s159
    %s160 = sphi 0, %s157
    %s161 = sphi 0, %s160
    %s177 = sphi 0, %s161
    %s181 = sphi 0, %s181
    %s183 = sphi 0, %s181
    %s184 = sphi 0, %s183
    %s198 = sphi 0, %s184
    %s202 = sphi 0, %s202
    %s204 = sphi 0, %s202
    %s205 = sphi 0, %s204
    %s219 = sphi 0, %s205
    %s223 = sphi 0, %s223
    %s225 = sphi 0, %s223
    %s226 = sphi 0, %s225
    %s240 = sphi 0, %s226
    %s244 = sphi 0, %s244
    %s246 = sphi 0, %s244
    %s247 = sphi 0, %s246
    %s261 = sphi 0, %s247
    %s265 = sphi 0, %s265
    %s267 = sphi 0, %s265
    %s268 = sphi 0, %s267
    %s282 = sphi 0, %s268
    %s288 = sphi 0, %s290
    %s291 = sphi 0, %s288
    %s292 = sphi 0, %s291
    %s308 = sphi 0, %s292
  $region4: #{dappm_forward.11} parent=0 // loop_header_branch
    %20 = sbr.rel (%p18) target = $region8
  $region5: #{dappm_forward.11} parent=0 // loop_body
    %s22 = ssub.s32 %s17, 1
    %s23 = ssub.s32 %s17, 2
    %s24 = sadd.s32 %s17, 1
    %s25 = ssub.s32 %s17, %s24
    %p26 = scmp.eq.s32.totalorder %s25, 0
    %s28 = sadd.s32 %s27, 1
    %s29 = scalar_select %p26, %s27, %s28
    %p32 = pneg %p26
    %p33 = scmp.eq.s32.totalorder %s17, 1
    %p34 = por %p32, %p33
    %p35 = scmp.ne.s32.totalorder %s27, %s30
    %p36 = scmp.eq.s32.totalorder %s17, 0
    %p37 = por %p35, %p36
    %p38 = scmp.ne.s32.totalorder %s27, %s30
    %p39 = scmp.eq.s32.totalorder %s22, 1
    %p40 = por %p38, %p39
    %p41 = scmp.ne.s32.totalorder %s30, %s31
    %p42 = scmp.eq.s32.totalorder %s22, 0
    %p43 = por %p41, %p42
    %p44 = scmp.ne.s32.totalorder %s30, %s31
    %p45 = scmp.eq.s32.totalorder %s23, 1
    %p46 = por %p44, %p45
    %p48 = scmp.ne.s32.totalorder %s31, %s47
    %p49 = scmp.eq.s32.totalorder %s23, 0
    %p50 = por %p48, %p49
    %s51 = ssub.s32 %s17, %s24
    %p52 = scmp.eq.s32.totalorder %s51, 0
    %s54 = sadd.s32 %s53, 1
    %s55 = scalar_select %p52, %s53, %s54
    %p58 = pneg %p52
    %p59 = scmp.eq.s32.totalorder %s17, 1
    %p60 = por %p58, %p59
    %p61 = scmp.ne.s32.totalorder %s53, %s56
    %p62 = scmp.eq.s32.totalorder %s17, 0
    %p63 = por %p61, %p62
    %p64 = scmp.ne.s32.totalorder %s53, %s56
    %p65 = scmp.eq.s32.totalorder %s22, 1
    %p66 = por %p64, %p65
    %p67 = scmp.ne.s32.totalorder %s56, %s57
    %p68 = scmp.eq.s32.totalorder %s22, 0
    %p69 = por %p67, %p68
    %p70 = scmp.ne.s32.totalorder %s56, %s57
    %p71 = scmp.eq.s32.totalorder %s23, 1
    %p72 = por %p70, %p71
    %p74 = scmp.ne.s32.totalorder %s57, %s73
    %p75 = scmp.eq.s32.totalorder %s23, 0
    %p76 = por %p74, %p75
    %s77 = ssub.s32 %s17, %s24
    %p78 = scmp.eq.s32.totalorder %s77, 0
    %s80 = sadd.s32 %s79, 1
    %s81 = scalar_select %p78, %s79, %s80
    %p84 = pneg %p78
    %p85 = scmp.eq.s32.totalorder %s17, 1
    %p86 = por %p84, %p85
    %p87 = scmp.ne.s32.totalorder %s79, %s82
    %p88 = scmp.eq.s32.totalorder %s17, 0
    %p89 = por %p87, %p88
    %p90 = scmp.ne.s32.totalorder %s79, %s82
    %p91 = scmp.eq.s32.totalorder %s22, 1
    %p92 = por %p90, %p91
    %p93 = scmp.ne.s32.totalorder %s82, %s83
    %p94 = scmp.eq.s32.totalorder %s22, 0
    %p95 = por %p93, %p94
    %p96 = scmp.ne.s32.totalorder %s82, %s83
    %p97 = scmp.eq.s32.totalorder %s23, 1
    %p98 = por %p96, %p97
    %p100 = scmp.ne.s32.totalorder %s83, %s99
    %p101 = scmp.eq.s32.totalorder %s23, 0
    %p102 = por %p100, %p101
    %s103 = ssub.s32 %s17, %s24
    %p104 = scmp.eq.s32.totalorder %s103, 0
    %s106 = sadd.s32 %s105, 1
    %s107 = scalar_select %p104, %s105, %s106
    %p110 = pneg %p104
    %p111 = scmp.eq.s32.totalorder %s17, 1
    %p112 = por %p110, %p111
    %p113 = scmp.ne.s32.totalorder %s105, %s108
    %p114 = scmp.eq.s32.totalorder %s17, 0
    %p115 = por %p113, %p114
    %p116 = scmp.ne.s32.totalorder %s105, %s108
    %p117 = scmp.eq.s32.totalorder %s22, 1
    %p118 = por %p116, %p117
    %p119 = scmp.ne.s32.totalorder %s108, %s109
    %p120 = scmp.eq.s32.totalorder %s22, 0
    %p121 = por %p119, %p120
    %p122 = scmp.ne.s32.totalorder %s108, %s109
    %p123 = scmp.eq.s32.totalorder %s23, 1
    %p124 = por %p122, %p123
    %p126 = scmp.ne.s32.totalorder %s109, %s125
    %p127 = scmp.eq.s32.totalorder %s23, 0
    %p128 = por %p126, %p127
    %s129 = ssub.s32 %s17, %s24
    %p130 = scmp.eq.s32.totalorder %s129, 0
    %s132 = sadd.s32 %s131, 1
    %s133 = scalar_select %p130, %s131, %s132
    %p136 = pneg %p130
    %p137 = scmp.eq.s32.totalorder %s17, 1
    %p138 = por %p136, %p137
    %p139 = scmp.ne.s32.totalorder %s131, %s134
    %p140 = scmp.eq.s32.totalorder %s17, 0
    %p141 = por %p139, %p140
    %p142 = scmp.ne.s32.totalorder %s131, %s134
    %p143 = scmp.eq.s32.totalorder %s22, 1
    %p144 = por %p142, %p143
    %p145 = scmp.ne.s32.totalorder %s134, %s135
    %p146 = scmp.eq.s32.totalorder %s22, 0
    %p147 = por %p145, %p146
    %p148 = scmp.ne.s32.totalorder %s134, %s135
    %p149 = scmp.eq.s32.totalorder %s23, 1
    %p150 = por %p148, %p149
    %p152 = scmp.ne.s32.totalorder %s135, %s151
    %p153 = scmp.eq.s32.totalorder %s23, 0
    %p154 = por %p152, %p153
    %s155 = ssub.s32 %s17, %s24
    %p156 = scmp.eq.s32.totalorder %s155, 0
    %s158 = sadd.s32 %s157, 1
    %s159 = scalar_select %p156, %s157, %s158
    %p162 = pneg %p156
    %p163 = scmp.eq.s32.totalorder %s17, 1
    %p164 = por %p162, %p163
    %p165 = scmp.ne.s32.totalorder %s157, %s160
    %p166 = scmp.eq.s32.totalorder %s17, 0
    %p167 = por %p165, %p166
    %p168 = scmp.ne.s32.totalorder %s157, %s160
    %p169 = scmp.eq.s32.totalorder %s22, 1
    %p170 = por %p168, %p169
    %p171 = scmp.ne.s32.totalorder %s160, %s161
    %p172 = scmp.eq.s32.totalorder %s22, 0
    %p173 = por %p171, %p172
    %p174 = scmp.ne.s32.totalorder %s160, %s161
    %p175 = scmp.eq.s32.totalorder %s23, 1
    %p176 = por %p174, %p175
    %p178 = scmp.ne.s32.totalorder %s161, %s177
    %p179 = scmp.eq.s32.totalorder %s23, 0
    %p180 = por %p178, %p179
    %s182 = sadd.s32 %s181, 1
    %p185 = scmp.eq.s32.totalorder %s17, 1
    %p186 = scmp.ne.s32.totalorder %s181, %s183
    %p187 = scmp.eq.s32.totalorder %s17, 0
    %p188 = por %p186, %p187
    %p189 = scmp.ne.s32.totalorder %s181, %s183
    %p190 = scmp.eq.s32.totalorder %s22, 1
    %p191 = por %p189, %p190
    %p192 = scmp.ne.s32.totalorder %s183, %s184
    %p193 = scmp.eq.s32.totalorder %s22, 0
    %p194 = por %p192, %p193
    %p195 = scmp.ne.s32.totalorder %s183, %s184
    %p196 = scmp.eq.s32.totalorder %s23, 1
    %p197 = por %p195, %p196
    %p199 = scmp.ne.s32.totalorder %s184, %s198
    %p200 = scmp.eq.s32.totalorder %s23, 0
    %p201 = por %p199, %p200
    %s203 = sadd.s32 %s202, 1
    %p206 = scmp.eq.s32.totalorder %s17, 1
    %p207 = scmp.ne.s32.totalorder %s202, %s204
    %p208 = scmp.eq.s32.totalorder %s17, 0
    %p209 = por %p207, %p208
    %p210 = scmp.ne.s32.totalorder %s202, %s204
    %p211 = scmp.eq.s32.totalorder %s22, 1
    %p212 = por %p210, %p211
    %p213 = scmp.ne.s32.totalorder %s204, %s205
    %p214 = scmp.eq.s32.totalorder %s22, 0
    %p215 = por %p213, %p214
    %p216 = scmp.ne.s32.totalorder %s204, %s205
    %p217 = scmp.eq.s32.totalorder %s23, 1
    %p218 = por %p216, %p217
    %p220 = scmp.ne.s32.totalorder %s205, %s219
    %p221 = scmp.eq.s32.totalorder %s23, 0
    %p222 = por %p220, %p221
    %s224 = sadd.s32 %s223, 1
    %p227 = scmp.eq.s32.totalorder %s17, 1
    %p228 = scmp.ne.s32.totalorder %s223, %s225
    %p229 = scmp.eq.s32.totalorder %s17, 0
    %p230 = por %p228, %p229
    %p231 = scmp.ne.s32.totalorder %s223, %s225
    %p232 = scmp.eq.s32.totalorder %s22, 1
    %p233 = por %p231, %p232
    %p234 = scmp.ne.s32.totalorder %s225, %s226
    %p235 = scmp.eq.s32.totalorder %s22, 0
    %p236 = por %p234, %p235
    %p237 = scmp.ne.s32.totalorder %s225, %s226
    %p238 = scmp.eq.s32.totalorder %s23, 1
    %p239 = por %p237, %p238
    %p241 = scmp.ne.s32.totalorder %s226, %s240
    %p242 = scmp.eq.s32.totalorder %s23, 0
    %p243 = por %p241, %p242
    %s245 = sadd.s32 %s244, 1
    %p248 = scmp.eq.s32.totalorder %s17, 1
    %p249 = scmp.ne.s32.totalorder %s244, %s246
    %p250 = scmp.eq.s32.totalorder %s17, 0
    %p251 = por %p249, %p250
    %p252 = scmp.ne.s32.totalorder %s244, %s246
    %p253 = scmp.eq.s32.totalorder %s22, 1
    %p254 = por %p252, %p253
    %p255 = scmp.ne.s32.totalorder %s246, %s247
    %p256 = scmp.eq.s32.totalorder %s22, 0
    %p257 = por %p255, %p256
    %p258 = scmp.ne.s32.totalorder %s246, %s247
    %p259 = scmp.eq.s32.totalorder %s23, 1
    %p260 = por %p258, %p259
    %p262 = scmp.ne.s32.totalorder %s247, %s261
    %p263 = scmp.eq.s32.totalorder %s23, 0
    %p264 = por %p262, %p263
    %s266 = sadd.s32 %s265, 1
    %p269 = scmp.eq.s32.totalorder %s17, 1
    %p270 = scmp.ne.s32.totalorder %s265, %s267
    %p271 = scmp.eq.s32.totalorder %s17, 0
    %p272 = por %p270, %p271
    %p273 = scmp.ne.s32.totalorder %s265, %s267
    %p274 = scmp.eq.s32.totalorder %s22, 1
    %p275 = por %p273, %p274
    %p276 = scmp.ne.s32.totalorder %s267, %s268
    %p277 = scmp.eq.s32.totalorder %s22, 0
    %p278 = por %p276, %p277
    %p279 = scmp.ne.s32.totalorder %s267, %s268
    %p280 = scmp.eq.s32.totalorder %s23, 1
    %p281 = por %p279, %p280
    %p283 = scmp.ne.s32.totalorder %s268, %s282
    %p284 = scmp.eq.s32.totalorder %s23, 0
    %p285 = por %p283, %p284
    %s286 = ssub.s32 %s17, %s24
    %p287 = scmp.eq.s32.totalorder %s286, 0
    %s289 = sadd.s32 %s288, 1
    %s290 = scalar_select %p287, %s288, %s289
    %p293 = pneg %p287
    %p294 = scmp.eq.s32.totalorder %s17, 1
    %p295 = por %p293, %p294
    %p296 = scmp.ne.s32.totalorder %s288, %s291
    %p297 = scmp.eq.s32.totalorder %s17, 0
    %p298 = por %p296, %p297
    %p299 = scmp.ne.s32.totalorder %s288, %s291
    %p300 = scmp.eq.s32.totalorder %s22, 1
    %p301 = por %p299, %p300
    %p302 = scmp.ne.s32.totalorder %s291, %s292
    %p303 = scmp.eq.s32.totalorder %s22, 0
    %p304 = por %p302, %p303
    %p305 = scmp.ne.s32.totalorder %s291, %s292
    %p306 = scmp.eq.s32.totalorder %s23, 1
    %p307 = por %p305, %p306
    %p309 = scmp.ne.s32.totalorder %s292, %s308
    %p310 = scmp.eq.s32.totalorder %s23, 0
    %p311 = por %p309, %p310
    %p312 = scmp.le.s32.totalorder 1, %s17
    %p313 = scmp.lt.s32.totalorder %s17, 3
    %p314 = pnand %p312, %p313
    %p315 = pneg %p314
    // Predicated region
    $region9: #{dappm_forward.11} parent=5 // pred_check
      _
    $region10: #{dappm_forward.11} parent=5 // pred_check_branch
      %317 = sbr.rel (%p314) target = $region12
    $region11: #{dappm_forward.11} parent=5 // pred_region
      %s318 = ssub.s32 %s17, 1
      // Predicated region
      $region13: #{dappm_forward.11} parent=11 // pred_check
        %p319 = pneg %p194
      $region14: #{dappm_forward.11} parent=11 // pred_check_branch
        %321 = sbr.rel (%p319) target = $region16
      $region15: #{dappm_forward.11} parent=11 // pred_region
        _
      $region16: #{dappm_forward.11} parent=11 // pred_fallthru
        _
      // Predicated region
      $region17: #{dappm_forward.11} parent=11 // pred_check
        %p322 = pneg %p215
      $region18: #{dappm_forward.11} parent=11 // pred_check_branch
        %324 = sbr.rel (%p322) target = $region20
      $region19: #{dappm_forward.11} parent=11 // pred_region
        _
      $region20: #{dappm_forward.11} parent=11 // pred_fallthru
        _
      // Predicated region
      $region21: #{dappm_forward.11} parent=11 // pred_check
        %p325 = pneg %p236
      $region22: #{dappm_forward.11} parent=11 // pred_check_branch
        %327 = sbr.rel (%p325) target = $region24
      $region23: #{dappm_forward.11} parent=11 // pred_region
        _
      $region24: #{dappm_forward.11} parent=11 // pred_fallthru
        _
      // Predicated region
      $region25: #{dappm_forward.11} parent=11 // pred_check
        %p328 = pneg %p257
      $region26: #{dappm_forward.11} parent=11 // pred_check_branch
        %330 = sbr.rel (%p328) target = $region28
      $region27: #{dappm_forward.11} parent=11 // pred_region
        _
      $region28: #{dappm_forward.11} parent=11 // pred_fallthru
        _
      // Predicated region
      $region29: #{dappm_forward.11} parent=11 // pred_check
        %p331 = pneg %p278
      $region30: #{dappm_forward.11} parent=11 // pred_check_branch
        %333 = sbr.rel (%p331) target = $region32
      $region31: #{dappm_forward.11} parent=11 // pred_region
        _
      $region32: #{dappm_forward.11} parent=11 // pred_fallthru
        _
    $region12: #{dappm_forward.11} parent=5 // pred_fallthru
      _
    %p334 = scmp.lt.s32.totalorder %s17, 2
    // Predicated region
    $region33: #{dappm_forward.11} parent=5 // pred_check
      %p335 = pneg %p334
    $region34: #{dappm_forward.11} parent=5 // pred_check_branch
      %337 = sbr.rel (%p335) target = $region36
    $region35: #{dappm_forward.11} parent=5 // pred_region
      // Predicated region
      $region37: #{dappm_forward.11} parent=35 // pred_check
        %p338 = pneg %p37
      $region38: #{dappm_forward.11} parent=35 // pred_check_branch
        %340 = sbr.rel (%p338) target = $region40
      $region39: #{dappm_forward.11} parent=35 // pred_region
        %p341 = scmp.lt.s32.totalorder %s17, 1
        %s342 = scalar_select %p341, %s17, 1
        %s343 = smul.addr %s342, 8
        %s344 = smul.addr %s343, 8
        %s345 = scalar_lea.vmem %s0, %s344
      $region40: #{dappm_forward.11} parent=35 // pred_fallthru
        _
      // Predicated region
      $region41: #{dappm_forward.11} parent=35 // pred_check
        %p346 = pneg %p63
      $region42: #{dappm_forward.11} parent=35 // pred_check_branch
        %348 = sbr.rel (%p346) target = $region44
      $region43: #{dappm_forward.11} parent=35 // pred_region
        %p349 = scmp.lt.s32.totalorder %s17, 1
        %s350 = scalar_select %p349, %s17, 1
        %s351 = smul.addr %s350, 8
        %s352 = smul.addr %s351, 8
        %s353 = scalar_lea.vmem %s1, %s352
      $region44: #{dappm_forward.11} parent=35 // pred_fallthru
        _
      // Predicated region
      $region45: #{dappm_forward.11} parent=35 // pred_check
        %p354 = pneg %p89
      $region46: #{dappm_forward.11} parent=35 // pred_check_branch
        %356 = sbr.rel (%p354) target = $region48
      $region47: #{dappm_forward.11} parent=35 // pred_region
        %p357 = scmp.lt.s32.totalorder %s17, 1
        %s358 = scalar_select %p357, %s17, 1
        %s359 = smul.addr %s358, 8
        %s360 = smul.addr %s359, 8
        %s361 = scalar_lea.vmem %s2, %s360
      $region48: #{dappm_forward.11} parent=35 // pred_fallthru
        _
      // Predicated region
      $region49: #{dappm_forward.11} parent=35 // pred_check
        %p362 = pneg %p115
      $region50: #{dappm_forward.11} parent=35 // pred_check_branch
        %364 = sbr.rel (%p362) target = $region52
      $region51: #{dappm_forward.11} parent=35 // pred_region
        %p365 = scmp.lt.s32.totalorder %s17, 1
        %s366 = scalar_select %p365, %s17, 1
        %s367 = smul.addr %s366, 8
        %s368 = smul.addr %s367, 8
        %s369 = scalar_lea.vmem %s3, %s368
      $region52: #{dappm_forward.11} parent=35 // pred_fallthru
        _
      // Predicated region
      $region53: #{dappm_forward.11} parent=35 // pred_check
        %p370 = pneg %p141
      $region54: #{dappm_forward.11} parent=35 // pred_check_branch
        %372 = sbr.rel (%p370) target = $region56
      $region55: #{dappm_forward.11} parent=35 // pred_region
        %p373 = scmp.lt.s32.totalorder %s17, 1
        %s374 = scalar_select %p373, %s17, 1
        %s375 = smul.addr %s374, 8
        %s376 = smul.addr %s375, 8
        %s377 = scalar_lea.vmem %s4, %s376
      $region56: #{dappm_forward.11} parent=35 // pred_fallthru
        _
      // Predicated region
      $region57: #{dappm_forward.11} parent=35 // pred_check
        %p378 = pneg %p167
      $region58: #{dappm_forward.11} parent=35 // pred_check_branch
        %380 = sbr.rel (%p378) target = $region60
      $region59: #{dappm_forward.11} parent=35 // pred_region
        %p381 = scmp.lt.s32.totalorder %s17, 1
        %s382 = scalar_select %p381, %s17, 1
        %s383 = smul.addr %s382, 4
        %s384 = smul.addr %s383, 8
        %s385 = scalar_lea.vmem %s5, %s384
      $region60: #{dappm_forward.11} parent=35 // pred_fallthru
        _
    $region36: #{dappm_forward.11} parent=5 // pred_fallthru
      _
    %p386 = scmp.le.s32.totalorder 1, %s17
    %p387 = scmp.lt.s32.totalorder %s17, 3
    %p388 = pnand %p386, %p387
    %p389 = pneg %p388
    // Predicated region
    $region61: #{dappm_forward.11} parent=5 // pred_check
      _
    $region62: #{dappm_forward.11} parent=5 // pred_check_branch
      %391 = sbr.rel (%p388) target = $region64
    $region63: #{dappm_forward.11} parent=5 // pred_region
      %s392 = ssub.s32 %s17, 1
      %p393 = scmp.lt.s32.totalorder %s22, 1
      %s394 = scalar_select %p393, %s22, 1
      %s395 = smul.addr %s394, 8
      %s396 = smul.addr %s395, 8
      %s397 = scalar_lea.vmem %s0, %s396
      %p398 = pneg %p43
      %p399 = pneg %p40
      %p400 = scmp.lt.s32.totalorder %s22, 1
      %s401 = scalar_select %p400, %s22, 1
      %s402 = smul.addr %s401, 8
      %s403 = smul.addr %s402, 8
      %s404 = scalar_lea.vmem %s1, %s403
      %p405 = pneg %p69
      %p406 = pneg %p66
      %p407 = scmp.lt.s32.totalorder %s22, 1
      %s408 = scalar_select %p407, %s22, 1
      %s409 = smul.addr %s408, 8
      %s410 = smul.addr %s409, 8
      %s411 = scalar_lea.vmem %s2, %s410
      %p412 = pneg %p95
      %p413 = pneg %p92
      %p414 = scmp.lt.s32.totalorder %s22, 1
      %s415 = scalar_select %p414, %s22, 1
      %s416 = smul.addr %s415, 8
      %s417 = smul.addr %s416, 8
      %s418 = scalar_lea.vmem %s3, %s417
      %p419 = pneg %p121
      %p420 = pneg %p118
      %p421 = scmp.lt.s32.totalorder %s22, 1
      %s422 = scalar_select %p421, %s22, 1
      %s423 = smul.addr %s422, 8
      %s424 = smul.addr %s423, 8
      %s425 = scalar_lea.vmem %s4, %s424
      %p426 = pneg %p147
      %p427 = pneg %p144
      %p428 = scmp.lt.s32.totalorder %s22, 1
      %s429 = scalar_select %p428, %s22, 1
      %s430 = smul.addr %s429, 4
      %s431 = smul.addr %s430, 8
      %s432 = scalar_lea.vmem %s5, %s431
      %p433 = pneg %p173
      %p434 = pneg %p170
      %p435 = pneg %p194
      %p436 = pneg %p191
      %p437 = pneg %p215
      %p438 = pneg %p212
      %p439 = pneg %p236
      %p440 = pneg %p233
      %p441 = pneg %p257
      %p442 = pneg %p254
      %p443 = pneg %p278
      %p444 = pneg %p275
      %p445 = pneg %p304
      %p446 = pneg %p301
      %p447 = scmp.lt.s32.totalorder %s22, 1
      %s448 = scalar_select %p447, %s22, 1
      %s449 = smul.addr %s448, 8
      %s450 = smul.addr %s449, 8
      %s451 = scalar_lea.vmem %s11, %s450
      %p452 = scmp.lt.s32.totalorder %s22, 1
      %s453 = scalar_select %p452, %s22, 1
      %s454 = smul.addr %s453, 8
      %s455 = smul.addr %s454, 8
      %s456 = scalar_lea.vmem %s0, %s455
      %p457 = scmp.lt.s32.totalorder %s22, 1
      %s458 = scalar_select %p457, %s22, 1
      %s459 = smul.addr %s458, 8
      %s460 = smul.addr %s459, 8
      %s461 = scalar_lea.vmem %s1, %s460
      %p462 = scmp.lt.s32.totalorder %s22, 1
      %s463 = scalar_select %p462, %s22, 1
      %s464 = smul.addr %s463, 8
      %s465 = smul.addr %s464, 8
      %s466 = scalar_lea.vmem %s2, %s465
      %p467 = scmp.lt.s32.totalorder %s22, 1
      %s468 = scalar_select %p467, %s22, 1
      %s469 = smul.addr %s468, 8
      %s470 = smul.addr %s469, 8
      %s471 = scalar_lea.vmem %s3, %s470
      %p472 = scmp.lt.s32.totalorder %s22, 1
      %s473 = scalar_select %p472, %s22, 1
      %s474 = smul.addr %s473, 8
      %s475 = smul.addr %s474, 8
      %s476 = scalar_lea.vmem %s4, %s475
      %p477 = scmp.lt.s32.totalorder %s22, 1
      %s478 = scalar_select %p477, %s22, 1
      %s479 = smul.addr %s478, 4
      %s480 = smul.addr %s479, 8
      %s481 = scalar_lea.vmem %s5, %s480
      %p482 = scmp.lt.s32.totalorder %s22, 1
      %s483 = scalar_select %p482, %s22, 1
      %s484 = smul.addr %s483, 8
      %s485 = smul.addr %s484, 8
      %s486 = scalar_lea.vmem %s11, %s485
      %v488 = vld [vmem:[%s456] sm:$0xff]
      %v489 = vld [vmem:[%s456 + $0x8] sm:$0xff]
      %v490 = vld [vmem:[%s456 + $0x10] sm:$0xff]
      %v491 = vld [vmem:[%s456 + $0x18] sm:$0xff]
      %v492 = vld [vmem:[%s456 + $0x20] sm:$0xff]
      %v493 = vld [vmem:[%s456 + $0x28] sm:$0xff]
      %v494 = vld [vmem:[%s456 + $0x30] sm:$0xff]
      %v495 = vld [vmem:[%s456 + $0x38] sm:$0xff]
      %v496 = vld [vmem:[%s6] sm:$0xff]
      %v497 = vld [vmem:[%s6 + $0x8] sm:$0xff]
      %v498 = vld [vmem:[%s6 + $0x10] sm:$0xff]
      %v499 = vld [vmem:[%s6 + $0x18] sm:$0xff]
      %501 = vset.pattern.permute.xlu0 0
      %502 = vperm.xlu0 %501, %v496
      %v503 = vpop.permute.xlu0 %502
      %506 = vset.pattern.permute.xlu0 0
      %507 = vperm.xlu0 %506, %v497
      %v508 = vpop.permute.xlu0 %507
      %511 = vset.pattern.permute.xlu0 0
      %512 = vperm.xlu0 %511, %v498
      %v513 = vpop.permute.xlu0 %512
      %516 = vset.pattern.permute.xlu0 0
      %517 = vperm.xlu0 %516, %v499
      %v518 = vpop.permute.xlu0 %517
      %v520 = vmul.f32 %v488, %v503
      %v521 = vmul.f32 %v489, %v503
      %v522 = vmul.f32 %v490, %v508
      %v523 = vmul.f32 %v491, %v508
      %v524 = vmul.f32 %v492, %v513
      %v525 = vmul.f32 %v493, %v513
      %v526 = vmul.f32 %v494, %v518
      %v527 = vmul.f32 %v495, %v518
      %v528 = vld [vmem:[%s7] sm:$0xff]
      %v529 = vld [vmem:[%s7 + $0x8] sm:$0xff]
      %v530 = vld [vmem:[%s7 + $0x10] sm:$0xff]
      %v531 = vld [vmem:[%s7 + $0x18] sm:$0xff]
      %533 = vset.pattern.permute.xlu0 0
      %534 = vperm.xlu0 %533, %v528
      %v535 = vpop.permute.xlu0 %534
      %538 = vset.pattern.permute.xlu0 0
      %539 = vperm.xlu0 %538, %v529
      %v540 = vpop.permute.xlu0 %539
      %543 = vset.pattern.permute.xlu0 0
      %544 = vperm.xlu0 %543, %v530
      %v545 = vpop.permute.xlu0 %544
      %548 = vset.pattern.permute.xlu0 0
      %549 = vperm.xlu0 %548, %v531
      %v550 = vpop.permute.xlu0 %549
      %v552 = vadd.f32 %v520, %v535
      %v553 = vadd.f32 %v521, %v535
      %v554 = vadd.f32 %v522, %v540
      %v555 = vadd.f32 %v523, %v540
      %v556 = vadd.f32 %v524, %v545
      %v557 = vadd.f32 %v525, %v545
      %v558 = vadd.f32 %v526, %v550
      %v559 = vadd.f32 %v527, %v550
      %v560 = vmax.f32 %v552, 0.0
      %v561 = vmax.f32 %v553, 0.0
      %v562 = vmax.f32 %v554, 0.0
      %v563 = vmax.f32 %v555, 0.0
      %v564 = vmax.f32 %v556, 0.0
      %v565 = vmax.f32 %v557, 0.0
      %v566 = vmax.f32 %v558, 0.0
      %v567 = vmax.f32 %v559, 0.0
      %v568 = vpack.c.bf16 %v562, %v560
      %v569 = vpack.c.bf16 %v563, %v561
      %v570 = vpack.c.bf16 %v566, %v564
      %v571 = vpack.c.bf16 %v567, %v565
      %572 = vst [vmem:[#allocation2] sm:$0xff] %v568
      %573 = vst [vmem:[#allocation2 + $0x8] sm:$0xff] %v569
      %574 = vst [vmem:[#allocation2 + $0x10] sm:$0xff] %v570
      %575 = vst [vmem:[#allocation2 + $0x18] sm:$0xff] %v571
      %v576 = vld [vmem:[%s461] sm:$0xff]
      %v577 = vld [vmem:[%s461 + $0x8] sm:$0xff]
      %v578 = vld [vmem:[%s461 + $0x10] sm:$0xff]
      %v579 = vld [vmem:[%s461 + $0x18] sm:$0xff]
      %v580 = vld [vmem:[%s461 + $0x20] sm:$0xff]
      %v581 = vld [vmem:[%s461 + $0x28] sm:$0xff]
      %v582 = vld [vmem:[%s461 + $0x30] sm:$0xff]
      %v583 = vld [vmem:[%s461 + $0x38] sm:$0xff]
      %v584 = vld [vmem:[%s6 + $0x20] sm:$0xff]
      %v585 = vld [vmem:[%s6 + $0x28] sm:$0xff]
      %v586 = vld [vmem:[%s6 + $0x30] sm:$0xff]
      %v587 = vld [vmem:[%s6 + $0x38] sm:$0xff]
      %589 = vset.pattern.permute.xlu0 0
      %590 = vperm.xlu0 %589, %v584
      %v591 = vpop.permute.xlu0 %590
      %594 = vset.pattern.permute.xlu0 0
      %595 = vperm.xlu0 %594, %v585
      %v596 = vpop.permute.xlu0 %595
      %599 = vset.pattern.permute.xlu0 0
      %600 = vperm.xlu0 %599, %v586
      %v601 = vpop.permute.xlu0 %600
      %604 = vset.pattern.permute.xlu0 0
      %605 = vperm.xlu0 %604, %v587
      %v606 = vpop.permute.xlu0 %605
      %v608 = vmul.f32 %v576, %v591
      %v609 = vmul.f32 %v577, %v591
      %v610 = vmul.f32 %v578, %v596
      %v611 = vmul.f32 %v579, %v596
      %v612 = vmul.f32 %v580, %v601
      %v613 = vmul.f32 %v581, %v601
      %v614 = vmul.f32 %v582, %v606
      %v615 = vmul.f32 %v583, %v606
      %v616 = vld [vmem:[%s7 + $0x20] sm:$0xff]
      %v617 = vld [vmem:[%s7 + $0x28] sm:$0xff]
      %v618 = vld [vmem:[%s7 + $0x30] sm:$0xff]
      %v619 = vld [vmem:[%s7 + $0x38] sm:$0xff]
      %621 = vset.pattern.permute.xlu0 0
      %622 = vperm.xlu0 %621, %v616
      %v623 = vpop.permute.xlu0 %622
      %626 = vset.pattern.permute.xlu0 0
      %627 = vperm.xlu0 %626, %v617
      %v628 = vpop.permute.xlu0 %627
      %631 = vset.pattern.permute.xlu0 0
      %632 = vperm.xlu0 %631, %v618
      %v633 = vpop.permute.xlu0 %632
      %636 = vset.pattern.permute.xlu0 0
      %637 = vperm.xlu0 %636, %v619
      %v638 = vpop.permute.xlu0 %637
      %v640 = vadd.f32 %v608, %v623
      %v641 = vadd.f32 %v609, %v623
      %v642 = vadd.f32 %v610, %v628
      %v643 = vadd.f32 %v611, %v628
      %v644 = vadd.f32 %v612, %v633
      %v645 = vadd.f32 %v613, %v633
      %v646 = vadd.f32 %v614, %v638
      %v647 = vadd.f32 %v615, %v638
      %v648 = vmax.f32 %v640, 0.0
      %v649 = vmax.f32 %v641, 0.0
      %v650 = vmax.f32 %v642, 0.0
      %v651 = vmax.f32 %v643, 0.0
      %v652 = vmax.f32 %v644, 0.0
      %v653 = vmax.f32 %v645, 0.0
      %v654 = vmax.f32 %v646, 0.0
      %v655 = vmax.f32 %v647, 0.0
      %v656 = vpack.c.bf16 %v650, %v648
      %v657 = vpack.c.bf16 %v651, %v649
      %v658 = vpack.c.bf16 %v654, %v652
      %v659 = vpack.c.bf16 %v655, %v653
      %660 = vst [vmem:[#allocation2 + $0x20] sm:$0xff] %v656
      %661 = vst [vmem:[#allocation2 + $0x28] sm:$0xff] %v657
      %662 = vst [vmem:[#allocation2 + $0x30] sm:$0xff] %v658
      %663 = vst [vmem:[#allocation2 + $0x38] sm:$0xff] %v659
      %v664 = vld [vmem:[%s466] sm:$0xff]
      %v665 = vld [vmem:[%s466 + $0x8] sm:$0xff]
      %v666 = vld [vmem:[%s466 + $0x10] sm:$0xff]
      %v667 = vld [vmem:[%s466 + $0x18] sm:$0xff]
      %v668 = vld [vmem:[%s466 + $0x20] sm:$0xff]
      %v669 = vld [vmem:[%s466 + $0x28] sm:$0xff]
      %v670 = vld [vmem:[%s466 + $0x30] sm:$0xff]
      %v671 = vld [vmem:[%s466 + $0x38] sm:$0xff]
      %v672 = vld [vmem:[%s6 + $0x40] sm:$0xff]
      %v673 = vld [vmem:[%s6 + $0x48] sm:$0xff]
      %v674 = vld [vmem:[%s6 + $0x50] sm:$0xff]
      %v675 = vld [vmem:[%s6 + $0x58] sm:$0xff]
      %677 = vset.pattern.permute.xlu0 0
      %678 = vperm.xlu0 %677, %v672
      %v679 = vpop.permute.xlu0 %678
      %682 = vset.pattern.permute.xlu0 0
      %683 = vperm.xlu0 %682, %v673
      %v684 = vpop.permute.xlu0 %683
      %687 = vset.pattern.permute.xlu0 0
      %688 = vperm.xlu0 %687, %v674
      %v689 = vpop.permute.xlu0 %688
      %692 = vset.pattern.permute.xlu0 0
      %693 = vperm.xlu0 %692, %v675
      %v694 = vpop.permute.xlu0 %693
      %v696 = vmul.f32 %v664, %v679
      %v697 = vmul.f32 %v665, %v679
      %v698 = vmul.f32 %v666, %v684
      %v699 = vmul.f32 %v667, %v684
      %v700 = vmul.f32 %v668, %v689
      %v701 = vmul.f32 %v669, %v689
      %v702 = vmul.f32 %v670, %v694
      %v703 = vmul.f32 %v671, %v694
      %v704 = vld [vmem:[%s7 + $0x40] sm:$0xff]
      %v705 = vld [vmem:[%s7 + $0x48] sm:$0xff]
      %v706 = vld [vmem:[%s7 + $0x50] sm:$0xff]
      %v707 = vld [vmem:[%s7 + $0x58] sm:$0xff]
      %709 = vset.pattern.permute.xlu0 0
      %710 = vperm.xlu0 %709, %v704
      %v711 = vpop.permute.xlu0 %710
      %714 = vset.pattern.permute.xlu0 0
      %715 = vperm.xlu0 %714, %v705
      %v716 = vpop.permute.xlu0 %715
      %719 = vset.pattern.permute.xlu0 0
      %720 = vperm.xlu0 %719, %v706
      %v721 = vpop.permute.xlu0 %720
      %724 = vset.pattern.permute.xlu0 0
      %725 = vperm.xlu0 %724, %v707
      %v726 = vpop.permute.xlu0 %725
      %v728 = vadd.f32 %v696, %v711
      %v729 = vadd.f32 %v697, %v711
      %v730 = vadd.f32 %v698, %v716
      %v731 = vadd.f32 %v699, %v716
      %v732 = vadd.f32 %v700, %v721
      %v733 = vadd.f32 %v701, %v721
      %v734 = vadd.f32 %v702, %v726
      %v735 = vadd.f32 %v703, %v726
      %v736 = vmax.f32 %v728, 0.0
      %v737 = vmax.f32 %v729, 0.0
      %v738 = vmax.f32 %v730, 0.0
      %v739 = vmax.f32 %v731, 0.0
      %v740 = vmax.f32 %v732, 0.0
      %v741 = vmax.f32 %v733, 0.0
      %v742 = vmax.f32 %v734, 0.0
      %v743 = vmax.f32 %v735, 0.0
      %v744 = vpack.c.bf16 %v738, %v736
      %v745 = vpack.c.bf16 %v739, %v737
      %v746 = vpack.c.bf16 %v742, %v740
      %v747 = vpack.c.bf16 %v743, %v741
      %748 = vst [vmem:[#allocation2 + $0x40] sm:$0xff] %v744
      %749 = vst [vmem:[#allocation2 + $0x48] sm:$0xff] %v745
      %750 = vst [vmem:[#allocation2 + $0x50] sm:$0xff] %v746
      %751 = vst [vmem:[#allocation2 + $0x58] sm:$0xff] %v747
      %v752 = vld [vmem:[%s471] sm:$0xff]
      %v753 = vld [vmem:[%s471 + $0x8] sm:$0xff]
      %v754 = vld [vmem:[%s471 + $0x10] sm:$0xff]
      %v755 = vld [vmem:[%s471 + $0x18] sm:$0xff]
      %v756 = vld [vmem:[%s471 + $0x20] sm:$0xff]
      %v757 = vld [vmem:[%s471 + $0x28] sm:$0xff]
      %v758 = vld [vmem:[%s471 + $0x30] sm:$0xff]
      %v759 = vld [vmem:[%s471 + $0x38] sm:$0xff]
      %v760 = vld [vmem:[%s6 + $0x60] sm:$0xff]
      %v761 = vld [vmem:[%s6 + $0x68] sm:$0xff]
      %v762 = vld [vmem:[%s6 + $0x70] sm:$0xff]
      %v763 = vld [vmem:[%s6 + $0x78] sm:$0xff]
      %765 = vset.pattern.permute.xlu0 0
      %766 = vperm.xlu0 %765, %v760
      %v767 = vpop.permute.xlu0 %766
      %770 = vset.pattern.permute.xlu0 0
      %771 = vperm.xlu0 %770, %v761
      %v772 = vpop.permute.xlu0 %771
      %775 = vset.pattern.permute.xlu0 0
      %776 = vperm.xlu0 %775, %v762
      %v777 = vpop.permute.xlu0 %776
      %780 = vset.pattern.permute.xlu0 0
      %781 = vperm.xlu0 %780, %v763
      %v782 = vpop.permute.xlu0 %781
      %v784 = vmul.f32 %v752, %v767
      %v785 = vmul.f32 %v753, %v767
      %v786 = vmul.f32 %v754, %v772
      %v787 = vmul.f32 %v755, %v772
      %v788 = vmul.f32 %v756, %v777
      %v789 = vmul.f32 %v757, %v777
      %v790 = vmul.f32 %v758, %v782
      %v791 = vmul.f32 %v759, %v782
      %v792 = vld [vmem:[%s7 + $0x60] sm:$0xff]
      %v793 = vld [vmem:[%s7 + $0x68] sm:$0xff]
      %v794 = vld [vmem:[%s7 + $0x70] sm:$0xff]
      %v795 = vld [vmem:[%s7 + $0x78] sm:$0xff]
      %797 = vset.pattern.permute.xlu0 0
      %798 = vperm.xlu0 %797, %v792
      %v799 = vpop.permute.xlu0 %798
      %802 = vset.pattern.permute.xlu0 0
      %803 = vperm.xlu0 %802, %v793
      %v804 = vpop.permute.xlu0 %803
      %807 = vset.pattern.permute.xlu0 0
      %808 = vperm.xlu0 %807, %v794
      %v809 = vpop.permute.xlu0 %808
      %812 = vset.pattern.permute.xlu0 0
      %813 = vperm.xlu0 %812, %v795
      %v814 = vpop.permute.xlu0 %813
      %v816 = vadd.f32 %v784, %v799
      %v817 = vadd.f32 %v785, %v799
      %v818 = vadd.f32 %v786, %v804
      %v819 = vadd.f32 %v787, %v804
      %v820 = vadd.f32 %v788, %v809
      %v821 = vadd.f32 %v789, %v809
      %v822 = vadd.f32 %v790, %v814
      %v823 = vadd.f32 %v791, %v814
      %v824 = vmax.f32 %v816, 0.0
      %v825 = vmax.f32 %v817, 0.0
      %v826 = vmax.f32 %v818, 0.0
      %v827 = vmax.f32 %v819, 0.0
      %v828 = vmax.f32 %v820, 0.0
      %v829 = vmax.f32 %v821, 0.0
      %v830 = vmax.f32 %v822, 0.0
      %v831 = vmax.f32 %v823, 0.0
      %v832 = vpack.c.bf16 %v826, %v824
      %v833 = vpack.c.bf16 %v827, %v825
      %v834 = vpack.c.bf16 %v830, %v828
      %v835 = vpack.c.bf16 %v831, %v829
      %836 = vst [vmem:[#allocation2 + $0x60] sm:$0xff] %v832
      %837 = vst [vmem:[#allocation2 + $0x68] sm:$0xff] %v833
      %838 = vst [vmem:[#allocation2 + $0x70] sm:$0xff] %v834
      %839 = vst [vmem:[#allocation2 + $0x78] sm:$0xff] %v835
      %v840 = vld [vmem:[%s476] sm:$0xff]
      %v841 = vld [vmem:[%s476 + $0x8] sm:$0xff]
      %v842 = vld [vmem:[%s476 + $0x10] sm:$0xff]
      %v843 = vld [vmem:[%s476 + $0x18] sm:$0xff]
      %v844 = vld [vmem:[%s476 + $0x20] sm:$0xff]
      %v845 = vld [vmem:[%s476 + $0x28] sm:$0xff]
      %v846 = vld [vmem:[%s476 + $0x30] sm:$0xff]
      %v847 = vld [vmem:[%s476 + $0x38] sm:$0xff]
      %v848 = vld [vmem:[%s6 + $0x80] sm:$0xff]
      %v849 = vld [vmem:[%s6 + $0x88] sm:$0xff]
      %v850 = vld [vmem:[%s6 + $0x90] sm:$0xff]
      %v851 = vld [vmem:[%s6 + $0x98] sm:$0xff]
      %853 = vset.pattern.permute.xlu0 0
      %854 = vperm.xlu0 %853, %v848
      %v855 = vpop.permute.xlu0 %854
      %858 = vset.pattern.permute.xlu0 0
      %859 = vperm.xlu0 %858, %v849
      %v860 = vpop.permute.xlu0 %859
      %863 = vset.pattern.permute.xlu0 0
      %864 = vperm.xlu0 %863, %v850
      %v865 = vpop.permute.xlu0 %864
      %868 = vset.pattern.permute.xlu0 0
      %869 = vperm.xlu0 %868, %v851
      %v870 = vpop.permute.xlu0 %869
      %v872 = vmul.f32 %v840, %v855
      %v873 = vmul.f32 %v841, %v855
      %v874 = vmul.f32 %v842, %v860
      %v875 = vmul.f32 %v843, %v860
      %v876 = vmul.f32 %v844, %v865
      %v877 = vmul.f32 %v845, %v865
      %v878 = vmul.f32 %v846, %v870
      %v879 = vmul.f32 %v847, %v870
      %v880 = vld [vmem:[%s7 + $0x80] sm:$0xff]
      %v881 = vld [vmem:[%s7 + $0x88] sm:$0xff]
      %v882 = vld [vmem:[%s7 + $0x90] sm:$0xff]
      %v883 = vld [vmem:[%s7 + $0x98] sm:$0xff]
      %885 = vset.pattern.permute.xlu0 0
      %886 = vperm.xlu0 %885, %v880
      %v887 = vpop.permute.xlu0 %886
      %890 = vset.pattern.permute.xlu0 0
      %891 = vperm.xlu0 %890, %v881
      %v892 = vpop.permute.xlu0 %891
      %895 = vset.pattern.permute.xlu0 0
      %896 = vperm.xlu0 %895, %v882
      %v897 = vpop.permute.xlu0 %896
      %900 = vset.pattern.permute.xlu0 0
      %901 = vperm.xlu0 %900, %v883
      %v902 = vpop.permute.xlu0 %901
      %v904 = vadd.f32 %v872, %v887
      %v905 = vadd.f32 %v873, %v887
      %v906 = vadd.f32 %v874, %v892
      %v907 = vadd.f32 %v875, %v892
      %v908 = vadd.f32 %v876, %v897
      %v909 = vadd.f32 %v877, %v897
      %v910 = vadd.f32 %v878, %v902
      %v911 = vadd.f32 %v879, %v902
      %v912 = vmax.f32 %v904, 0.0
      %v913 = vmax.f32 %v905, 0.0
      %v914 = vmax.f32 %v906, 0.0
      %v915 = vmax.f32 %v907, 0.0
      %v916 = vmax.f32 %v908, 0.0
      %v917 = vmax.f32 %v909, 0.0
      %v918 = vmax.f32 %v910, 0.0
      %v919 = vmax.f32 %v911, 0.0
      %v920 = vpack.c.bf16 %v914, %v912
      %v921 = vpack.c.bf16 %v915, %v913
      %v922 = vpack.c.bf16 %v918, %v916
      %v923 = vpack.c.bf16 %v919, %v917
      %924 = vst [vmem:[#allocation2 + $0x80] sm:$0xff] %v920
      %925 = vst [vmem:[#allocation2 + $0x88] sm:$0xff] %v921
      %926 = vst [vmem:[#allocation2 + $0x90] sm:$0xff] %v922
      %927 = vst [vmem:[#allocation2 + $0x98] sm:$0xff] %v923
      %v928 = vld [vmem:[%s481] sm:$0xff]
      %v929 = vld [vmem:[%s481 + $0x8] sm:$0xff]
      %v930 = vld [vmem:[%s481 + $0x10] sm:$0xff]
      %v931 = vld [vmem:[%s481 + $0x18] sm:$0xff]
      %v932 = vld [vmem:[%s8] sm:$0xff]
      %v933 = vld [vmem:[%s8 + $0x8] sm:$0xff]
      %935 = vset.pattern.permute.xlu0 0
      %936 = vperm.xlu0 %935, %v932
      %v937 = vpop.permute.xlu0 %936
      %940 = vset.pattern.permute.xlu0 0
      %941 = vperm.xlu0 %940, %v933
      %v942 = vpop.permute.xlu0 %941
      %v944 = vmul.f32 %v928, %v937
      %v945 = vmul.f32 %v929, %v937
      %v946 = vmul.f32 %v930, %v942
      %v947 = vmul.f32 %v931, %v942
      %v948 = vld [vmem:[%s9] sm:$0xff]
      %v949 = vld [vmem:[%s9 + $0x8] sm:$0xff]
      %951 = vset.pattern.permute.xlu0 0
      %952 = vperm.xlu0 %951, %v948
      %v953 = vpop.permute.xlu0 %952
      %956 = vset.pattern.permute.xlu0 0
      %957 = vperm.xlu0 %956, %v949
      %v958 = vpop.permute.xlu0 %957
      %v960 = vadd.f32 %v944, %v953
      %v961 = vadd.f32 %v945, %v953
      %v962 = vadd.f32 %v946, %v958
      %v963 = vadd.f32 %v947, %v958
      %v964 = vmax.f32 %v960, 0.0
      %v965 = vmax.f32 %v961, 0.0
      %v966 = vmax.f32 %v962, 0.0
      %v967 = vmax.f32 %v963, 0.0
      %v968 = vpack.c.bf16 %v966, %v964
      %v969 = vpack.c.bf16 %v967, %v965
      %970 = vst [vmem:[#allocation2 + $0xa0] sm:$0xff] %v968
      %971 = vst [vmem:[#allocation2 + $0xa8] sm:$0xff] %v969
      %v972 = vld [vmem:[%s10] sm:$0xff]
      %v973 = vld [vmem:[%s10 + $0x8] sm:$0xff]
      %v974 = vld [vmem:[%s10 + $0x10] sm:$0xff]
      %v975 = vld [vmem:[%s10 + $0x18] sm:$0xff]
      %v976 = vld [vmem:[#allocation2] sm:$0xff]
      %v977 = vld [vmem:[#allocation2 + $0x8] sm:$0xff]
      %v978 = vld [vmem:[#allocation2 + $0x10] sm:$0xff]
      %v979 = vld [vmem:[#allocation2 + $0x18] sm:$0xff]
      %v980 = vld [vmem:[#allocation2 + $0x20] sm:$0xff]
      %v981 = vld [vmem:[#allocation2 + $0x28] sm:$0xff]
      %v982 = vld [vmem:[#allocation2 + $0x30] sm:$0xff]
      %v983 = vld [vmem:[#allocation2 + $0x38] sm:$0xff]
      %v984 = vld [vmem:[#allocation2 + $0x40] sm:$0xff]
      %v985 = vld [vmem:[#allocation2 + $0x48] sm:$0xff]
      %v986 = vld [vmem:[#allocation2 + $0x50] sm:$0xff]
      %v987 = vld [vmem:[#allocation2 + $0x58] sm:$0xff]
      %v988 = vld [vmem:[#allocation2 + $0x60] sm:$0xff]
      %v989 = vld [vmem:[#allocation2 + $0x68] sm:$0xff]
      %v990 = vld [vmem:[#allocation2 + $0x70] sm:$0xff]
      %v991 = vld [vmem:[#allocation2 + $0x78] sm:$0xff]
      %v992 = vld [vmem:[#allocation2 + $0x80] sm:$0xff]
      %v993 = vld [vmem:[#allocation2 + $0x88] sm:$0xff]
      %v994 = vld [vmem:[#allocation2 + $0x90] sm:$0xff]
      %v995 = vld [vmem:[#allocation2 + $0x98] sm:$0xff]
      %v996 = vld [vmem:[#allocation2 + $0xa0] sm:$0xff]
      %v997 = vld [vmem:[#allocation2 + $0xa8] sm:$0xff]
      %v1002 = vunpack.c.l.b16 %v972
      %v1003 = vunpack.c.h.b16 %v972
      %v1004 = vunpack.c.l.b16 %v973
      %v1005 = vunpack.c.h.b16 %v973
      %v1006 = vunpack.c.l.b16 %v974
      %v1007 = vunpack.c.h.b16 %v974
      %v1008 = vunpack.c.l.b16 %v975
      %v1009 = vunpack.c.h.b16 %v975
      %v1010 = vpack.c.b16 %v1004, %v1002
      %v1011 = vpack.c.b16 %v1005, %v1003
      %v1012 = vpack.c.b16 %v1008, %v1006
      %v1013 = vpack.c.b16 %v1009, %v1007
      %vm1016 = vcmask 392192
      %v1018 = vsel %vm1016, %v1011, 0
      %v1021 = vsel %vm1016, %v1013, 0
      %1023 = vmatprep.subr.bf16.mxu0 %v977
      %1024 = vmatpush1.bf16.msra.mxu0 %v976
      %1025 = vmatprep.subr.bf16.mxu0 %v979
      %1026 = vmatpush1.bf16.msra.mxu0 %v978
      %1027 = vmatprep.subr.bf16.mxu0 %v981
      %1028 = vmatpush1.bf16.msra.mxu0 %v980
      %1029 = vmatprep.subr.bf16.mxu0 %v983
      %1030 = vmatpush1.bf16.msra.mxu0 %v982
      %1031 = vmatprep.subr.bf16.mxu0 %v985
      %1032 = vmatpush1.bf16.msra.mxu0 %v984
      %1033 = vmatprep.subr.bf16.mxu0 %v987
      %1034 = vmatpush1.bf16.msra.mxu0 %v986
      %1035 = vmatprep.subr.bf16.mxu0 %v989
      %1036 = vmatpush1.bf16.msra.mxu0 %v988
      %1037 = vmatprep.subr.bf16.mxu0 %v991
      %1038 = vmatpush1.bf16.msra.mxu0 %v990
      %1039 = vmatprep.subr.bf16.mxu0 %v993
      %1040 = vmatpush1.bf16.msra.mxu0 %v992
      %1041 = vmatprep.subr.bf16.mxu0 %v995
      %1042 = vmatpush1.bf16.msra.mxu0 %v994
      %1043 = vmatprep.subr.bf16.mxu0 %v997
      %1044 = vmatpush1.bf16.msra.mxu0 %v996
      %1045 = vmatprep.subr.bf16.mxu0 0
      %1046 = vmatpush1.bf16.msra.mxu0 0
      %1047 = vmatprep.subr.bf16.mxu0 0
      %1048 = vmatpush1.bf16.msra.mxu0 0
      %1049 = vmatprep.subr.bf16.mxu0 0
      %1050 = vmatpush1.bf16.msra.mxu0 0
      %1051 = vmatprep.subr.bf16.mxu0 0
      %1052 = vmatpush1.bf16.msra.mxu0 0
      %1053 = vmatprep.subr.bf16.mxu0 0
      %1054 = vmatpush1.bf16.msra.mxu0 0
      %1055 = vmatprep.mubr.bf16.mxu0 %v1018
      %1056 = vmatmul.mubr.bf16.gmra.mrb[0].mxu0 %v1010
      %v1057 = vpop.f32.mrb[0].mxu0
      %v1058 = vadd.f32 0.0, %v1057
      %v1059 = vpop.f32.mrb[0].mxu0
      %v1060 = vadd.f32 0.0, %v1059
      %v1061 = vpop.f32.mrb[0].mxu0
      %v1062 = vadd.f32 0.0, %v1061
      %v1063 = vpop.f32.mrb[0].mxu0
      %v1064 = vadd.f32 0.0, %v1063
      %1065 = vmatprep.mubr.bf16.mxu0 %v1021
      %1066 = vmatmul.mubr.bf16.gmra.mrb[0].mxu0 %v1012
      %v1067 = vpop.f32.mrb[0].mxu0
      %v1068 = vadd.f32 0.0, %v1067
      %v1069 = vpop.f32.mrb[0].mxu0
      %v1070 = vadd.f32 0.0, %v1069
      %v1071 = vpop.f32.mrb[0].mxu0
      %v1072 = vadd.f32 0.0, %v1071
      %v1073 = vpop.f32.mrb[0].mxu0
      %v1074 = vadd.f32 0.0, %v1073
      %1075 = vdwg.mxu0
      %1076 = vst [vmem:[%s486] sm:$0xff] %v1058
      %1077 = vst [vmem:[%s486 + $0x8] sm:$0xff] %v1060
      %1078 = vst [vmem:[%s486 + $0x10] sm:$0xff] %v1062
      %1079 = vst [vmem:[%s486 + $0x18] sm:$0xff] %v1064
      %1080 = vst [vmem:[%s486 + $0x20] sm:$0xff] %v1068
      %1081 = vst [vmem:[%s486 + $0x28] sm:$0xff] %v1070
      %1082 = vst [vmem:[%s486 + $0x30] sm:$0xff] %v1072
      %1083 = vst [vmem:[%s486 + $0x38] sm:$0xff] %v1074
      %p1084 = scmp.lt.s32.totalorder %s22, 1
      %s1085 = scalar_select %p1084, %s22, 1
      %s1086 = smul.addr %s1085, 8
      %s1087 = smul.addr %s1086, 8
      %s1088 = scalar_lea.vmem %s11, %s1087
      // Predicated region
      $region65: #{dappm_forward.11} parent=63 // pred_check
        %p1089 = pneg %p301
      $region66: #{dappm_forward.11} parent=63 // pred_check_branch
        %1091 = sbr.rel (%p1089) target = $region68
      $region67: #{dappm_forward.11} parent=63 // pred_region
        _
      $region68: #{dappm_forward.11} parent=63 // pred_fallthru
        _
    $region64: #{dappm_forward.11} parent=5 // pred_fallthru
      _
    %p1092 = scmp.le.s32.totalorder 2, %s17
    // Predicated region
    $region69: #{dappm_forward.11} parent=5 // pred_check
      %p1093 = pneg %p1092
    $region70: #{dappm_forward.11} parent=5 // pred_check_branch
      %1095 = sbr.rel (%p1093) target = $region72
    $region71: #{dappm_forward.11} parent=5 // pred_region
      %s1096 = ssub.s32 %s17, 2
      // Predicated region
      $region73: #{dappm_forward.11} parent=71 // pred_check
        %p1097 = pneg %p307
      $region74: #{dappm_forward.11} parent=71 // pred_check_branch
        %1099 = sbr.rel (%p1097) target = $region76
      $region75: #{dappm_forward.11} parent=71 // pred_region
        %p1100 = scmp.lt.s32.totalorder %s23, 1
        %s1101 = scalar_select %p1100, %s23, 1
        %s1102 = smul.addr %s1101, 8
        %s1103 = smul.addr %s1102, 8
        %s1104 = scalar_lea.vmem %s11, %s1103
      $region76: #{dappm_forward.11} parent=71 // pred_fallthru
        _
    $region72: #{dappm_forward.11} parent=5 // pred_fallthru
      _
  $region6: #{dappm_forward.11} parent=0 // loop_footer
    %s21 = sadd.s32 1, %s17
  $region7: #{dappm_forward.11} parent=0 // loop_footer_branch
    %16 = sbr.rel target = $region3
  $region8: #{dappm_forward.11} parent=0 // loop_exit
    _

// kernel: dappm_forward.7
$region0: #{dappm_forward.7}
  #allocation0 [shape = 'u32[]', space=smem, size = 0x4, offset = 0x4, fixed_abs, tag = 'smem constant byte address 0x4 - core index']
  #allocation1 [shape = 'u32[144,128]{1,0:T(1,128)}', space=vmem, size = 0x12000, scoped, tag = 'internal scratch']
  #allocation2 [shape = 'bf16[32,290]{1,0:T(16,128)(2,1)}', space=vmem, size = 0x6000, scoped, tag = 'scratch operand']
  #allocation3 [shape = 'bf16[288,256]{1,0:T(16,128)(2,1)}', space=vmem, size = 0x24000, scoped, tag = 'scratch operand']
  %s0 = inlined_call_operand.vmem [shape: f32[2,16,256], index: 0, kind: input, shape index: {}]
  %s1 = inlined_call_operand.vmem [shape: f32[256,128], index: 1, kind: input, shape index: {}]
  %s2 = inlined_call_operand.vmem [shape: f32[16,1], index: 2, kind: input, shape index: {}]
  %s3 = inlined_call_operand.vmem [shape: f32[16,1], index: 3, kind: input, shape index: {}]
  %s4 = inlined_call_operand.vmem [shape: bf16[32,16], index: 4, kind: input, shape index: {}]
  %s5 = inlined_call_operand.vmem [shape: f32[128,256], index: 5, kind: input, shape index: {}]
  %s6 = inlined_call_operand.vmem [shape: f32[2,32,256], index: 6, kind: input, shape index: {}]
  %s7 = inlined_call_operand.vmem [shape: f32[32,1], index: 7, kind: input, shape index: {}]
  %s8 = inlined_call_operand.vmem [shape: f32[32,1], index: 8, kind: input, shape index: {}]
  %s9 = inlined_call_operand.vmem [shape: bf16[32,288], index: 9, kind: input, shape index: {}]
  %s10 = inlined_call_operand.vmem [shape: bf16[9,1,256], index: 10, kind: input, shape index: {}]
  %s11 = inlined_call_operand.vmem [shape: f32[2,32,256], index: 11, kind: output, shape index: {}]
  %s12 = sld [smem:[#allocation0]]
  $region77: #{dappm_forward.7} parent=0
    _
  %s14 = ssub.s32 1, %s12
  %s15 = scalar_select 0, %s14, %s12
  loop: start=0, step=1, limit=4
  $region2: #{dappm_forward.7} parent=0 // loop_pre_header
    _
  $region3: #{dappm_forward.7} parent=0 // loop_header
    %s17 = sphi 0, %s21
    %p18 = scmp.ge.s32.totalorder %s17, 4
    %s27 = sphi 0, %s29
    %s30 = sphi 0, %s27
    %s31 = sphi 0, %s30
    %s47 = sphi 0, %s31
    %s51 = sphi 0, %s51
    %s53 = sphi 0, %s51
    %s54 = sphi 0, %s53
    %s68 = sphi 0, %s54
    %s72 = sphi 0, %s72
    %s74 = sphi 0, %s72
    %s75 = sphi 0, %s74
    %s89 = sphi 0, %s75
    %s93 = sphi 0, %s93
    %s95 = sphi 0, %s93
    %s96 = sphi 0, %s95
    %s110 = sphi 0, %s96
    %s114 = sphi 0, %s114
    %s116 = sphi 0, %s114
    %s117 = sphi 0, %s116
    %s131 = sphi 0, %s117
    %s135 = sphi 0, %s135
    %s137 = sphi 0, %s135
    %s138 = sphi 0, %s137
    %s152 = sphi 0, %s138
    %s158 = sphi 0, %s160
    %s161 = sphi 0, %s158
    %s162 = sphi 0, %s161
    %s178 = sphi 0, %s162
    %s182 = sphi 0, %s182
    %s184 = sphi 0, %s182
    %s185 = sphi 0, %s184
    %s199 = sphi 0, %s185
    %s203 = sphi 0, %s203
    %s205 = sphi 0, %s203
    %s206 = sphi 0, %s205
    %s220 = sphi 0, %s206
    %s224 = sphi 0, %s224
    %s226 = sphi 0, %s224
    %s227 = sphi 0, %s226
    %s241 = sphi 0, %s227
    %s245 = sphi 0, %s245
    %s247 = sphi 0, %s245
    %s248 = sphi 0, %s247
    %s262 = sphi 0, %s248
    %s268 = sphi 0, %s270
    %s271 = sphi 0, %s268
    %s272 = sphi 0, %s271
    %s288 = sphi 0, %s272
  $region4: #{dappm_forward.7} parent=0 // loop_header_branch
    %20 = sbr.rel (%p18) target = $region8
  $region5: #{dappm_forward.7} parent=0 // loop_body
    %s22 = ssub.s32 %s17, 1
    %s23 = ssub.s32 %s17, 2
    %s24 = sadd.s32 %s17, 1
    %s25 = ssub.s32 %s17, %s24
    %p26 = scmp.eq.s32.totalorder %s25, 0
    %s28 = sadd.s32 %s27, 1
    %s29 = scalar_select %p26, %s27, %s28
    %p32 = pneg %p26
    %p33 = scmp.eq.s32.totalorder %s17, 1
    %p34 = por %p32, %p33
    %p35 = scmp.ne.s32.totalorder %s27, %s30
    %p36 = scmp.eq.s32.totalorder %s17, 0
    %p37 = por %p35, %p36
    %p38 = scmp.ne.s32.totalorder %s27, %s30
    %p39 = scmp.eq.s32.totalorder %s22, 1
    %p40 = por %p38, %p39
    %p41 = scmp.ne.s32.totalorder %s30, %s31
    %p42 = scmp.eq.s32.totalorder %s22, 0
    %p43 = por %p41, %p42
    %p44 = scmp.ne.s32.totalorder %s30, %s31
    %p45 = scmp.eq.s32.totalorder %s23, 1
    %p46 = por %p44, %p45
    %p48 = scmp.ne.s32.totalorder %s31, %s47
    %p49 = scmp.eq.s32.totalorder %s23, 0
    %p50 = por %p48, %p49
    %s52 = sadd.s32 %s51, 1
    %p55 = scmp.eq.s32.totalorder %s17, 1
    %p56 = scmp.ne.s32.totalorder %s51, %s53
    %p57 = scmp.eq.s32.totalorder %s17, 0
    %p58 = por %p56, %p57
    %p59 = scmp.ne.s32.totalorder %s51, %s53
    %p60 = scmp.eq.s32.totalorder %s22, 1
    %p61 = por %p59, %p60
    %p62 = scmp.ne.s32.totalorder %s53, %s54
    %p63 = scmp.eq.s32.totalorder %s22, 0
    %p64 = por %p62, %p63
    %p65 = scmp.ne.s32.totalorder %s53, %s54
    %p66 = scmp.eq.s32.totalorder %s23, 1
    %p67 = por %p65, %p66
    %p69 = scmp.ne.s32.totalorder %s54, %s68
    %p70 = scmp.eq.s32.totalorder %s23, 0
    %p71 = por %p69, %p70
    %s73 = sadd.s32 %s72, 1
    %p76 = scmp.eq.s32.totalorder %s17, 1
    %p77 = scmp.ne.s32.totalorder %s72, %s74
    %p78 = scmp.eq.s32.totalorder %s17, 0
    %p79 = por %p77, %p78
    %p80 = scmp.ne.s32.totalorder %s72, %s74
    %p81 = scmp.eq.s32.totalorder %s22, 1
    %p82 = por %p80, %p81
    %p83 = scmp.ne.s32.totalorder %s74, %s75
    %p84 = scmp.eq.s32.totalorder %s22, 0
    %p85 = por %p83, %p84
    %p86 = scmp.ne.s32.totalorder %s74, %s75
    %p87 = scmp.eq.s32.totalorder %s23, 1
    %p88 = por %p86, %p87
    %p90 = scmp.ne.s32.totalorder %s75, %s89
    %p91 = scmp.eq.s32.totalorder %s23, 0
    %p92 = por %p90, %p91
    %s94 = sadd.s32 %s93, 1
    %p97 = scmp.eq.s32.totalorder %s17, 1
    %p98 = scmp.ne.s32.totalorder %s93, %s95
    %p99 = scmp.eq.s32.totalorder %s17, 0
    %p100 = por %p98, %p99
    %p101 = scmp.ne.s32.totalorder %s93, %s95
    %p102 = scmp.eq.s32.totalorder %s22, 1
    %p103 = por %p101, %p102
    %p104 = scmp.ne.s32.totalorder %s95, %s96
    %p105 = scmp.eq.s32.totalorder %s22, 0
    %p106 = por %p104, %p105
    %p107 = scmp.ne.s32.totalorder %s95, %s96
    %p108 = scmp.eq.s32.totalorder %s23, 1
    %p109 = por %p107, %p108
    %p111 = scmp.ne.s32.totalorder %s96, %s110
    %p112 = scmp.eq.s32.totalorder %s23, 0
    %p113 = por %p111, %p112
    %s115 = sadd.s32 %s114, 1
    %p118 = scmp.eq.s32.totalorder %s17, 1
    %p119 = scmp.ne.s32.totalorder %s114, %s116
    %p120 = scmp.eq.s32.totalorder %s17, 0
    %p121 = por %p119, %p120
    %p122 = scmp.ne.s32.totalorder %s114, %s116
    %p123 = scmp.eq.s32.totalorder %s22, 1
    %p124 = por %p122, %p123
    %p125 = scmp.ne.s32.totalorder %s116, %s117
    %p126 = scmp.eq.s32.totalorder %s22, 0
    %p127 = por %p125, %p126
    %p128 = scmp.ne.s32.totalorder %s116, %s117
    %p129 = scmp.eq.s32.totalorder %s23, 1
    %p130 = por %p128, %p129
    %p132 = scmp.ne.s32.totalorder %s117, %s131
    %p133 = scmp.eq.s32.totalorder %s23, 0
    %p134 = por %p132, %p133
    %s136 = sadd.s32 %s135, 1
    %p139 = scmp.eq.s32.totalorder %s17, 1
    %p140 = scmp.ne.s32.totalorder %s135, %s137
    %p141 = scmp.eq.s32.totalorder %s17, 0
    %p142 = por %p140, %p141
    %p143 = scmp.ne.s32.totalorder %s135, %s137
    %p144 = scmp.eq.s32.totalorder %s22, 1
    %p145 = por %p143, %p144
    %p146 = scmp.ne.s32.totalorder %s137, %s138
    %p147 = scmp.eq.s32.totalorder %s22, 0
    %p148 = por %p146, %p147
    %p149 = scmp.ne.s32.totalorder %s137, %s138
    %p150 = scmp.eq.s32.totalorder %s23, 1
    %p151 = por %p149, %p150
    %p153 = scmp.ne.s32.totalorder %s138, %s152
    %p154 = scmp.eq.s32.totalorder %s23, 0
    %p155 = por %p153, %p154
    %s156 = ssub.s32 %s17, %s24
    %p157 = scmp.eq.s32.totalorder %s156, 0
    %s159 = sadd.s32 %s158, 1
    %s160 = scalar_select %p157, %s158, %s159
    %p163 = pneg %p157
    %p164 = scmp.eq.s32.totalorder %s17, 1
    %p165 = por %p163, %p164
    %p166 = scmp.ne.s32.totalorder %s158, %s161
    %p167 = scmp.eq.s32.totalorder %s17, 0
    %p168 = por %p166, %p167
    %p169 = scmp.ne.s32.totalorder %s158, %s161
    %p170 = scmp.eq.s32.totalorder %s22, 1
    %p171 = por %p169, %p170
    %p172 = scmp.ne.s32.totalorder %s161, %s162
    %p173 = scmp.eq.s32.totalorder %s22, 0
    %p174 = por %p172, %p173
    %p175 = scmp.ne.s32.totalorder %s161, %s162
    %p176 = scmp.eq.s32.totalorder %s23, 1
    %p177 = por %p175, %p176
    %p179 = scmp.ne.s32.totalorder %s162, %s178
    %p180 = scmp.eq.s32.totalorder %s23, 0
    %p181 = por %p179, %p180
    %s183 = sadd.s32 %s182, 1
    %p186 = scmp.eq.s32.totalorder %s17, 1
    %p187 = scmp.ne.s32.totalorder %s182, %s184
    %p188 = scmp.eq.s32.totalorder %s17, 0
    %p189 = por %p187, %p188
    %p190 = scmp.ne.s32.totalorder %s182, %s184
    %p191 = scmp.eq.s32.totalorder %s22, 1
    %p192 = por %p190, %p191
    %p193 = scmp.ne.s32.totalorder %s184, %s185
    %p194 = scmp.eq.s32.totalorder %s22, 0
    %p195 = por %p193, %p194
    %p196 = scmp.ne.s32.totalorder %s184, %s185
    %p197 = scmp.eq.s32.totalorder %s23, 1
    %p198 = por %p196, %p197
    %p200 = scmp.ne.s32.totalorder %s185, %s199
    %p201 = scmp.eq.s32.totalorder %s23, 0
    %p202 = por %p200, %p201
    %s204 = sadd.s32 %s203, 1
    %p207 = scmp.eq.s32.totalorder %s17, 1
    %p208 = scmp.ne.s32.totalorder %s203, %s205
    %p209 = scmp.eq.s32.totalorder %s17, 0
    %p210 = por %p208, %p209
    %p211 = scmp.ne.s32.totalorder %s203, %s205
    %p212 = scmp.eq.s32.totalorder %s22, 1
    %p213 = por %p211, %p212
    %p214 = scmp.ne.s32.totalorder %s205, %s206
    %p215 = scmp.eq.s32.totalorder %s22, 0
    %p216 = por %p214, %p215
    %p217 = scmp.ne.s32.totalorder %s205, %s206
    %p218 = scmp.eq.s32.totalorder %s23, 1
    %p219 = por %p217, %p218
    %p221 = scmp.ne.s32.totalorder %s206, %s220
    %p222 = scmp.eq.s32.totalorder %s23, 0
    %p223 = por %p221, %p222
    %s225 = sadd.s32 %s224, 1
    %p228 = scmp.eq.s32.totalorder %s17, 1
    %p229 = scmp.ne.s32.totalorder %s224, %s226
    %p230 = scmp.eq.s32.totalorder %s17, 0
    %p231 = por %p229, %p230
    %p232 = scmp.ne.s32.totalorder %s224, %s226
    %p233 = scmp.eq.s32.totalorder %s22, 1
    %p234 = por %p232, %p233
    %p235 = scmp.ne.s32.totalorder %s226, %s227
    %p236 = scmp.eq.s32.totalorder %s22, 0
    %p237 = por %p235, %p236
    %p238 = scmp.ne.s32.totalorder %s226, %s227
    %p239 = scmp.eq.s32.totalorder %s23, 1
    %p240 = por %p238, %p239
    %p242 = scmp.ne.s32.totalorder %s227, %s241
    %p243 = scmp.eq.s32.totalorder %s23, 0
    %p244 = por %p242, %p243
    %s246 = sadd.s32 %s245, 1
    %p249 = scmp.eq.s32.totalorder %s17, 1
    %p250 = scmp.ne.s32.totalorder %s245, %s247
    %p251 = scmp.eq.s32.totalorder %s17, 0
    %p252 = por %p250, %p251
    %p253 = scmp.ne.s32.totalorder %s245, %s247
    %p254 = scmp.eq.s32.totalorder %s22, 1
    %p255 = por %p253, %p254
    %p256 = scmp.ne.s32.totalorder %s247, %s248
    %p257 = scmp.eq.s32.totalorder %s22, 0
    %p258 = por %p256, %p257
    %p259 = scmp.ne.s32.totalorder %s247, %s248
    %p260 = scmp.eq.s32.totalorder %s23, 1
    %p261 = por %p259, %p260
    %p263 = scmp.ne.s32.totalorder %s248, %s262
    %p264 = scmp.eq.s32.totalorder %s23, 0
    %p265 = por %p263, %p264
    %s266 = ssub.s32 %s17, %s24
    %p267 = scmp.eq.s32.totalorder %s266, 0
    %s269 = sadd.s32 %s268, 1
    %s270 = scalar_select %p267, %s268, %s269
    %p273 = pneg %p267
    %p274 = scmp.eq.s32.totalorder %s17, 1
    %p275 = por %p273, %p274
    %p276 = scmp.ne.s32.totalorder %s268, %s271
    %p277 = scmp.eq.s32.totalorder %s17, 0
    %p278 = por %p276, %p277
    %p279 = scmp.ne.s32.totalorder %s268, %s271
    %p280 = scmp.eq.s32.totalorder %s22, 1
    %p281 = por %p279, %p280
    %p282 = scmp.ne.s32.totalorder %s271, %s272
    %p283 = scmp.eq.s32.totalorder %s22, 0
    %p284 = por %p282, %p283
    %p285 = scmp.ne.s32.totalorder %s271, %s272
    %p286 = scmp.eq.s32.totalorder %s23, 1
    %p287 = por %p285, %p286
    %p289 = scmp.ne.s32.totalorder %s272, %s288
    %p290 = scmp.eq.s32.totalorder %s23, 0
    %p291 = por %p289, %p290
    %p292 = scmp.le.s32.totalorder 1, %s17
    %p293 = scmp.lt.s32.totalorder %s17, 3
    %p294 = pnand %p292, %p293
    %p295 = pneg %p294
    // Predicated region
    $region9: #{dappm_forward.7} parent=5 // pred_check
      _
    $region10: #{dappm_forward.7} parent=5 // pred_check_branch
      %297 = sbr.rel (%p294) target = $region12
    $region11: #{dappm_forward.7} parent=5 // pred_region
      %s298 = ssub.s32 %s17, 1
      // Predicated region
      $region13: #{dappm_forward.7} parent=11 // pred_check
        %p299 = pneg %p64
      $region14: #{dappm_forward.7} parent=11 // pred_check_branch
        %301 = sbr.rel (%p299) target = $region16
      $region15: #{dappm_forward.7} parent=11 // pred_region
        _
      $region16: #{dappm_forward.7} parent=11 // pred_fallthru
        _
      // Predicated region
      $region17: #{dappm_forward.7} parent=11 // pred_check
        %p302 = pneg %p85
      $region18: #{dappm_forward.7} parent=11 // pred_check_branch
        %304 = sbr.rel (%p302) target = $region20
      $region19: #{dappm_forward.7} parent=11 // pred_region
        _
      $region20: #{dappm_forward.7} parent=11 // pred_fallthru
        _
      // Predicated region
      $region21: #{dappm_forward.7} parent=11 // pred_check
        %p305 = pneg %p106
      $region22: #{dappm_forward.7} parent=11 // pred_check_branch
        %307 = sbr.rel (%p305) target = $region24
      $region23: #{dappm_forward.7} parent=11 // pred_region
        _
      $region24: #{dappm_forward.7} parent=11 // pred_fallthru
        _
      // Predicated region
      $region25: #{dappm_forward.7} parent=11 // pred_check
        %p308 = pneg %p127
      $region26: #{dappm_forward.7} parent=11 // pred_check_branch
        %310 = sbr.rel (%p308) target = $region28
      $region27: #{dappm_forward.7} parent=11 // pred_region
        _
      $region28: #{dappm_forward.7} parent=11 // pred_fallthru
        _
      // Predicated region
      $region29: #{dappm_forward.7} parent=11 // pred_check
        %p311 = pneg %p148
      $region30: #{dappm_forward.7} parent=11 // pred_check_branch
        %313 = sbr.rel (%p311) target = $region32
      $region31: #{dappm_forward.7} parent=11 // pred_region
        _
      $region32: #{dappm_forward.7} parent=11 // pred_fallthru
        _
      // Predicated region
      $region33: #{dappm_forward.7} parent=11 // pred_check
        %p314 = pneg %p195
      $region34: #{dappm_forward.7} parent=11 // pred_check_branch
        %316 = sbr.rel (%p314) target = $region36
      $region35: #{dappm_forward.7} parent=11 // pred_region
        _
      $region36: #{dappm_forward.7} parent=11 // pred_fallthru
        _
      // Predicated region
      $region37: #{dappm_forward.7} parent=11 // pred_check
        %p317 = pneg %p216
      $region38: #{dappm_forward.7} parent=11 // pred_check_branch
        %319 = sbr.rel (%p317) target = $region40
      $region39: #{dappm_forward.7} parent=11 // pred_region
        _
      $region40: #{dappm_forward.7} parent=11 // pred_fallthru
        _
      // Predicated region
      $region41: #{dappm_forward.7} parent=11 // pred_check
        %p320 = pneg %p237
      $region42: #{dappm_forward.7} parent=11 // pred_check_branch
        %322 = sbr.rel (%p320) target = $region44
      $region43: #{dappm_forward.7} parent=11 // pred_region
        _
      $region44: #{dappm_forward.7} parent=11 // pred_fallthru
        _
      // Predicated region
      $region45: #{dappm_forward.7} parent=11 // pred_check
        %p323 = pneg %p258
      $region46: #{dappm_forward.7} parent=11 // pred_check_branch
        %325 = sbr.rel (%p323) target = $region48
      $region47: #{dappm_forward.7} parent=11 // pred_region
        _
      $region48: #{dappm_forward.7} parent=11 // pred_fallthru
        _
    $region12: #{dappm_forward.7} parent=5 // pred_fallthru
      _
    %p326 = scmp.lt.s32.totalorder %s17, 2
    // Predicated region
    $region49: #{dappm_forward.7} parent=5 // pred_check
      %p327 = pneg %p326
    $region50: #{dappm_forward.7} parent=5 // pred_check_branch
      %329 = sbr.rel (%p327) target = $region52
    $region51: #{dappm_forward.7} parent=5 // pred_region
      // Predicated region
      $region53: #{dappm_forward.7} parent=51 // pred_check
        %p330 = pneg %p37
      $region54: #{dappm_forward.7} parent=51 // pred_check_branch
        %332 = sbr.rel (%p330) target = $region56
      $region55: #{dappm_forward.7} parent=51 // pred_region
        %p333 = scmp.lt.s32.totalorder %s17, 1
        %s334 = scalar_select %p333, %s17, 1
        %s335 = smul.addr %s334, 4
        %s336 = smul.addr %s335, 8
        %s337 = scalar_lea.vmem %s0, %s336
      $region56: #{dappm_forward.7} parent=51 // pred_fallthru
        _
      // Predicated region
      $region57: #{dappm_forward.7} parent=51 // pred_check
        %p338 = pneg %p168
      $region58: #{dappm_forward.7} parent=51 // pred_check_branch
        %340 = sbr.rel (%p338) target = $region60
      $region59: #{dappm_forward.7} parent=51 // pred_region
        %p341 = scmp.lt.s32.totalorder %s17, 1
        %s342 = scalar_select %p341, %s17, 1
        %s343 = smul.addr %s342, 8
        %s344 = smul.addr %s343, 8
        %s345 = scalar_lea.vmem %s6, %s344
      $region60: #{dappm_forward.7} parent=51 // pred_fallthru
        _
    $region52: #{dappm_forward.7} parent=5 // pred_fallthru
      _
    %p346 = scmp.le.s32.totalorder 1, %s17
    %p347 = scmp.lt.s32.totalorder %s17, 3
    %p348 = pnand %p346, %p347
    %p349 = pneg %p348
    // Predicated region
    $region61: #{dappm_forward.7} parent=5 // pred_check
      _
    $region62: #{dappm_forward.7} parent=5 // pred_check_branch
      %351 = sbr.rel (%p348) target = $region64
    $region63: #{dappm_forward.7} parent=5 // pred_region
      %s352 = ssub.s32 %s17, 1
      %p353 = scmp.lt.s32.totalorder %s22, 1
      %s354 = scalar_select %p353, %s22, 1
      %s355 = smul.addr %s354, 4
      %s356 = smul.addr %s355, 8
      %s357 = scalar_lea.vmem %s0, %s356
      %p358 = pneg %p43
      %p359 = pneg %p40
      %p360 = pneg %p64
      %p361 = pneg %p61
      %p362 = pneg %p85
      %p363 = pneg %p82
      %p364 = pneg %p106
      %p365 = pneg %p103
      %p366 = pneg %p127
      %p367 = pneg %p124
      %p368 = pneg %p148
      %p369 = pneg %p145
      %p370 = scmp.lt.s32.totalorder %s22, 1
      %s371 = scalar_select %p370, %s22, 1
      %s372 = smul.addr %s371, 8
      %s373 = smul.addr %s372, 8
      %s374 = scalar_lea.vmem %s6, %s373
      %p375 = pneg %p174
      %p376 = pneg %p171
      %p377 = pneg %p195
      %p378 = pneg %p192
      %p379 = pneg %p216
      %p380 = pneg %p213
      %p381 = pneg %p237
      %p382 = pneg %p234
      %p383 = pneg %p258
      %p384 = pneg %p255
      %p385 = pneg %p284
      %p386 = pneg %p281
      %p387 = scmp.lt.s32.totalorder %s22, 1
      %s388 = scalar_select %p387, %s22, 1
      %s389 = smul.addr %s388, 8
      %s390 = smul.addr %s389, 8
      %s391 = scalar_lea.vmem %s11, %s390
      %p392 = scmp.lt.s32.totalorder %s22, 1
      %s393 = scalar_select %p392, %s22, 1
      %s394 = smul.addr %s393, 4
      %s395 = smul.addr %s394, 8
      %s396 = scalar_lea.vmem %s0, %s395
      %p397 = scmp.lt.s32.totalorder %s22, 1
      %s398 = scalar_select %p397, %s22, 1
      %s399 = smul.addr %s398, 8
      %s400 = smul.addr %s399, 8
      %s401 = scalar_lea.vmem %s6, %s400
      %p402 = scmp.lt.s32.totalorder %s22, 1
      %s403 = scalar_select %p402, %s22, 1
      %s404 = smul.addr %s403, 8
      %s405 = smul.addr %s404, 8
      %s406 = scalar_lea.vmem %s11, %s405
      %v408 = vld [vmem:[%s396] sm:$0xff]
      %v409 = vld [vmem:[%s396 + $0x8] sm:$0xff]
      %v410 = vld [vmem:[%s396 + $0x10] sm:$0xff]
      %v411 = vld [vmem:[%s396 + $0x18] sm:$0xff]
      %v412 = vld [vmem:[%s1] sm:$0xff]
      %v413 = vld [vmem:[%s1 + $0x8] sm:$0xff]
      %v414 = vld [vmem:[%s1 + $0x10] sm:$0xff]
      %v415 = vld [vmem:[%s1 + $0x18] sm:$0xff]
      %v416 = vld [vmem:[%s1 + $0x20] sm:$0xff]
      %v417 = vld [vmem:[%s1 + $0x28] sm:$0xff]
      %v418 = vld [vmem:[%s1 + $0x30] sm:$0xff]
      %v419 = vld [vmem:[%s1 + $0x38] sm:$0xff]
      %v420 = vld [vmem:[%s1 + $0x40] sm:$0xff]
      %v421 = vld [vmem:[%s1 + $0x48] sm:$0xff]
      %v422 = vld [vmem:[%s1 + $0x50] sm:$0xff]
      %v423 = vld [vmem:[%s1 + $0x58] sm:$0xff]
      %v424 = vld [vmem:[%s1 + $0x60] sm:$0xff]
      %v425 = vld [vmem:[%s1 + $0x68] sm:$0xff]
      %v426 = vld [vmem:[%s1 + $0x70] sm:$0xff]
      %v427 = vld [vmem:[%s1 + $0x78] sm:$0xff]
      %v428 = vld [vmem:[%s1 + $0x80] sm:$0xff]
      %v429 = vld [vmem:[%s1 + $0x88] sm:$0xff]
      %v430 = vld [vmem:[%s1 + $0x90] sm:$0xff]
      %v431 = vld [vmem:[%s1 + $0x98] sm:$0xff]
      %v432 = vld [vmem:[%s1 + $0xa0] sm:$0xff]
      %v433 = vld [vmem:[%s1 + $0xa8] sm:$0xff]
      %v434 = vld [vmem:[%s1 + $0xb0] sm:$0xff]
      %v435 = vld [vmem:[%s1 + $0xb8] sm:$0xff]
      %v436 = vld [vmem:[%s1 + $0xc0] sm:$0xff]
      %v437 = vld [vmem:[%s1 + $0xc8] sm:$0xff]
      %v438 = vld [vmem:[%s1 + $0xd0] sm:$0xff]
      %v439 = vld [vmem:[%s1 + $0xd8] sm:$0xff]
      %v440 = vld [vmem:[%s1 + $0xe0] sm:$0xff]
      %v441 = vld [vmem:[%s1 + $0xe8] sm:$0xff]
      %v442 = vld [vmem:[%s1 + $0xf0] sm:$0xff]
      %v443 = vld [vmem:[%s1 + $0xf8] sm:$0xff]
      %444 = vmatprep.subr.mxu0 0.0
      %445 = vmatpush1.msra.mxu0 %v412
      %446 = vmatprep.subr.mxu0 0.0
      %447 = vmatpush1.msra.mxu0 %v413
      %448 = vmatprep.subr.mxu0 0.0
      %449 = vmatpush1.msra.mxu0 %v414
      %450 = vmatprep.subr.mxu0 0.0
      %451 = vmatpush1.msra.mxu0 %v415
      %452 = vmatprep.subr.mxu0 0.0
      %453 = vmatpush1.msra.mxu0 %v416
      %454 = vmatprep.subr.mxu0 0.0
      %455 = vmatpush1.msra.mxu0 %v417
      %456 = vmatprep.subr.mxu0 0.0
      %457 = vmatpush1.msra.mxu0 %v418
      %458 = vmatprep.subr.mxu0 0.0
      %459 = vmatpush1.msra.mxu0 %v419
      %460 = vmatprep.subr.mxu0 0.0
      %461 = vmatpush1.msra.mxu0 %v420
      %462 = vmatprep.subr.mxu0 0.0
      %463 = vmatpush1.msra.mxu0 %v421
      %464 = vmatprep.subr.mxu0 0.0
      %465 = vmatpush1.msra.mxu0 %v422
      %466 = vmatprep.subr.mxu0 0.0
      %467 = vmatpush1.msra.mxu0 %v423
      %468 = vmatprep.subr.mxu0 0.0
      %469 = vmatpush1.msra.mxu0 %v424
      %470 = vmatprep.subr.mxu0 0.0
      %471 = vmatpush1.msra.mxu0 %v425
      %472 = vmatprep.subr.mxu0 0.0
      %473 = vmatpush1.msra.mxu0 %v426
      %474 = vmatprep.subr.mxu0 0.0
      %475 = vmatpush1.msra.mxu0 %v427
      %476 = vmatprep.subr.mxu0 0.0
      %477 = vmatpush1.msra.mxu0 %v428
      %478 = vmatprep.subr.mxu0 0.0
      %479 = vmatpush1.msra.mxu0 %v429
      %480 = vmatprep.subr.mxu0 0.0
      %481 = vmatpush1.msra.mxu0 %v430
      %482 = vmatprep.subr.mxu0 0.0
      %483 = vmatpush1.msra.mxu0 %v431
      %484 = vmatprep.subr.mxu0 0.0
      %485 = vmatpush1.msra.mxu0 %v432
      %486 = vmatprep.subr.mxu0 0.0
      %487 = vmatpush1.msra.mxu0 %v433
      %488 = vmatprep.subr.mxu0 0.0
      %489 = vmatpush1.msra.mxu0 %v434
      %490 = vmatprep.subr.mxu0 0.0
      %491 = vmatpush1.msra.mxu0 %v435
      %492 = vmatprep.subr.mxu0 0.0
      %493 = vmatpush1.msra.mxu0 %v436
      %494 = vmatprep.subr.mxu0 0.0
      %495 = vmatpush1.msra.mxu0 %v437
      %496 = vmatprep.subr.mxu0 0.0
      %497 = vmatpush1.msra.mxu0 %v438
      %498 = vmatprep.subr.mxu0 0.0
      %499 = vmatpush1.msra.mxu0 %v439
      %500 = vmatprep.subr.mxu0 0.0
      %501 = vmatpush1.msra.mxu0 %v440
      %502 = vmatprep.subr.mxu0 0.0
      %503 = vmatpush1.msra.mxu0 %v441
      %504 = vmatprep.subr.mxu0 0.0
      %505 = vmatpush1.msra.mxu0 %v442
      %506 = vmatprep.subr.mxu0 0.0
      %507 = vmatpush1.msra.mxu0 %v443
      %508 = vmatprep.mubr.f32.mxu0 %v409
      %509 = vmatmul.mubr.f32.gmra.mrb[0].mxu0 %v408
      %v510 = vpop.f32.mrb[0].mxu0
      %v511 = vadd.f32 0.0, %v510
      %v512 = vpop.f32.mrb[0].mxu0
      %513 = vmatprep.mubr.f32.mxu0 %v411
      %514 = vmatmul.mubr.f32.gmra.mrb[0].mxu0 %v410
      %v515 = vpop.f32.mrb[0].mxu0
      %v516 = vadd.f32 0.0, %v515
      %v517 = vpop.f32.mrb[0].mxu0
      %518 = vdwg.mxu0
      %v519 = vld [vmem:[%s2] sm:$0xff]
      %v520 = vld [vmem:[%s2 + $0x8] sm:$0xff]
      %522 = vset.pattern.permute.xlu0 0
      %523 = vperm.xlu0 %522, %v519
      %v524 = vpop.permute.xlu0 %523
      %527 = vset.pattern.permute.xlu0 0
      %528 = vperm.xlu0 %527, %v520
      %v529 = vpop.permute.xlu0 %528
      %v531 = vmul.f32 %v511, %v524
      %v532 = vmul.f32 %v516, %v529
      %v533 = vld [vmem:[%s3] sm:$0xff]
      %v534 = vld [vmem:[%s3 + $0x8] sm:$0xff]
      %536 = vset.pattern.permute.xlu0 0
      %537 = vperm.xlu0 %536, %v533
      %v538 = vpop.permute.xlu0 %537
      %541 = vset.pattern.permute.xlu0 0
      %542 = vperm.xlu0 %541, %v534
      %v543 = vpop.permute.xlu0 %542
      %v545 = vadd.f32 %v531, %v538
      %v546 = vadd.f32 %v532, %v543
      %v547 = vmax.f32 %v545, 0.0
      %v548 = vmax.f32 %v546, 0.0
      %v549 = vld [vmem:[%s4] sm:$0xf]
      %v550 = vld [vmem:[%s4 + $0x4] sm:$0xf]
      %v551 = vld [vmem:[%s4 + $0x8] sm:$0xf]
      %v552 = vld [vmem:[%s4 + $0xc] sm:$0xf]
      %v553 = vpack.c.bf16 %v548, %v547
      %v558 = vunpack.c.l.b16 %v549
      %v559 = vunpack.c.l.b16 %v550
      %v560 = vunpack.c.l.b16 %v551
      %v561 = vunpack.c.l.b16 %v552
      %v562 = vpack.c.b16 %v559, %v558
      %v563 = vpack.c.b16 %v561, %v560
      %vm564 = vcmask 130048
      %v566 = vsel %vm564, %v562, 0
      %v569 = vsel %vm564, %v563, 0
      %571 = vmatprep.subr.bf16.mxu0 0
      %572 = vmatpush1.bf16.msra.mxu0 %v553
      %573 = vmatprep.subr.bf16.mxu0 0
      %574 = vmatpush1.bf16.msra.mxu0 0
      %575 = vmatprep.subr.bf16.mxu0 0
      %576 = vmatpush1.bf16.msra.mxu0 0
      %577 = vmatprep.subr.bf16.mxu0 0
      %578 = vmatpush1.bf16.msra.mxu0 0
      %579 = vmatprep.subr.bf16.mxu0 0
      %580 = vmatpush1.bf16.msra.mxu0 0
      %581 = vmatprep.subr.bf16.mxu0 0
      %582 = vmatpush1.bf16.msra.mxu0 0
      %583 = vmatprep.subr.bf16.mxu0 0
      %584 = vmatpush1.bf16.msra.mxu0 0
      %585 = vmatprep.subr.bf16.mxu0 0
      %586 = vmatpush1.bf16.msra.mxu0 0
      %587 = vmatprep.subr.bf16.mxu0 0
      %588 = vmatpush1.bf16.msra.mxu0 0
      %589 = vmatprep.subr.bf16.mxu0 0
      %590 = vmatpush1.bf16.msra.mxu0 0
      %591 = vmatprep.subr.bf16.mxu0 0
      %592 = vmatpush1.bf16.msra.mxu0 0
      %593 = vmatprep.subr.bf16.mxu0 0
      %594 = vmatpush1.bf16.msra.mxu0 0
      %595 = vmatprep.subr.bf16.mxu0 0
      %596 = vmatpush1.bf16.msra.mxu0 0
      %597 = vmatprep.subr.bf16.mxu0 0
      %598 = vmatpush1.bf16.msra.mxu0 0
      %599 = vmatprep.subr.bf16.mxu0 0
      %600 = vmatpush1.bf16.msra.mxu0 0
      %601 = vmatprep.subr.bf16.mxu0 0
      %602 = vmatpush1.bf16.msra.mxu0 0
      %603 = vmatprep.mubr.bf16.mxu0 0
      %604 = vmatmul.mubr.bf16.gmra.mrb[0].mxu0 %v566
      %v605 = vpop.f32.mrb[0].mxu0
      %v606 = vadd.f32 0.0, %v605
      %v607 = vpop.f32.mrb[0].mxu0
      %v608 = vpop.f32.mrb[0].mxu0
      %v609 = vadd.f32 0.0, %v608
      %v610 = vpop.f32.mrb[0].mxu0
      %611 = vmatprep.mubr.bf16.mxu0 0
      %612 = vmatmul.mubr.bf16.gmra.mrb[0].mxu0 %v569
      %v613 = vpop.f32.mrb[0].mxu0
      %v614 = vadd.f32 0.0, %v613
      %v615 = vpop.f32.mrb[0].mxu0
      %v616 = vpop.f32.mrb[0].mxu0
      %v617 = vadd.f32 0.0, %v616
      %v618 = vpop.f32.mrb[0].mxu0
      %619 = vdwg.mxu0
      %v620 = vld [vmem:[%s5] sm:$0xff]
      %v621 = vld [vmem:[%s5 + $0x8] sm:$0xff]
      %v622 = vld [vmem:[%s5 + $0x10] sm:$0xff]
      %v623 = vld [vmem:[%s5 + $0x18] sm:$0xff]
      %v624 = vld [vmem:[%s5 + $0x20] sm:$0xff]
      %v625 = vld [vmem:[%s5 + $0x28] sm:$0xff]
      %v626 = vld [vmem:[%s5 + $0x30] sm:$0xff]
      %v627 = vld [vmem:[%s5 + $0x38] sm:$0xff]
      %v628 = vld [vmem:[%s5 + $0x40] sm:$0xff]
      %v629 = vld [vmem:[%s5 + $0x48] sm:$0xff]
      %v630 = vld [vmem:[%s5 + $0x50] sm:$0xff]
      %v631 = vld [vmem:[%s5 + $0x58] sm:$0xff]
      %v632 = vld [vmem:[%s5 + $0x60] sm:$0xff]
      %v633 = vld [vmem:[%s5 + $0x68] sm:$0xff]
      %v634 = vld [vmem:[%s5 + $0x70] sm:$0xff]
      %v635 = vld [vmem:[%s5 + $0x78] sm:$0xff]
      %v636 = vld [vmem:[%s5 + $0x80] sm:$0xff]
      %v637 = vld [vmem:[%s5 + $0x88] sm:$0xff]
      %v638 = vld [vmem:[%s5 + $0x90] sm:$0xff]
      %v639 = vld [vmem:[%s5 + $0x98] sm:$0xff]
      %v640 = vld [vmem:[%s5 + $0xa0] sm:$0xff]
      %v641 = vld [vmem:[%s5 + $0xa8] sm:$0xff]
      %v642 = vld [vmem:[%s5 + $0xb0] sm:$0xff]
      %v643 = vld [vmem:[%s5 + $0xb8] sm:$0xff]
      %v644 = vld [vmem:[%s5 + $0xc0] sm:$0xff]
      %v645 = vld [vmem:[%s5 + $0xc8] sm:$0xff]
      %v646 = vld [vmem:[%s5 + $0xd0] sm:$0xff]
      %v647 = vld [vmem:[%s5 + $0xd8] sm:$0xff]
      %v648 = vld [vmem:[%s5 + $0xe0] sm:$0xff]
      %v649 = vld [vmem:[%s5 + $0xe8] sm:$0xff]
      %v650 = vld [vmem:[%s5 + $0xf0] sm:$0xff]
      %v651 = vld [vmem:[%s5 + $0xf8] sm:$0xff]
      %v652 = vld [vmem:[%s401] sm:$0xff]
      %v653 = vld [vmem:[%s401 + $0x8] sm:$0xff]
      %v654 = vld [vmem:[%s401 + $0x10] sm:$0xff]
      %v655 = vld [vmem:[%s401 + $0x18] sm:$0xff]
      %v656 = vld [vmem:[%s401 + $0x20] sm:$0xff]
      %v657 = vld [vmem:[%s401 + $0x28] sm:$0xff]
      %v658 = vld [vmem:[%s401 + $0x30] sm:$0xff]
      %v659 = vld [vmem:[%s401 + $0x38] sm:$0xff]
      %660 = vmatprep.subr.mxu0 %v621
      %661 = vmatpush1.msra.mxu0 %v620
      %662 = vmatprep.subr.mxu0 %v623
      %663 = vmatpush1.msra.mxu0 %v622
      %664 = vmatprep.subr.mxu0 %v625
      %665 = vmatpush1.msra.mxu0 %v624
      %666 = vmatprep.subr.mxu0 %v627
      %667 = vmatpush1.msra.mxu0 %v626
      %668 = vmatprep.subr.mxu0 %v629
      %669 = vmatpush1.msra.mxu0 %v628
      %670 = vmatprep.subr.mxu0 %v631
      %671 = vmatpush1.msra.mxu0 %v630
      %672 = vmatprep.subr.mxu0 %v633
      %673 = vmatpush1.msra.mxu0 %v632
      %674 = vmatprep.subr.mxu0 %v635
      %675 = vmatpush1.msra.mxu0 %v634
      %676 = vmatprep.subr.mxu0 %v637
      %677 = vmatpush1.msra.mxu0 %v636
      %678 = vmatprep.subr.mxu0 %v639
      %679 = vmatpush1.msra.mxu0 %v638
      %680 = vmatprep.subr.mxu0 %v641
      %681 = vmatpush1.msra.mxu0 %v640
      %682 = vmatprep.subr.mxu0 %v643
      %683 = vmatpush1.msra.mxu0 %v642
      %684 = vmatprep.subr.mxu0 %v645
      %685 = vmatpush1.msra.mxu0 %v644
      %686 = vmatprep.subr.mxu0 %v647
      %687 = vmatpush1.msra.mxu0 %v646
      %688 = vmatprep.subr.mxu0 %v649
      %689 = vmatpush1.msra.mxu0 %v648
      %690 = vmatprep.subr.mxu0 %v651
      %691 = vmatpush1.msra.mxu0 %v650
      %692 = vmatprep.subr.mxu0 0.0
      %693 = vmatpush1.msra.mxu0 0.0
      %694 = vmatprep.subr.mxu0 0.0
      %695 = vmatpush1.msra.mxu0 0.0
      %696 = vmatprep.subr.mxu0 0.0
      %697 = vmatpush1.msra.mxu0 0.0
      %698 = vmatprep.subr.mxu0 0.0
      %699 = vmatpush1.msra.mxu0 0.0
      %700 = vmatprep.subr.mxu0 0.0
      %701 = vmatpush1.msra.mxu0 0.0
      %702 = vmatprep.subr.mxu0 0.0
      %703 = vmatpush1.msra.mxu0 0.0
      %704 = vmatprep.subr.mxu0 0.0
      %705 = vmatpush1.msra.mxu0 0.0
      %706 = vmatprep.subr.mxu0 0.0
      %707 = vmatpush1.msra.mxu0 0.0
      %708 = vmatprep.subr.mxu0 0.0
      %709 = vmatpush1.msra.mxu0 0.0
      %710 = vmatprep.subr.mxu0 0.0
      %711 = vmatpush1.msra.mxu0 0.0
      %712 = vmatprep.subr.mxu0 0.0
      %713 = vmatpush1.msra.mxu0 0.0
      %714 = vmatprep.subr.mxu0 0.0
      %715 = vmatpush1.msra.mxu0 0.0
      %716 = vmatprep.subr.mxu0 0.0
      %717 = vmatpush1.msra.mxu0 0.0
      %718 = vmatprep.subr.mxu0 0.0
      %719 = vmatpush1.msra.mxu0 0.0
      %720 = vmatprep.subr.mxu0 0.0
      %721 = vmatpush1.msra.mxu0 0.0
      %722 = vmatprep.subr.mxu0 0.0
      %723 = vmatpush1.msra.mxu0 0.0
      %724 = vmatprep.mubr.f32.mxu0 0.0
      %725 = vmatmul.mubr.f32.gmra.mrb[0].mxu0 %v606
      %v726 = vpop.f32.mrb[0].mxu0
      %v727 = vadd.f32 %v652, %v726
      %v728 = vpop.f32.mrb[0].mxu0
      %v729 = vadd.f32 %v653, %v728
      %730 = vmatprep.mubr.f32.mxu0 0.0
      %731 = vmatmul.mubr.f32.gmra.mrb[0].mxu0 %v609
      %v732 = vpop.f32.mrb[0].mxu0
      %v733 = vadd.f32 %v654, %v732
      %v734 = vpop.f32.mrb[0].mxu0
      %v735 = vadd.f32 %v655, %v734
      %736 = vmatprep.mubr.f32.mxu0 0.0
      %737 = vmatmul.mubr.f32.gmra.mrb[0].mxu0 %v614
      %v738 = vpop.f32.mrb[0].mxu0
      %v739 = vadd.f32 %v656, %v738
      %v740 = vpop.f32.mrb[0].mxu0
      %v741 = vadd.f32 %v657, %v740
      %742 = vmatprep.mubr.f32.mxu0 0.0
      %743 = vmatmul.mubr.f32.gmra.mrb[0].mxu0 %v617
      %v744 = vpop.f32.mrb[0].mxu0
      %v745 = vadd.f32 %v658, %v744
      %v746 = vpop.f32.mrb[0].mxu0
      %v747 = vadd.f32 %v659, %v746
      %748 = vdwg.mxu0
      %v749 = vld [vmem:[%s7] sm:$0xff]
      %v750 = vld [vmem:[%s7 + $0x8] sm:$0xff]
      %v751 = vld [vmem:[%s7 + $0x10] sm:$0xff]
      %v752 = vld [vmem:[%s7 + $0x18] sm:$0xff]
      %754 = vset.pattern.permute.xlu0 0
      %755 = vperm.xlu0 %754, %v749
      %v756 = vpop.permute.xlu0 %755
      %759 = vset.pattern.permute.xlu0 0
      %760 = vperm.xlu0 %759, %v750
      %v761 = vpop.permute.xlu0 %760
      %764 = vset.pattern.permute.xlu0 0
      %765 = vperm.xlu0 %764, %v751
      %v766 = vpop.permute.xlu0 %765
      %769 = vset.pattern.permute.xlu0 0
      %770 = vperm.xlu0 %769, %v752
      %v771 = vpop.permute.xlu0 %770
      %v773 = vmul.f32 %v727, %v756
      %v774 = vmul.f32 %v729, %v756
      %v775 = vmul.f32 %v733, %v761
      %v776 = vmul.f32 %v735, %v761
      %v777 = vmul.f32 %v739, %v766
      %v778 = vmul.f32 %v741, %v766
      %v779 = vmul.f32 %v745, %v771
      %v780 = vmul.f32 %v747, %v771
      %v781 = vld [vmem:[%s8] sm:$0xff]
      %v782 = vld [vmem:[%s8 + $0x8] sm:$0xff]
      %v783 = vld [vmem:[%s8 + $0x10] sm:$0xff]
      %v784 = vld [vmem:[%s8 + $0x18] sm:$0xff]
      %786 = vset.pattern.permute.xlu0 0
      %787 = vperm.xlu0 %786, %v781
      %v788 = vpop.permute.xlu0 %787
      %791 = vset.pattern.permute.xlu0 0
      %792 = vperm.xlu0 %791, %v782
      %v793 = vpop.permute.xlu0 %792
      %796 = vset.pattern.permute.xlu0 0
      %797 = vperm.xlu0 %796, %v783
      %v798 = vpop.permute.xlu0 %797
      %801 = vset.pattern.permute.xlu0 0
      %802 = vperm.xlu0 %801, %v784
      %v803 = vpop.permute.xlu0 %802
      %v805 = vadd.f32 %v773, %v788
      %v806 = vadd.f32 %v774, %v788
      %v807 = vadd.f32 %v775, %v793
      %v808 = vadd.f32 %v776, %v793
      %v809 = vadd.f32 %v777, %v798
      %v810 = vadd.f32 %v778, %v798
      %v811 = vadd.f32 %v779, %v803
      %v812 = vadd.f32 %v780, %v803
      %v813 = vmax.f32 %v805, 0.0
      %v814 = vmax.f32 %v806, 0.0
      %v815 = vmax.f32 %v807, 0.0
      %v816 = vmax.f32 %v808, 0.0
      %v817 = vmax.f32 %v809, 0.0
      %v818 = vmax.f32 %v810, 0.0
      %v819 = vmax.f32 %v811, 0.0
      %v820 = vmax.f32 %v812, 0.0
      %vm821 = vcmask 138240
      %822 = vst.msk [vmem:[#allocation2] sm:$0xff] %vm821, 0
      %823 = vst.msk [vmem:[#allocation2 + $0x18] sm:$0xff] %vm821, 0
      %vm824 = vcmask 277640
      %825 = vst.msk [vmem:[#allocation2 + $0x10] sm:$0xff] %vm824, 0
      %826 = vst.msk [vmem:[#allocation2 + $0x28] sm:$0xff] %vm824, 0
      %v827 = vpack.c.bf16 %v815, %v813
      %v828 = vpack.c.bf16 %v816, %v814
      %v829 = vpack.c.bf16 %v819, %v817
      %v830 = vpack.c.bf16 %v820, %v818
      %835 = vrot.lane.b32.xlu0 %v827, 17
      %v836 = vpop.permute.xlu0 %835
      %837 = vrot.lane.b32.xlu0 %v828, 17
      %v838 = vpop.permute.xlu0 %837
      %839 = vrot.lane.b32.xlu0 %v829, 17
      %v840 = vpop.permute.xlu0 %839
      %841 = vrot.lane.b32.xlu0 %v830, 17
      %v842 = vpop.permute.xlu0 %841
      %vm843 = vcmask 138240
      %v844 = vsel %vm843, %v836, %v838
      %v845 = vsel %vm843, %v840, %v842
      %vm852 = vcmask 1047688
      %853 = vst.msk [vmem:[#allocation2] sm:$0xff] %vm852, %v836
      %854 = vst [vmem:[#allocation2 + $0x8] sm:$0xff] %v844
      %855 = vst.msk [vmem:[#allocation2 + $0x10] sm:$0xff] %vm821, %v838
      %856 = vst.msk [vmem:[#allocation2 + $0x18] sm:$0xff] %vm852, %v840
      %857 = vst [vmem:[#allocation2 + $0x20] sm:$0xff] %v845
      %858 = vst.msk [vmem:[#allocation2 + $0x28] sm:$0xff] %vm821, %v842
      %v859 = vld [vmem:[#allocation2] sm:$0xff]
      %v860 = vld [vmem:[#allocation2 + $0x8] sm:$0xff]
      %v861 = vld [vmem:[#allocation2 + $0x18] sm:$0xff]
      %v862 = vld [vmem:[#allocation2 + $0x20] sm:$0xff]
      %v863 = vld [vmem:[%s10] sm:$0x3]
      %v866 = vunpack.c.l.s4 1966171168
      %v867 = vunpack.c.0.s8 %v866
      %v868 = vlaneseq
      %v869 = vshrl.u32 %v868, 7
      %v870 = vsub.s32 %v867, %v869
      %v871 = vrot.slane %v863, %v870
      %v872 = vcombine.high %v871, %v871
      %v874 = vunpack.c.l.s4 1966171168
      %v875 = vunpack.c.0.s8 %v874
      %v876 = vlaneseq
      %v877 = vshrl.u32 %v876, 7
      %v878 = vsub.s32 %v875, %v877
      %v879 = vrot.slane %v871, %v878
      %v881 = vunpack.c.l.s4 1966171168
      %v882 = vunpack.c.0.s8 %v881
      %v883 = vlaneseq
      %v884 = vshrl.u32 %v883, 7
      %v885 = vsub.s32 %v882, %v884
      %v886 = vrot.slane %v872, %v885
      %v888 = vpack.i.b16 %v879, %v879
      %v890 = vlaneseq
      %v891 = vshrl.u32 %v890, 7
      %v892 = vsub.s32 0, %v891
      %v893 = vrot.slane %v888, %v892
      %v895 = vpack.i.b16 %v886, %v886
      %v897 = vlaneseq
      %v898 = vshrl.u32 %v897, 7
      %v899 = vsub.s32 0, %v898
      %v900 = vrot.slane %v895, %v899
      %v901 = vmul.bf16 %v859, %v893
      %v902 = vmul.bf16 %v860, %v900
      %v903 = vmul.bf16 %v861, %v893
      %v904 = vmul.bf16 %v862, %v900
      %905 = vst [vmem:[#allocation3] sm:$0xff] %v901
      %906 = vst [vmem:[#allocation3 + $0x8] sm:$0xff] %v902
      %907 = vst [vmem:[#allocation3 + $0x10] sm:$0xff] %v903
      %908 = vst [vmem:[#allocation3 + $0x18] sm:$0xff] %v904
      %v909 = vld [vmem:[#allocation2] sm:$0xff]
      %v910 = vld [vmem:[#allocation2 + $0x8] sm:$0xff]
      %v911 = vld [vmem:[#allocation2 + $0x10] sm:$0xff]
      %v912 = vld [vmem:[#allocation2 + $0x18] sm:$0xff]
      %v913 = vld [vmem:[#allocation2 + $0x20] sm:$0xff]
      %v914 = vld [vmem:[#allocation2 + $0x28] sm:$0xff]
      %s915 = scalar_lea.vmem %s10, 2
      %v916 = vld [vmem:[%s915] sm:$0x3]
      %v919 = vunpack.c.l.s4 1966171168
      %v920 = vunpack.c.0.s8 %v919
      %v921 = vlaneseq
      %v922 = vshrl.u32 %v921, 7
      %v923 = vsub.s32 %v920, %v922
      %v924 = vrot.slane %v916, %v923
      %v925 = vcombine.high %v924, %v924
      %v927 = vunpack.c.l.s4 1966171168
      %v928 = vunpack.c.0.s8 %v927
      %v929 = vlaneseq
      %v930 = vshrl.u32 %v929, 7
      %v931 = vsub.s32 %v928, %v930
      %v932 = vrot.slane %v924, %v931
      %v934 = vunpack.c.l.s4 1966171168
      %v935 = vunpack.c.0.s8 %v934
      %v936 = vlaneseq
      %v937 = vshrl.u32 %v936, 7
      %v938 = vsub.s32 %v935, %v937
      %v939 = vrot.slane %v925, %v938
      %v941 = vpack.i.b16 %v932, %v932
      %v943 = vlaneseq
      %v944 = vshrl.u32 %v943, 7
      %v945 = vsub.s32 0, %v944
      %v946 = vrot.slane %v941, %v945
      %v948 = vpack.i.b16 %v939, %v939
      %v950 = vlaneseq
      %v951 = vshrl.u32 %v950, 7
      %v952 = vsub.s32 0, %v951
      %v953 = vrot.slane %v948, %v952
      %956 = vrot.lane.b32.xlu0 %v946, 1
      %v957 = vpop.permute.xlu0 %956
      %958 = vrot.lane.b32.xlu0 %v953, 1
      %v959 = vpop.permute.xlu0 %958
      %vm960 = vcmask 7168
      %v961 = vsel %vm960, %v957, %v959
      %v965 = vmul.bf16 %v909, %v957
      %v966 = vmul.bf16 %v910, %v961
      %v967 = vmul.bf16 %v911, %v959
      %v968 = vmul.bf16 %v912, %v957
      %v969 = vmul.bf16 %v913, %v961
      %v970 = vmul.bf16 %v914, %v959
      %977 = vrot.lane.b32.xlu0 %v965, 127
      %v978 = vpop.permute.xlu0 %977
      %979 = vrot.lane.b32.xlu0 %v966, 127
      %v980 = vpop.permute.xlu0 %979
      %981 = vrot.lane.b32.xlu0 %v967, 127
      %v982 = vpop.permute.xlu0 %981
      %983 = vrot.lane.b32.xlu0 %v968, 127
      %v984 = vpop.permute.xlu0 %983
      %985 = vrot.lane.b32.xlu0 %v969, 127
      %v986 = vpop.permute.xlu0 %985
      %987 = vrot.lane.b32.xlu0 %v970, 127
      %v988 = vpop.permute.xlu0 %987
      %vm989 = vcmask 1039360
      %v990 = vsel %vm989, %v978, %v980
      %v991 = vsel %vm989, %v980, %v982
      %v992 = vsel %vm989, %v984, %v986
      %v993 = vsel %vm989, %v986, %v988
      %998 = vst [vmem:[#allocation3 + $0x20] sm:$0xff] %v990
      %999 = vst [vmem:[#allocation3 + $0x28] sm:$0xff] %v991
      %1000 = vst [vmem:[#allocation3 + $0x30] sm:$0xff] %v992
      %1001 = vst [vmem:[#allocation3 + $0x38] sm:$0xff] %v993
      %v1002 = vld [vmem:[#allocation2] sm:$0xff]
      %v1003 = vld [vmem:[#allocation2 + $0x8] sm:$0xff]
      %v1004 = vld [vmem:[#allocation2 + $0x10] sm:$0xff]
      %v1005 = vld [vmem:[#allocation2 + $0x18] sm:$0xff]
      %v1006 = vld [vmem:[#allocation2 + $0x20] sm:$0xff]
      %v1007 = vld [vmem:[#allocation2 + $0x28] sm:$0xff]
      %s1008 = scalar_lea.vmem %s10, 4
      %v1009 = vld [vmem:[%s1008] sm:$0x3]
      %v1012 = vunpack.c.l.s4 1966171168
      %v1013 = vunpack.c.0.s8 %v1012
      %v1014 = vlaneseq
      %v1015 = vshrl.u32 %v1014, 7
      %v1016 = vsub.s32 %v1013, %v1015
      %v1017 = vrot.slane %v1009, %v1016
      %v1018 = vcombine.high %v1017, %v1017
      %v1020 = vunpack.c.l.s4 1966171168
      %v1021 = vunpack.c.0.s8 %v1020
      %v1022 = vlaneseq
      %v1023 = vshrl.u32 %v1022, 7
      %v1024 = vsub.s32 %v1021, %v1023
      %v1025 = vrot.slane %v1017, %v1024
      %v1027 = vunpack.c.l.s4 1966171168
      %v1028 = vunpack.c.0.s8 %v1027
      %v1029 = vlaneseq
      %v1030 = vshrl.u32 %v1029, 7
      %v1031 = vsub.s32 %v1028, %v1030
      %v1032 = vrot.slane %v1018, %v1031
      %v1034 = vpack.i.b16 %v1025, %v1025
      %v1036 = vlaneseq
      %v1037 = vshrl.u32 %v1036, 7
      %v1038 = vsub.s32 0, %v1037
      %v1039 = vrot.slane %v1034, %v1038
      %v1041 = vpack.i.b16 %v1032, %v1032
      %v1043 = vlaneseq
      %v1044 = vshrl.u32 %v1043, 7
      %v1045 = vsub.s32 0, %v1044
      %v1046 = vrot.slane %v1041, %v1045
      %1049 = vrot.lane.b32.xlu0 %v1039, 2
      %v1050 = vpop.permute.xlu0 %1049
      %1051 = vrot.lane.b32.xlu0 %v1046, 2
      %v1052 = vpop.permute.xlu0 %1051
      %vm1053 = vcmask 15360
      %v1054 = vsel %vm1053, %v1050, %v1052
      %v1058 = vmul.bf16 %v1002, %v1050
      %v1059 = vmul.bf16 %v1003, %v1054
      %v1060 = vmul.bf16 %v1004, %v1052
      %v1061 = vmul.bf16 %v1005, %v1050
      %v1062 = vmul.bf16 %v1006, %v1054
      %v1063 = vmul.bf16 %v1007, %v1052
      %1070 = vrot.lane.b32.xlu0 %v1058, 126
      %v1071 = vpop.permute.xlu0 %1070
      %1072 = vrot.lane.b32.xlu0 %v1059, 126
      %v1073 = vpop.permute.xlu0 %1072
      %1074 = vrot.lane.b32.xlu0 %v1060, 126
      %v1075 = vpop.permute.xlu0 %1074
      %1076 = vrot.lane.b32.xlu0 %v1061, 126
      %v1077 = vpop.permute.xlu0 %1076
      %1078 = vrot.lane.b32.xlu0 %v1062, 126
      %v1079 = vpop.permute.xlu0 %1078
      %1080 = vrot.lane.b32.xlu0 %v1063, 126
      %v1081 = vpop.permute.xlu0 %1080
      %vm1082 = vcmask 1031168
      %v1083 = vsel %vm1082, %v1071, %v1073
      %v1084 = vsel %vm1082, %v1073, %v1075
      %v1085 = vsel %vm1082, %v1077, %v1079
      %v1086 = vsel %vm1082, %v1079, %v1081
      %1091 = vst [vmem:[#allocation3 + $0x40] sm:$0xff] %v1083
      %1092 = vst [vmem:[#allocation3 + $0x48] sm:$0xff] %v1084
      %1093 = vst [vmem:[#allocation3 + $0x50] sm:$0xff] %v1085
      %1094 = vst [vmem:[#allocation3 + $0x58] sm:$0xff] %v1086
      %v1095 = vld [vmem:[#allocation2] sm:$0xff]
      %v1096 = vld [vmem:[#allocation2 + $0x8] sm:$0xff]
      %v1097 = vld [vmem:[#allocation2 + $0x10] sm:$0xff]
      %v1098 = vld [vmem:[#allocation2 + $0x18] sm:$0xff]
      %v1099 = vld [vmem:[#allocation2 + $0x20] sm:$0xff]
      %v1100 = vld [vmem:[#allocation2 + $0x28] sm:$0xff]
      %s1101 = scalar_lea.vmem %s10, 6
      %v1102 = vld [vmem:[%s1101] sm:$0x3]
      %v1105 = vunpack.c.l.s4 1966171168
      %v1106 = vunpack.c.0.s8 %v1105
      %v1107 = vlaneseq
      %v1108 = vshrl.u32 %v1107, 7
      %v1109 = vsub.s32 %v1106, %v1108
      %v1110 = vrot.slane %v1102, %v1109
      %v1111 = vcombine.high %v1110, %v1110
      %v1113 = vunpack.c.l.s4 1966171168
      %v1114 = vunpack.c.0.s8 %v1113
      %v1115 = vlaneseq
      %v1116 = vshrl.u32 %v1115, 7
      %v1117 = vsub.s32 %v1114, %v1116
      %v1118 = vrot.slane %v1110, %v1117
      %v1120 = vunpack.c.l.s4 1966171168
      %v1121 = vunpack.c.0.s8 %v1120
      %v1122 = vlaneseq
      %v1123 = vshrl.u32 %v1122, 7
      %v1124 = vsub.s32 %v1121, %v1123
      %v1125 = vrot.slane %v1111, %v1124
      %v1127 = vpack.i.b16 %v1118, %v1118
      %v1129 = vlaneseq
      %v1130 = vshrl.u32 %v1129, 7
      %v1131 = vsub.s32 0, %v1130
      %v1132 = vrot.slane %v1127, %v1131
      %v1134 = vpack.i.b16 %v1125, %v1125
      %v1136 = vlaneseq
      %v1137 = vshrl.u32 %v1136, 7
      %v1138 = vsub.s32 0, %v1137
      %v1139 = vrot.slane %v1134, %v1138
      %1142 = vrot.lane.b32.xlu0 %v1132, 16
      %v1143 = vpop.permute.xlu0 %1142
      %1144 = vrot.lane.b32.xlu0 %v1139, 16
      %v1145 = vpop.permute.xlu0 %1144
      %vm1146 = vcmask 130048
      %v1147 = vsel %vm1146, %v1143, %v1145
      %v1151 = vmul.bf16 %v1095, %v1143
      %v1152 = vmul.bf16 %v1096, %v1147
      %v1153 = vmul.bf16 %v1097, %v1145
      %v1154 = vmul.bf16 %v1098, %v1143
      %v1155 = vmul.bf16 %v1099, %v1147
      %v1156 = vmul.bf16 %v1100, %v1145
      %1163 = vrot.lane.b32.xlu0 %v1151, 112
      %v1164 = vpop.permute.xlu0 %1163
      %1165 = vrot.lane.b32.xlu0 %v1152, 112
      %v1166 = vpop.permute.xlu0 %1165
      %1167 = vrot.lane.b32.xlu0 %v1153, 112
      %v1168 = vpop.permute.xlu0 %1167
      %1169 = vrot.lane.b32.xlu0 %v1154, 112
      %v1170 = vpop.permute.xlu0 %1169
      %1171 = vrot.lane.b32.xlu0 %v1155, 112
      %v1172 = vpop.permute.xlu0 %1171
      %1173 = vrot.lane.b32.xlu0 %v1156, 112
      %v1174 = vpop.permute.xlu0 %1173
      %vm1175 = vcmask 916480
      %v1176 = vsel %vm1175, %v1164, %v1166
      %v1177 = vsel %vm1175, %v1166, %v1168
      %v1178 = vsel %vm1175, %v1170, %v1172
      %v1179 = vsel %vm1175, %v1172, %v1174
      %1184 = vst [vmem:[#allocation3 + $0x60] sm:$0xff] %v1176
      %1185 = vst [vmem:[#allocation3 + $0x68] sm:$0xff] %v1177
      %1186 = vst [vmem:[#allocation3 + $0x70] sm:$0xff] %v1178
      %1187 = vst [vmem:[#allocation3 + $0x78] sm:$0xff] %v1179
      %v1188 = vld [vmem:[#allocation2] sm:$0xff]
      %v1189 = vld [vmem:[#allocation2 + $0x8] sm:$0xff]
      %v1190 = vld [vmem:[#allocation2 + $0x10] sm:$0xff]
      %v1191 = vld [vmem:[#allocation2 + $0x18] sm:$0xff]
      %v1192 = vld [vmem:[#allocation2 + $0x20] sm:$0xff]
      %v1193 = vld [vmem:[#allocation2 + $0x28] sm:$0xff]
      %s1194 = scalar_lea.vmem %s10, 8
      %v1195 = vld [vmem:[%s1194] sm:$0x3]
      %v1198 = vunpack.c.l.s4 1966171168
      %v1199 = vunpack.c.0.s8 %v1198
      %v1200 = vlaneseq
      %v1201 = vshrl.u32 %v1200, 7
      %v1202 = vsub.s32 %v1199, %v1201
      %v1203 = vrot.slane %v1195, %v1202
      %v1204 = vcombine.high %v1203, %v1203
      %v1206 = vunpack.c.l.s4 1966171168
      %v1207 = vunpack.c.0.s8 %v1206
      %v1208 = vlaneseq
      %v1209 = vshrl.u32 %v1208, 7
      %v1210 = vsub.s32 %v1207, %v1209
      %v1211 = vrot.slane %v1203, %v1210
      %v1213 = vunpack.c.l.s4 1966171168
      %v1214 = vunpack.c.0.s8 %v1213
      %v1215 = vlaneseq
      %v1216 = vshrl.u32 %v1215, 7
      %v1217 = vsub.s32 %v1214, %v1216
      %v1218 = vrot.slane %v1204, %v1217
      %v1220 = vpack.i.b16 %v1211, %v1211
      %v1222 = vlaneseq
      %v1223 = vshrl.u32 %v1222, 7
      %v1224 = vsub.s32 0, %v1223
      %v1225 = vrot.slane %v1220, %v1224
      %v1227 = vpack.i.b16 %v1218, %v1218
      %v1229 = vlaneseq
      %v1230 = vshrl.u32 %v1229, 7
      %v1231 = vsub.s32 0, %v1230
      %v1232 = vrot.slane %v1227, %v1231
      %1235 = vrot.lane.b32.xlu0 %v1225, 17
      %v1236 = vpop.permute.xlu0 %1235
      %1237 = vrot.lane.b32.xlu0 %v1232, 17
      %v1238 = vpop.permute.xlu0 %1237
      %v1239 = vsel %vm843, %v1236, %v1238
      %v1243 = vmul.bf16 %v1188, %v1236
      %v1244 = vmul.bf16 %v1189, %v1239
      %v1245 = vmul.bf16 %v1190, %v1238
      %v1246 = vmul.bf16 %v1191, %v1236
      %v1247 = vmul.bf16 %v1192, %v1239
      %v1248 = vmul.bf16 %v1193, %v1238
      %1255 = vrot.lane.b32.xlu0 %v1243, 111
      %v1256 = vpop.permute.xlu0 %1255
      %1257 = vrot.lane.b32.xlu0 %v1244, 111
      %v1258 = vpop.permute.xlu0 %1257
      %1259 = vrot.lane.b32.xlu0 %v1245, 111
      %v1260 = vpop.permute.xlu0 %1259
      %1261 = vrot.lane.b32.xlu0 %v1246, 111
      %v1262 = vpop.permute.xlu0 %1261
      %1263 = vrot.lane.b32.xlu0 %v1247, 111
      %v1264 = vpop.permute.xlu0 %1263
      %1265 = vrot.lane.b32.xlu0 %v1248, 111
      %v1266 = vpop.permute.xlu0 %1265
      %vm1267 = vcmask 908288
      %v1268 = vsel %vm1267, %v1256, %v1258
      %v1269 = vsel %vm1267, %v1258, %v1260
      %v1270 = vsel %vm1267, %v1262, %v1264
      %v1271 = vsel %vm1267, %v1264, %v1266
      %1276 = vst [vmem:[#allocation3 + $0x80] sm:$0xff] %v1268
      %1277 = vst [vmem:[#allocation3 + $0x88] sm:$0xff] %v1269
      %1278 = vst [vmem:[#allocation3 + $0x90] sm:$0xff] %v1270
      %1279 = vst [vmem:[#allocation3 + $0x98] sm:$0xff] %v1271
      %v1280 = vld [vmem:[#allocation2] sm:$0xff]
      %v1281 = vld [vmem:[#allocation2 + $0x8] sm:$0xff]
      %v1282 = vld [vmem:[#allocation2 + $0x10] sm:$0xff]
      %v1283 = vld [vmem:[#allocation2 + $0x18] sm:$0xff]
      %v1284 = vld [vmem:[#allocation2 + $0x20] sm:$0xff]
      %v1285 = vld [vmem:[#allocation2 + $0x28] sm:$0xff]
      %s1286 = scalar_lea.vmem %s10, 10
      %v1287 = vld [vmem:[%s1286] sm:$0x3]
      %v1290 = vunpack.c.l.s4 1966171168
      %v1291 = vunpack.c.0.s8 %v1290
      %v1292 = vlaneseq
      %v1293 = vshrl.u32 %v1292, 7
      %v1294 = vsub.s32 %v1291, %v1293
      %v1295 = vrot.slane %v1287, %v1294
      %v1296 = vcombine.high %v1295, %v1295
      %v1298 = vunpack.c.l.s4 1966171168
      %v1299 = vunpack.c.0.s8 %v1298
      %v1300 = vlaneseq
      %v1301 = vshrl.u32 %v1300, 7
      %v1302 = vsub.s32 %v1299, %v1301
      %v1303 = vrot.slane %v1295, %v1302
      %v1305 = vunpack.c.l.s4 1966171168
      %v1306 = vunpack.c.0.s8 %v1305
      %v1307 = vlaneseq
      %v1308 = vshrl.u32 %v1307, 7
      %v1309 = vsub.s32 %v1306, %v1308
      %v1310 = vrot.slane %v1296, %v1309
      %v1312 = vpack.i.b16 %v1303, %v1303
      %v1314 = vlaneseq
      %v1315 = vshrl.u32 %v1314, 7
      %v1316 = vsub.s32 0, %v1315
      %v1317 = vrot.slane %v1312, %v1316
      %v1319 = vpack.i.b16 %v1310, %v1310
      %v1321 = vlaneseq
      %v1322 = vshrl.u32 %v1321, 7
      %v1323 = vsub.s32 0, %v1322
      %v1324 = vrot.slane %v1319, %v1323
      %1327 = vrot.lane.b32.xlu0 %v1317, 18
      %v1328 = vpop.permute.xlu0 %1327
      %1329 = vrot.lane.b32.xlu0 %v1324, 18
      %v1330 = vpop.permute.xlu0 %1329
      %vm1331 = vcmask 146432
      %v1332 = vsel %vm1331, %v1328, %v1330
      %v1336 = vmul.bf16 %v1280, %v1328
      %v1337 = vmul.bf16 %v1281, %v1332
      %v1338 = vmul.bf16 %v1282, %v1330
      %v1339 = vmul.bf16 %v1283, %v1328
      %v1340 = vmul.bf16 %v1284, %v1332
      %v1341 = vmul.bf16 %v1285, %v1330
      %1348 = vrot.lane.b32.xlu0 %v1336, 110
      %v1349 = vpop.permute.xlu0 %1348
      %1350 = vrot.lane.b32.xlu0 %v1337, 110
      %v1351 = vpop.permute.xlu0 %1350
      %1352 = vrot.lane.b32.xlu0 %v1338, 110
      %v1353 = vpop.permute.xlu0 %1352
      %1354 = vrot.lane.b32.xlu0 %v1339, 110
      %v1355 = vpop.permute.xlu0 %1354
      %1356 = vrot.lane.b32.xlu0 %v1340, 110
      %v1357 = vpop.permute.xlu0 %1356
      %1358 = vrot.lane.b32.xlu0 %v1341, 110
      %v1359 = vpop.permute.xlu0 %1358
      %vm1360 = vcmask 900096
      %v1361 = vsel %vm1360, %v1349, %v1351
      %v1362 = vsel %vm1360, %v1351, %v1353
      %v1363 = vsel %vm1360, %v1355, %v1357
      %v1364 = vsel %vm1360, %v1357, %v1359
      %1369 = vst [vmem:[#allocation3 + $0xa0] sm:$0xff] %v1361
      %1370 = vst [vmem:[#allocation3 + $0xa8] sm:$0xff] %v1362
      %1371 = vst [vmem:[#allocation3 + $0xb0] sm:$0xff] %v1363
      %1372 = vst [vmem:[#allocation3 + $0xb8] sm:$0xff] %v1364
      %v1373 = vld [vmem:[#allocation2] sm:$0xff]
      %v1374 = vld [vmem:[#allocation2 + $0x8] sm:$0xff]
      %v1375 = vld [vmem:[#allocation2 + $0x10] sm:$0xff]
      %v1376 = vld [vmem:[#allocation2 + $0x18] sm:$0xff]
      %v1377 = vld [vmem:[#allocation2 + $0x20] sm:$0xff]
      %v1378 = vld [vmem:[#allocation2 + $0x28] sm:$0xff]
      %s1379 = scalar_lea.vmem %s10, 12
      %v1380 = vld [vmem:[%s1379] sm:$0x3]
      %v1383 = vunpack.c.l.s4 1966171168
      %v1384 = vunpack.c.0.s8 %v1383
      %v1385 = vlaneseq
      %v1386 = vshrl.u32 %v1385, 7
      %v1387 = vsub.s32 %v1384, %v1386
      %v1388 = vrot.slane %v1380, %v1387
      %v1389 = vcombine.high %v1388, %v1388
      %v1391 = vunpack.c.l.s4 1966171168
      %v1392 = vunpack.c.0.s8 %v1391
      %v1393 = vlaneseq
      %v1394 = vshrl.u32 %v1393, 7
      %v1395 = vsub.s32 %v1392, %v1394
      %v1396 = vrot.slane %v1388, %v1395
      %v1398 = vunpack.c.l.s4 1966171168
      %v1399 = vunpack.c.0.s8 %v1398
      %v1400 = vlaneseq
      %v1401 = vshrl.u32 %v1400, 7
      %v1402 = vsub.s32 %v1399, %v1401
      %v1403 = vrot.slane %v1389, %v1402
      %v1405 = vpack.i.b16 %v1396, %v1396
      %v1407 = vlaneseq
      %v1408 = vshrl.u32 %v1407, 7
      %v1409 = vsub.s32 0, %v1408
      %v1410 = vrot.slane %v1405, %v1409
      %v1412 = vpack.i.b16 %v1403, %v1403
      %v1414 = vlaneseq
      %v1415 = vshrl.u32 %v1414, 7
      %v1416 = vsub.s32 0, %v1415
      %v1417 = vrot.slane %v1412, %v1416
      %1420 = vrot.lane.b32.xlu0 %v1410, 32
      %v1421 = vpop.permute.xlu0 %1420
      %1422 = vrot.lane.b32.xlu0 %v1417, 32
      %v1423 = vpop.permute.xlu0 %1422
      %vm1424 = vcmask 261120
      %v1425 = vsel %vm1424, %v1421, %v1423
      %v1429 = vmul.bf16 %v1373, %v1421
      %v1430 = vmul.bf16 %v1374, %v1425
      %v1431 = vmul.bf16 %v1375, %v1423
      %v1432 = vmul.bf16 %v1376, %v1421
      %v1433 = vmul.bf16 %v1377, %v1425
      %v1434 = vmul.bf16 %v1378, %v1423
      %1441 = vrot.lane.b32.xlu0 %v1429, 96
      %v1442 = vpop.permute.xlu0 %1441
      %1443 = vrot.lane.b32.xlu0 %v1430, 96
      %v1444 = vpop.permute.xlu0 %1443
      %1445 = vrot.lane.b32.xlu0 %v1431, 96
      %v1446 = vpop.permute.xlu0 %1445
      %1447 = vrot.lane.b32.xlu0 %v1432, 96
      %v1448 = vpop.permute.xlu0 %1447
      %1449 = vrot.lane.b32.xlu0 %v1433, 96
      %v1450 = vpop.permute.xlu0 %1449
      %1451 = vrot.lane.b32.xlu0 %v1434, 96
      %v1452 = vpop.permute.xlu0 %1451
      %vm1453 = vcmask 785408
      %v1454 = vsel %vm1453, %v1442, %v1444
      %v1455 = vsel %vm1453, %v1444, %v1446
      %v1456 = vsel %vm1453, %v1448, %v1450
      %v1457 = vsel %vm1453, %v1450, %v1452
      %1462 = vst [vmem:[#allocation3 + $0xc0] sm:$0xff] %v1454
      %1463 = vst [vmem:[#allocation3 + $0xc8] sm:$0xff] %v1455
      %1464 = vst [vmem:[#allocation3 + $0xd0] sm:$0xff] %v1456
      %1465 = vst [vmem:[#allocation3 + $0xd8] sm:$0xff] %v1457
      %v1466 = vld [vmem:[#allocation2] sm:$0xff]
      %v1467 = vld [vmem:[#allocation2 + $0x8] sm:$0xff]
      %v1468 = vld [vmem:[#allocation2 + $0x10] sm:$0xff]
      %v1469 = vld [vmem:[#allocation2 + $0x18] sm:$0xff]
      %v1470 = vld [vmem:[#allocation2 + $0x20] sm:$0xff]
      %v1471 = vld [vmem:[#allocation2 + $0x28] sm:$0xff]
      %s1472 = scalar_lea.vmem %s10, 14
      %v1473 = vld [vmem:[%s1472] sm:$0x3]
      %v1476 = vunpack.c.l.s4 1966171168
      %v1477 = vunpack.c.0.s8 %v1476
      %v1478 = vlaneseq
      %v1479 = vshrl.u32 %v1478, 7
      %v1480 = vsub.s32 %v1477, %v1479
      %v1481 = vrot.slane %v1473, %v1480
      %v1482 = vcombine.high %v1481, %v1481
      %v1484 = vunpack.c.l.s4 1966171168
      %v1485 = vunpack.c.0.s8 %v1484
      %v1486 = vlaneseq
      %v1487 = vshrl.u32 %v1486, 7
      %v1488 = vsub.s32 %v1485, %v1487
      %v1489 = vrot.slane %v1481, %v1488
      %v1491 = vunpack.c.l.s4 1966171168
      %v1492 = vunpack.c.0.s8 %v1491
      %v1493 = vlaneseq
      %v1494 = vshrl.u32 %v1493, 7
      %v1495 = vsub.s32 %v1492, %v1494
      %v1496 = vrot.slane %v1482, %v1495
      %v1498 = vpack.i.b16 %v1489, %v1489
      %v1500 = vlaneseq
      %v1501 = vshrl.u32 %v1500, 7
      %v1502 = vsub.s32 0, %v1501
      %v1503 = vrot.slane %v1498, %v1502
      %v1505 = vpack.i.b16 %v1496, %v1496
      %v1507 = vlaneseq
      %v1508 = vshrl.u32 %v1507, 7
      %v1509 = vsub.s32 0, %v1508
      %v1510 = vrot.slane %v1505, %v1509
      %1513 = vrot.lane.b32.xlu0 %v1503, 33
      %v1514 = vpop.permute.xlu0 %1513
      %1515 = vrot.lane.b32.xlu0 %v1510, 33
      %v1516 = vpop.permute.xlu0 %1515
      %vm1517 = vcmask 269312
      %v1518 = vsel %vm1517, %v1514, %v1516
      %v1522 = vmul.bf16 %v1466, %v1514
      %v1523 = vmul.bf16 %v1467, %v1518
      %v1524 = vmul.bf16 %v1468, %v1516
      %v1525 = vmul.bf16 %v1469, %v1514
      %v1526 = vmul.bf16 %v1470, %v1518
      %v1527 = vmul.bf16 %v1471, %v1516
      %1534 = vrot.lane.b32.xlu0 %v1522, 95
      %v1535 = vpop.permute.xlu0 %1534
      %1536 = vrot.lane.b32.xlu0 %v1523, 95
      %v1537 = vpop.permute.xlu0 %1536
      %1538 = vrot.lane.b32.xlu0 %v1524, 95
      %v1539 = vpop.permute.xlu0 %1538
      %1540 = vrot.lane.b32.xlu0 %v1525, 95
      %v1541 = vpop.permute.xlu0 %1540
      %1542 = vrot.lane.b32.xlu0 %v1526, 95
      %v1543 = vpop.permute.xlu0 %1542
      %1544 = vrot.lane.b32.xlu0 %v1527, 95
      %v1545 = vpop.permute.xlu0 %1544
      %vm1546 = vcmask 777216
      %v1547 = vsel %vm1546, %v1535, %v1537
      %v1548 = vsel %vm1546, %v1537, %v1539
      %v1549 = vsel %vm1546, %v1541, %v1543
      %v1550 = vsel %vm1546, %v1543, %v1545
      %1555 = vst [vmem:[#allocation3 + $0xe0] sm:$0xff] %v1547
      %1556 = vst [vmem:[#allocation3 + $0xe8] sm:$0xff] %v1548
      %1557 = vst [vmem:[#allocation3 + $0xf0] sm:$0xff] %v1549
      %1558 = vst [vmem:[#allocation3 + $0xf8] sm:$0xff] %v1550
      %v1559 = vld [vmem:[#allocation2] sm:$0xff]
      %v1560 = vld [vmem:[#allocation2 + $0x8] sm:$0xff]
      %v1561 = vld [vmem:[#allocation2 + $0x10] sm:$0xff]
      %v1562 = vld [vmem:[#allocation2 + $0x18] sm:$0xff]
      %v1563 = vld [vmem:[#allocation2 + $0x20] sm:$0xff]
      %v1564 = vld [vmem:[#allocation2 + $0x28] sm:$0xff]
      %s1565 = scalar_lea.vmem %s10, 16
      %v1566 = vld [vmem:[%s1565] sm:$0x3]
      %v1569 = vunpack.c.l.s4 1966171168
      %v1570 = vunpack.c.0.s8 %v1569
      %v1571 = vlaneseq
      %v1572 = vshrl.u32 %v1571, 7
      %v1573 = vsub.s32 %v1570, %v1572
      %v1574 = vrot.slane %v1566, %v1573
      %v1575 = vcombine.high %v1574, %v1574
      %v1577 = vunpack.c.l.s4 1966171168
      %v1578 = vunpack.c.0.s8 %v1577
      %v1579 = vlaneseq
      %v1580 = vshrl.u32 %v1579, 7
      %v1581 = vsub.s32 %v1578, %v1580
      %v1582 = vrot.slane %v1574, %v1581
      %v1584 = vunpack.c.l.s4 1966171168
      %v1585 = vunpack.c.0.s8 %v1584
      %v1586 = vlaneseq
      %v1587 = vshrl.u32 %v1586, 7
      %v1588 = vsub.s32 %v1585, %v1587
      %v1589 = vrot.slane %v1575, %v1588
      %v1591 = vpack.i.b16 %v1582, %v1582
      %v1593 = vlaneseq
      %v1594 = vshrl.u32 %v1593, 7
      %v1595 = vsub.s32 0, %v1594
      %v1596 = vrot.slane %v1591, %v1595
      %v1598 = vpack.i.b16 %v1589, %v1589
      %v1600 = vlaneseq
      %v1601 = vshrl.u32 %v1600, 7
      %v1602 = vsub.s32 0, %v1601
      %v1603 = vrot.slane %v1598, %v1602
      %1606 = vrot.lane.b32.xlu0 %v1596, 34
      %v1607 = vpop.permute.xlu0 %1606
      %1608 = vrot.lane.b32.xlu0 %v1603, 34
      %v1609 = vpop.permute.xlu0 %1608
      %vm1610 = vcmask 277504
      %v1611 = vsel %vm1610, %v1607, %v1609
      %v1615 = vmul.bf16 %v1559, %v1607
      %v1616 = vmul.bf16 %v1560, %v1611
      %v1617 = vmul.bf16 %v1561, %v1609
      %v1618 = vmul.bf16 %v1562, %v1607
      %v1619 = vmul.bf16 %v1563, %v1611
      %v1620 = vmul.bf16 %v1564, %v1609
      %1627 = vrot.lane.b32.xlu0 %v1615, 94
      %v1628 = vpop.permute.xlu0 %1627
      %1629 = vrot.lane.b32.xlu0 %v1616, 94
      %v1630 = vpop.permute.xlu0 %1629
      %1631 = vrot.lane.b32.xlu0 %v1617, 94
      %v1632 = vpop.permute.xlu0 %1631
      %1633 = vrot.lane.b32.xlu0 %v1618, 94
      %v1634 = vpop.permute.xlu0 %1633
      %1635 = vrot.lane.b32.xlu0 %v1619, 94
      %v1636 = vpop.permute.xlu0 %1635
      %1637 = vrot.lane.b32.xlu0 %v1620, 94
      %v1638 = vpop.permute.xlu0 %1637
      %vm1639 = vcmask 769024
      %v1640 = vsel %vm1639, %v1628, %v1630
      %v1641 = vsel %vm1639, %v1630, %v1632
      %v1642 = vsel %vm1639, %v1634, %v1636
      %v1643 = vsel %vm1639, %v1636, %v1638
      %1648 = vst [vmem:[#allocation3 + $0x100] sm:$0xff] %v1640
      %1649 = vst [vmem:[#allocation3 + $0x108] sm:$0xff] %v1641
      %1650 = vst [vmem:[#allocation3 + $0x110] sm:$0xff] %v1642
      %1651 = vst [vmem:[#allocation3 + $0x118] sm:$0xff] %v1643
      %v1652 = vld [vmem:[%s9] sm:$0xff]
      %v1653 = vld [vmem:[%s9 + $0x8] sm:$0xf]
      %v1654 = vld [vmem:[%s9 + $0xc] sm:$0xff]
      %v1655 = vld [vmem:[%s9 + $0x14] sm:$0xf]
      %v1656 = vld [vmem:[%s9 + $0x18] sm:$0xff]
      %v1657 = vld [vmem:[%s9 + $0x20] sm:$0xf]
      %v1658 = vld [vmem:[%s9 + $0x24] sm:$0xff]
      %v1659 = vld [vmem:[%s9 + $0x2c] sm:$0xf]
      %v1660 = vld [vmem:[#allocation3] sm:$0xff]
      %v1661 = vld [vmem:[#allocation3 + $0x8] sm:$0xff]
      %v1662 = vld [vmem:[#allocation3 + $0x10] sm:$0xff]
      %v1663 = vld [vmem:[#allocation3 + $0x18] sm:$0xff]
      %v1664 = vld [vmem:[#allocation3 + $0x20] sm:$0xff]
      %v1665 = vld [vmem:[#allocation3 + $0x28] sm:$0xff]
      %v1666 = vld [vmem:[#allocation3 + $0x30] sm:$0xff]
      %v1667 = vld [vmem:[#allocation3 + $0x38] sm:$0xff]
      %v1668 = vld [vmem:[#allocation3 + $0x40] sm:$0xff]
      %v1669 = vld [vmem:[#allocation3 + $0x48] sm:$0xff]
      %v1670 = vld [vmem:[#allocation3 + $0x50] sm:$0xff]
      %v1671 = vld [vmem:[#allocation3 + $0x58] sm:$0xff]
      %v1672 = vld [vmem:[#allocation3 + $0x60] sm:$0xff]
      %v1673 = vld [vmem:[#allocation3 + $0x68] sm:$0xff]
      %v1674 = vld [vmem:[#allocation3 + $0x70] sm:$0xff]
      %v1675 = vld [vmem:[#allocation3 + $0x78] sm:$0xff]
      %v1676 = vld [vmem:[#allocation3 + $0x80] sm:$0xff]
      %v1677 = vld [vmem:[#allocation3 + $0x88] sm:$0xff]
      %v1678 = vld [vmem:[#allocation3 + $0x90] sm:$0xff]
      %v1679 = vld [vmem:[#allocation3 + $0x98] sm:$0xff]
      %v1680 = vld [vmem:[#allocation3 + $0xa0] sm:$0xff]
      %v1681 = vld [vmem:[#allocation3 + $0xa8] sm:$0xff]
      %v1682 = vld [vmem:[#allocation3 + $0xb0] sm:$0xff]
      %v1683 = vld [vmem:[#allocation3 + $0xb8] sm:$0xff]
      %v1684 = vld [vmem:[#allocation3 + $0xc0] sm:$0xff]
      %v1685 = vld [vmem:[#allocation3 + $0xc8] sm:$0xff]
      %v1686 = vld [vmem:[#allocation3 + $0xd0] sm:$0xff]
      %v1687 = vld [vmem:[#allocation3 + $0xd8] sm:$0xff]
      %v1688 = vld [vmem:[#allocation3 + $0xe0] sm:$0xff]
      %v1689 = vld [vmem:[#allocation3 + $0xe8] sm:$0xff]
      %v1690 = vld [vmem:[#allocation3 + $0xf0] sm:$0xff]
      %v1691 = vld [vmem:[#allocation3 + $0xf8] sm:$0xff]
      %v1692 = vld [vmem:[#allocation3 + $0x100] sm:$0xff]
      %v1693 = vld [vmem:[#allocation3 + $0x108] sm:$0xff]
      %v1694 = vld [vmem:[#allocation3 + $0x110] sm:$0xff]
      %v1695 = vld [vmem:[#allocation3 + $0x118] sm:$0xff]
      %v1704 = vunpack.c.l.b16 %v1652
      %v1705 = vunpack.c.h.b16 %v1652
      %v1706 = vunpack.c.l.b16 %v1653
      %v1707 = vunpack.c.l.b16 %v1654
      %v1708 = vunpack.c.h.b16 %v1654
      %v1709 = vunpack.c.l.b16 %v1655
      %v1710 = vunpack.c.l.b16 %v1656
      %v1711 = vunpack.c.h.b16 %v1656
      %v1712 = vunpack.c.l.b16 %v1657
      %v1713 = vunpack.c.l.b16 %v1658
      %v1714 = vunpack.c.h.b16 %v1658
      %v1715 = vunpack.c.l.b16 %v1659
      %v1716 = vpack.c.b16 %v1707, %v1704
      %v1717 = vpack.c.b16 %v1708, %v1705
      %v1718 = vpack.c.b16 %v1709, %v1706
      %v1719 = vpack.c.b16 %v1713, %v1710
      %v1720 = vpack.c.b16 %v1714, %v1711
      %v1721 = vpack.c.b16 %v1715, %v1712
      %vm1726 = vcmask 261120
      %v1728 = vsel %vm1726, %v1718, 0
      %v1731 = vsel %vm1726, %v1721, 0
      %1733 = vmatprep.subr.bf16.mxu0 %v1661
      %1734 = vmatpush1.bf16.msra.mxu0 %v1660
      %1735 = vmatprep.subr.bf16.mxu0 %v1663
      %1736 = vmatpush1.bf16.msra.mxu0 %v1662
      %1737 = vmatprep.subr.bf16.mxu0 %v1665
      %1738 = vmatpush1.bf16.msra.mxu0 %v1664
      %1739 = vmatprep.subr.bf16.mxu0 %v1667
      %1740 = vmatpush1.bf16.msra.mxu0 %v1666
      %1741 = vmatprep.subr.bf16.mxu0 %v1669
      %1742 = vmatpush1.bf16.msra.mxu0 %v1668
      %1743 = vmatprep.subr.bf16.mxu0 %v1671
      %1744 = vmatpush1.bf16.msra.mxu0 %v1670
      %1745 = vmatprep.subr.bf16.mxu0 %v1673
      %1746 = vmatpush1.bf16.msra.mxu0 %v1672
      %1747 = vmatprep.subr.bf16.mxu0 %v1675
      %1748 = vmatpush1.bf16.msra.mxu0 %v1674
      %1749 = vmatprep.subr.bf16.mxu0 %v1677
      %1750 = vmatpush1.bf16.msra.mxu0 %v1676
      %1751 = vmatprep.subr.bf16.mxu0 %v1679
      %1752 = vmatpush1.bf16.msra.mxu0 %v1678
      %1753 = vmatprep.subr.bf16.mxu0 %v1681
      %1754 = vmatpush1.bf16.msra.mxu0 %v1680
      %1755 = vmatprep.subr.bf16.mxu0 %v1683
      %1756 = vmatpush1.bf16.msra.mxu0 %v1682
      %1757 = vmatprep.subr.bf16.mxu0 %v1685
      %1758 = vmatpush1.bf16.msra.mxu0 %v1684
      %1759 = vmatprep.subr.bf16.mxu0 %v1687
      %1760 = vmatpush1.bf16.msra.mxu0 %v1686
      %1761 = vmatprep.subr.bf16.mxu0 %v1689
      %1762 = vmatpush1.bf16.msra.mxu0 %v1688
      %1763 = vmatprep.subr.bf16.mxu0 %v1691
      %1764 = vmatpush1.bf16.msra.mxu0 %v1690
      %1765 = vmatprep.mubr.bf16.mxu0 %v1717
      %1766 = vmatmul.mubr.bf16.gmra.mrb[0].mxu0 %v1716
      %v1767 = vpop.f32.mrb[0].mxu0
      %v1768 = vadd.f32 0.0, %v1767
      %v1769 = vpop.f32.mrb[0].mxu0
      %v1770 = vadd.f32 0.0, %v1769
      %v1771 = vpop.f32.mrb[0].mxu0
      %v1772 = vadd.f32 0.0, %v1771
      %v1773 = vpop.f32.mrb[0].mxu0
      %v1774 = vadd.f32 0.0, %v1773
      %1775 = vmatprep.mubr.bf16.mxu0 %v1720
      %1776 = vmatmul.mubr.bf16.gmra.mrb[0].mxu0 %v1719
      %v1777 = vpop.f32.mrb[0].mxu0
      %v1778 = vadd.f32 0.0, %v1777
      %v1779 = vpop.f32.mrb[0].mxu0
      %v1780 = vadd.f32 0.0, %v1779
      %v1781 = vpop.f32.mrb[0].mxu0
      %v1782 = vadd.f32 0.0, %v1781
      %v1783 = vpop.f32.mrb[0].mxu0
      %v1784 = vadd.f32 0.0, %v1783
      %1785 = vdwg.mxu0
      %1786 = vmatprep.subr.bf16.mxu0 %v1693
      %1787 = vmatpush1.bf16.msra.mxu0 %v1692
      %1788 = vmatprep.subr.bf16.mxu0 %v1695
      %1789 = vmatpush1.bf16.msra.mxu0 %v1694
      %1790 = vmatprep.subr.bf16.mxu0 0
      %1791 = vmatpush1.bf16.msra.mxu0 0
      %1792 = vmatprep.subr.bf16.mxu0 0
      %1793 = vmatpush1.bf16.msra.mxu0 0
      %1794 = vmatprep.subr.bf16.mxu0 0
      %1795 = vmatpush1.bf16.msra.mxu0 0
      %1796 = vmatprep.subr.bf16.mxu0 0
      %1797 = vmatpush1.bf16.msra.mxu0 0
      %1798 = vmatprep.subr.bf16.mxu0 0
      %1799 = vmatpush1.bf16.msra.mxu0 0
      %1800 = vmatprep.subr.bf16.mxu0 0
      %1801 = vmatpush1.bf16.msra.mxu0 0
      %1802 = vmatprep.subr.bf16.mxu0 0
      %1803 = vmatpush1.bf16.msra.mxu0 0
      %1804 = vmatprep.subr.bf16.mxu0 0
      %1805 = vmatpush1.bf16.msra.mxu0 0
      %1806 = vmatprep.subr.bf16.mxu0 0
      %1807 = vmatpush1.bf16.msra.mxu0 0
      %1808 = vmatprep.subr.bf16.mxu0 0
      %1809 = vmatpush1.bf16.msra.mxu0 0
      %1810 = vmatprep.subr.bf16.mxu0 0
      %1811 = vmatpush1.bf16.msra.mxu0 0
      %1812 = vmatprep.subr.bf16.mxu0 0
      %1813 = vmatpush1.bf16.msra.mxu0 0
      %1814 = vmatprep.subr.bf16.mxu0 0
      %1815 = vmatpush1.bf16.msra.mxu0 0
      %1816 = vmatprep.subr.bf16.mxu0 0
      %1817 = vmatpush1.bf16.msra.mxu0 0
      %1818 = vmatprep.mubr.bf16.mxu0 0
      %1819 = vmatmul.mubr.bf16.gmra.mrb[0].mxu0 %v1728
      %v1820 = vpop.f32.mrb[0].mxu0
      %v1821 = vadd.f32 %v1768, %v1820
      %v1822 = vpop.f32.mrb[0].mxu0
      %v1823 = vadd.f32 %v1770, %v1822
      %v1824 = vpop.f32.mrb[0].mxu0
      %v1825 = vadd.f32 %v1772, %v1824
      %v1826 = vpop.f32.mrb[0].mxu0
      %v1827 = vadd.f32 %v1774, %v1826
      %1828 = vmatprep.mubr.bf16.mxu0 0
      %1829 = vmatmul.mubr.bf16.gmra.mrb[0].mxu0 %v1731
      %v1830 = vpop.f32.mrb[0].mxu0
      %v1831 = vadd.f32 %v1778, %v1830
      %v1832 = vpop.f32.mrb[0].mxu0
      %v1833 = vadd.f32 %v1780, %v1832
      %v1834 = vpop.f32.mrb[0].mxu0
      %v1835 = vadd.f32 %v1782, %v1834
      %v1836 = vpop.f32.mrb[0].mxu0
      %v1837 = vadd.f32 %v1784, %v1836
      %1838 = vdwg.mxu0
      %1839 = vst [vmem:[%s406] sm:$0xff] %v1821
      %1840 = vst [vmem:[%s406 + $0x8] sm:$0xff] %v1823
      %1841 = vst [vmem:[%s406 + $0x10] sm:$0xff] %v1825
      %1842 = vst [vmem:[%s406 + $0x18] sm:$0xff] %v1827
      %1843 = vst [vmem:[%s406 + $0x20] sm:$0xff] %v1831
      %1844 = vst [vmem:[%s406 + $0x28] sm:$0xff] %v1833
      %1845 = vst [vmem:[%s406 + $0x30] sm:$0xff] %v1835
      %1846 = vst [vmem:[%s406 + $0x38] sm:$0xff] %v1837
      %p1847 = scmp.lt.s32.totalorder %s22, 1
      %s1848 = scalar_select %p1847, %s22, 1
      %s1849 = smul.addr %s1848, 8
      %s1850 = smul.addr %s1849, 8
      %s1851 = scalar_lea.vmem %s11, %s1850
      // Predicated region
      $region65: #{dappm_forward.7} parent=63 // pred_check
        %p1852 = pneg %p281
      $region66: #{dappm_forward.7} parent=63 // pred_check_branch
        %1854 = sbr.rel (%p1852) target = $region68
      $region67: #{dappm_forward.7} parent=63 // pred_region
        _
      $region68: #{dappm_forward.7} parent=63 // pred_fallthru
        _
    $region64: #{dappm_forward.7} parent=5 // pred_fallthru
      _
    %p1855 = scmp.le.s32.totalorder 2, %s17
    // Predicated region
    $region69: #{dappm_forward.7} parent=5 // pred_check
      %p1856 = pneg %p1855
    $region70: #{dappm_forward.7} parent=5 // pred_check_branch
      %1858 = sbr.rel (%p1856) target = $region72
    $region71: #{dappm_forward.7} parent=5 // pred_region
      %s1859 = ssub.s32 %s17, 2
      // Predicated region
      $region73: #{dappm_forward.7} parent=71 // pred_check
        %p1860 = pneg %p287
      $region74: #{dappm_forward.7} parent=71 // pred_check_branch
        %1862 = sbr.rel (%p1860) target = $region76
      $region75: #{dappm_forward.7} parent=71 // pred_region
        %p1863 = scmp.lt.s32.totalorder %s23, 1
        %s1864 = scalar_select %p1863, %s23, 1
        %s1865 = smul.addr %s1864, 8
        %s1866 = smul.addr %s1865, 8
        %s1867 = scalar_lea.vmem %s11, %s1866
      $region76: #{dappm_forward.7} parent=71 // pred_fallthru
        _
    $region72: #{dappm_forward.7} parent=5 // pred_fallthru
      _
  $region6: #{dappm_forward.7} parent=0 // loop_footer
    %s21 = sadd.s32 1, %s17
  $region7: #{dappm_forward.7} parent=0 // loop_footer_branch
    %16 = sbr.rel target = $region3
  $region8: #{dappm_forward.7} parent=0 // loop_exit
    _

</llo_original>
